<compile_context>
chip_gen: v6e
topology: v6e:2x2x1
jax: 0.10.0
libtpu: 0.0.40
codegen_flags: <defaults>
</compile_context>

<pallas_src>
import jax
import jax.numpy as jnp
import numpy as np
from jax.experimental import pallas as pl
from jax.experimental.pallas import tpu as pltpu

_HIGHEST = jax.lax.Precision.HIGHEST


def _round_up(n, m):
    return ((n + m - 1) // m) * m


def _scan_chunk_kernel(u_ref, m_ref, p_ref, hs_ref, carry_ref):
    # u_ref     : (1, Bb, T*Hp) f32   chunk of precomputed input projections
    # m_ref     : (T*Hp, T*Hp)  bf16  strictly-block-triangular scan matrix (W^{t-j})
    # p_ref     : (Hp, T*Hp)    bf16  carry matrix [W^1 | W^2 | ... | W^T]
    # hs_ref    : (1, Bb, T*Hp) f32   all hidden states of the chunk (lane-dense)
    # carry_ref : (Bb, Hp)      f32   VMEM scratch, h carried across chunks
    @pl.when(pl.program_id(1) == 0)      # first time-chunk of this batch block
    def _():
        carry_ref[...] = jnp.zeros_like(carry_ref)

    thp = u_ref.shape[-1]
    hp = p_ref.shape[0]

    u = u_ref[0]                                                  # (Bb, T*Hp) f32
    # Two large parallel matmuls replace T serial MXU round trips.  bf16
    # operands: every term here is scaled by at least one power of W_hh.
    s = jnp.dot(u.astype(jnp.bfloat16), m_ref[...],
                preferred_element_type=jnp.float32)
    s = s + jnp.dot(carry_ref[...].astype(jnp.bfloat16), p_ref[...],
                    preferred_element_type=jnp.float32)
    h_all = u + s                                                 # dominant path stays f32
    hs_ref[0] = h_all
    # Carry out the last timestep's state (aligned static lane slice).
    carry_ref[...] = h_all[:, thp - hp:]


def linear_rnn_pallas(x, W_ih, W_hh, b_ih, b_hh, W_ho, b_ho, *, t_block=None):
    """x: (batch, seq, input_size) -> (batch, seq, output_size)."""
    B, S, _ = x.shape
    H = W_hh.shape[0]
    O = W_ho.shape[1]
    f32 = jnp.float32

    Hp = _round_up(H, 128)                       # lane-aligned hidden dim
    NB = 2 if B > 8 else 1                       # batch chunks (v7x: 2 TensorCores)
    Bp = _round_up(B, 8 * NB)                    # sublane-aligned, divisible by NB
    Bb = Bp // NB

    if t_block is None:
        # Keep T*Hp <= 2048 so the (T*Hp)^2 bf16 scan matrix stays VMEM-friendly.
        t_block = min(S, max(1, 2048 // Hp))
    Sp = _round_up(S, t_block)
    C = Sp // t_block                            # number of time chunks
    thp = t_block * Hp

    # ---- parameter padding (zero padding keeps the linear math exact) --------
    W_ih_p = jnp.zeros((x.shape[2], Hp), f32).at[:, :H].set(W_ih.astype(f32))
    W_hh_p = jnp.zeros((Hp, Hp), f32).at[:H, :H].set(W_hh.astype(f32))
    W_ho_p = jnp.zeros((Hp, O), f32).at[:H, :].set(W_ho.astype(f32))
    bias_p = jnp.zeros((Hp,), f32).at[:H].set((b_ih + b_hh).astype(f32))

    # ---- powers of W_hh and scan matrices (trace-time Python loops, T small) -
    powers = [jnp.eye(Hp, dtype=f32)]
    for _ in range(t_block):
        powers.append(jnp.dot(powers[-1], W_hh_p, precision=_HIGHEST))
    zero_blk = jnp.zeros((Hp, Hp), f32)
    rows = []
    for j in range(t_block):
        rows.append(jnp.concatenate(
            [powers[t - j] if t > j else zero_blk for t in range(t_block)], axis=1))
    M = jnp.concatenate(rows, axis=0).astype(jnp.bfloat16)            # (T*Hp, T*Hp)
    P = jnp.concatenate([powers[t + 1] for t in range(t_block)],
                        axis=1).astype(jnp.bfloat16)                  # (Hp, T*Hp)

    # ---- input projection hoisted off the serial path ------------------------
    u = jnp.einsum('bsi,ih->sbh', x.astype(f32), W_ih_p,
                   precision=_HIGHEST) + bias_p                       # (S, B, Hp)
    u = jnp.pad(u, ((0, Sp - S), (0, Bp - B), (0, 0)))                # (Sp, Bp, Hp)
    u_blocked = (u.reshape(C, t_block, Bp, Hp)
                  .transpose(0, 2, 1, 3)
                  .reshape(C, Bp, thp))                               # (C, Bp, T*Hp)

    # ---- VMEM budget (double-buffered blocks + scratch) ----------------------
    vmem_bytes = (2 * Bb * thp * 4        # u blocks
                  + 2 * Bb * thp * 4      # hs blocks
                  + 2 * thp * thp * 2     # M (bf16)
                  + 2 * Hp * thp * 2      # P (bf16)
                  + Bb * Hp * 4)          # carry scratch
    vmem_limit = int(min(max(int(vmem_bytes * 1.5), 32 * 1024 * 1024),
                         64 * 1024 * 1024))

    hs_blocked = pl.pallas_call(
        _scan_chunk_kernel,
        out_shape=jax.ShapeDtypeStruct((C, Bp, thp), f32),
        grid_spec=pltpu.PrefetchScalarGridSpec(
            num_scalar_prefetch=0,
            grid=(NB, C),
            in_specs=[
                pl.BlockSpec((1, Bb, thp), lambda b, t: (t, b, 0)),   # u chunk
                pl.BlockSpec((thp, thp), lambda b, t: (0, 0)),        # M (grid-invariant)
                pl.BlockSpec((Hp, thp), lambda b, t: (0, 0)),         # P (grid-invariant)
            ],
            out_specs=pl.BlockSpec((1, Bb, thp), lambda b, t: (t, b, 0)),
            scratch_shapes=[pltpu.VMEM((Bb, Hp), f32)],               # carry
        ),
        compiler_params=pltpu.CompilerParams(
            # batch chunks are independent (megacore on v7x); the recurrence
            # over time chunks is serial -> must stay "arbitrary".
            dimension_semantics=("parallel", "arbitrary"),
            vmem_limit_bytes=vmem_limit,
        ),
    )(u_blocked, M, P)

    # ---- output projection hoisted out of the recurrence ---------------------
    # W_ho zero-padded to Hp rows -> no H-slice copy before the matmul.
    hs = hs_blocked.reshape(C, Bp, t_block, Hp)
    y = jnp.einsum('cbth,ho->bcto', hs, W_ho_p, precision=_HIGHEST)   # (Bp, C, T, O)
    y = y.reshape(Bp, Sp, O)[:B, :S, :]
    return y + b_ho.astype(f32)


def linear_rnn_ref(x, W_ih, W_hh, b_ih, b_hh, W_ho, b_ho):
    """Plain-JAX reference matching the PyTorch forward (true f32 matmuls)."""
    Bsz = x.shape[0]
    H = W_hh.shape[0]

    def step(h, x_t):
        h = (jnp.dot(x_t, W_ih, precision=_HIGHEST) + b_ih
             + jnp.dot(h, W_hh, precision=_HIGHEST) + b_hh)
        y = jnp.dot(h, W_ho, precision=_HIGHEST) + b_ho
        return h, y

    h0 = jnp.zeros((Bsz, H), jnp.float32)
    _, ys = jax.lax.scan(step, h0, jnp.transpose(x, (1, 0, 2)))
    return jnp.transpose(ys, (1, 0, 2))


if __name__ == "__main__":
    # Shapes consistent with LinearRNN(hidden_dim=32, input_size=4, output_size=1)
    batch, seq, input_size, hidden_dim, output_size = 2, 8, 4, 32, 1

    key = jax.random.PRNGKey(0)
    kx, k1, k2, k3 = jax.random.split(key, 4)

    W_ih = jax.random.normal(k1, (input_size, hidden_dim), jnp.float32) * 0.01
    W_hh = jax.random.normal(k2, (hidden_dim, hidden_dim), jnp.float32) * 0.001
    b_ih = jnp.zeros((hidden_dim,), jnp.float32)
    b_hh = jnp.zeros((hidden_dim,), jnp.float32)
    W_ho = jax.random.normal(k3, (hidden_dim, output_size), jnp.float32)
    b_ho = jnp.zeros((output_size,), jnp.float32)

    x = jax.random.normal(kx, (batch, seq, input_size), jnp.float32)

    fwd = jax.jit(linear_rnn_pallas)
    out = jax.block_until_ready(fwd(x, W_ih, W_hh, b_ih, b_hh, W_ho, b_ho))

    ref = jax.block_until_ready(
        linear_rnn_ref(x, W_ih, W_hh, b_ih, b_hh, W_ho, b_ho))

    # Tolerance: dominant terms are f32-exact; only terms carrying >= one factor
    # of W_hh (~1e-3) pass through bf16 MXU operands, giving O(1e-6) deviations.
    np.testing.assert_allclose(np.asarray(out), np.asarray(ref),
                               rtol=1e-5, atol=2e-5)
    assert out.shape == (batch, seq, output_size)
    print("KERNEL_OK")
</pallas_src>

<mosaic_0001>
module attributes {stable_mosaic.version = 11 : i64} {
  func.func @_scan_chunk_kernel(%arg0: i32, %arg1: i32, %arg2: memref<1x8x1024xf32, #tpu.memory_space<vmem>>, %arg3: memref<1024x1024xbf16, #tpu.memory_space<vmem>>, %arg4: memref<128x1024xbf16, #tpu.memory_space<vmem>>, %arg5: memref<1x8x1024xf32, #tpu.memory_space<vmem>>, %arg6: memref<8x128xf32, #tpu.memory_space<vmem>>) attributes {dimension_semantics = [#tpu.dimension_semantics<parallel>, #tpu.dimension_semantics<arbitrary>], iteration_bounds = array<i64: 1, 1>, scalar_prefetch = 0 : i64, scratch_operands = 1 : i64, tpu.core_type = #tpu.core_type<tc>, window_params = [{transform_indices = @transform_0, window_bounds = array<i64: 1, 8, 1024>}, {pipeline_mode = #tpu.pipeline_mode<synchronous>, transform_indices = @transform_1, window_bounds = array<i64: 1024, 1024>}, {pipeline_mode = #tpu.pipeline_mode<synchronous>, transform_indices = @transform_2, window_bounds = array<i64: 128, 1024>}, {transform_indices = @transform_3, window_bounds = array<i64: 1, 8, 1024>}]} {
    %c0_i32 = arith.constant 0 : i32
    %0 = arith.cmpi eq, %arg1, %c0_i32 : i32
    %1 = arith.extui %0 : i1 to i32
    %c0_i32_0 = arith.constant 0 : i32
    %2 = arith.cmpi ne, %1, %c0_i32_0 : i32
    scf.if %2 {
      %cst_15 = arith.constant 0.000000e+00 : f32
      %19 = vector.broadcast %cst_15 : f32 to vector<8x128xf32>
      %c0_16 = arith.constant 0 : index
      %c0_17 = arith.constant 0 : index
      %20 = vector.load %arg6[%c0_16, %c0_17] : memref<8x128xf32, #tpu.memory_space<vmem>>, vector<8x128xf32>
      tpu.vector_store %arg6[%c0_16, %c0_17], %19 {strides = array<i32>} : memref<8x128xf32, #tpu.memory_space<vmem>>, vector<8x128xf32>,
    } else {
    }
    %c0 = arith.constant 0 : index
    %c0_1 = arith.constant 0 : index
    %c0_2 = arith.constant 0 : index
    %3 = vector.load %arg2[%c0, %c0_1, %c0_2] : memref<1x8x1024xf32, #tpu.memory_space<vmem>>, vector<1x8x1024xf32>
    %4 = vector.shape_cast %3 : vector<1x8x1024xf32> to vector<8x1024xf32>
    %5 = arith.truncf %4 : vector<8x1024xf32> to vector<8x1024xbf16>
    %c0_3 = arith.constant 0 : index
    %c0_4 = arith.constant 0 : index
    %6 = vector.load %arg3[%c0_3, %c0_4] : memref<1024x1024xbf16, #tpu.memory_space<vmem>>, vector<1024x1024xbf16>
    %cst = arith.constant dense<0.000000e+00> : vector<8x1024xf32>
    %7 = tpu.matmul %5, %6, %cst {dimension_numbers = #tpu.dot_dimension_numbers<[1], [0], [0], [1], [0, 0, 1, 1], [], []>} : vector<8x1024xbf16>, vector<1024x1024xbf16>, vector<8x1024xf32> -> vector<8x1024xf32>
    %c0_5 = arith.constant 0 : index
    %c0_6 = arith.constant 0 : index
    %8 = vector.load %arg6[%c0_5, %c0_6] : memref<8x128xf32, #tpu.memory_space<vmem>>, vector<8x128xf32>
    %9 = arith.truncf %8 : vector<8x128xf32> to vector<8x128xbf16>
    %c0_7 = arith.constant 0 : index
    %c0_8 = arith.constant 0 : index
    %10 = vector.load %arg4[%c0_7, %c0_8] : memref<128x1024xbf16, #tpu.memory_space<vmem>>, vector<128x1024xbf16>
    %cst_9 = arith.constant dense<0.000000e+00> : vector<8x1024xf32>
    %11 = tpu.matmul %9, %10, %cst_9 {dimension_numbers = #tpu.dot_dimension_numbers<[1], [0], [0], [1], [0, 0, 1, 1], [], []>} : vector<8x128xbf16>, vector<128x1024xbf16>, vector<8x1024xf32> -> vector<8x1024xf32>
    %12 = arith.addf %7, %11 : vector<8x1024xf32>
    %13 = arith.addf %4, %12 : vector<8x1024xf32>
    %c0_10 = arith.constant 0 : index
    %c0_11 = arith.constant 0 : index
    %c0_12 = arith.constant 0 : index
    %14 = vector.load %arg5[%c0_10, %c0_11, %c0_12] : memref<1x8x1024xf32, #tpu.memory_space<vmem>>, vector<1x8x1024xf32>
    %15 = vector.shape_cast %14 : vector<1x8x1024xf32> to vector<8x1024xf32>
    %16 = vector.shape_cast %13 : vector<8x1024xf32> to vector<1x8x1024xf32>
    tpu.vector_store %arg5[%c0_10, %c0_11, %c0_12], %16 {strides = array<i32>} : memref<1x8x1024xf32, #tpu.memory_space<vmem>>, vector<1x8x1024xf32>,
    %17 = vector.extract_strided_slice %13 {offsets = [0, 896], sizes = [8, 128], strides = [1, 1]} : vector<8x1024xf32> to vector<8x128xf32>
    %c0_13 = arith.constant 0 : index
    %c0_14 = arith.constant 0 : index
    %18 = vector.load %arg6[%c0_13, %c0_14] : memref<8x128xf32, #tpu.memory_space<vmem>>, vector<8x128xf32>
    tpu.vector_store %arg6[%c0_13, %c0_14], %17 {strides = array<i32>} : memref<8x128xf32, #tpu.memory_space<vmem>>, vector<8x128xf32>,
    return
  }
  func.func @transform_0(%arg0: i32, %arg1: i32) -> (i32, i32, i32) {
    %c0_i32 = arith.constant 0 : i32
    %c0_i32_0 = arith.constant 0 : i32
    return %arg1, %arg0, %c0_i32 : i32, i32, i32
  }
  func.func @transform_1(%arg0: i32, %arg1: i32) -> (i32, i32) {
    %c0_i32 = arith.constant 0 : i32
    %c0_i32_0 = arith.constant 0 : i32
    %c0_i32_1 = arith.constant 0 : i32
    return %c0_i32, %c0_i32_0 : i32, i32
  }
  func.func @transform_2(%arg0: i32, %arg1: i32) -> (i32, i32) {
    %c0_i32 = arith.constant 0 : i32
    %c0_i32_0 = arith.constant 0 : i32
    %c0_i32_1 = arith.constant 0 : i32
    return %c0_i32, %c0_i32_0 : i32, i32
  }
  func.func @transform_3(%arg0: i32, %arg1: i32) -> (i32, i32, i32) {
    %c0_i32 = arith.constant 0 : i32
    %c0_i32_0 = arith.constant 0 : i32
    return %arg1, %arg0, %c0_i32 : i32, i32, i32
  }
}

</mosaic_0001>

<llo_original>
// kernel: linear_rnn_pallas.1
$region0: #{linear_rnn_pallas.1}
  #allocation0 [shape = 'u32[]', space=smem, size = 0x4, offset = 0x4, fixed_abs, tag = 'smem constant byte address 0x4 - core index']
  #allocation1 [shape = 'u32[144,128]{1,0:T(1,128)}', space=vmem, size = 0x12000, scoped, tag = 'internal scratch']
  #allocation2 [shape = 'f32[8,128]{1,0:T(8,128)}', space=vmem, size = 0x1000, scoped, tag = 'scratch operand']
  %s0 = inlined_call_operand.vmem [shape: f32[1,8,1024], index: 0, kind: input, shape index: {}]
  %s1 = inlined_call_operand.vmem [shape: bf16[1024,1024], index: 1, kind: input, shape index: {}]
  %s2 = inlined_call_operand.vmem [shape: bf16[128,1024], index: 2, kind: input, shape index: {}]
  %s3 = inlined_call_operand.vmem [shape: f32[1,8,1024], index: 3, kind: output, shape index: {}]
  %s4 = sld [smem:[#allocation0]]
  $region26: #{linear_rnn_pallas.1} parent=0
    _
  %s6 = ssub.s32 1, %s4
  %s7 = scalar_select 0, %s6, %s4
  // Predicated region
  $region2: #{linear_rnn_pallas.1} parent=0 // pred_check
    _
  $region3: #{linear_rnn_pallas.1} parent=0 // pred_check_branch
    %9 = sbr.rel (0) target = $region5
  $region4: #{linear_rnn_pallas.1} parent=0 // pred_region
    _
  $region5: #{linear_rnn_pallas.1} parent=0 // pred_fallthru
    _
  // Predicated region
  $region6: #{linear_rnn_pallas.1} parent=0 // pred_check
    _
  $region7: #{linear_rnn_pallas.1} parent=0 // pred_check_branch
    %11 = sbr.rel (0) target = $region9
  $region8: #{linear_rnn_pallas.1} parent=0 // pred_region
    _
  $region9: #{linear_rnn_pallas.1} parent=0 // pred_fallthru
    _
  // Predicated region
  $region10: #{linear_rnn_pallas.1} parent=0 // pred_check
    _
  $region11: #{linear_rnn_pallas.1} parent=0 // pred_check_branch
    %13 = sbr.rel (0) target = $region13
  $region12: #{linear_rnn_pallas.1} parent=0 // pred_region
    _
  $region13: #{linear_rnn_pallas.1} parent=0 // pred_fallthru
    _
  %p15 = scmp.eq.s32.totalorder 0, 0
  // Predicated region
  $region14: #{linear_rnn_pallas.1} parent=0 // pred_check
    %p16 = pneg %p15
  $region15: #{linear_rnn_pallas.1} parent=0 // pred_check_branch
    %18 = sbr.rel (%p16) target = $region17
  $region16: #{linear_rnn_pallas.1} parent=0 // pred_region
    %19 = vst [vmem:[#allocation2] sm:$0xff] 0.0
  $region17: #{linear_rnn_pallas.1} parent=0 // pred_fallthru
    _
  %v20 = vld [vmem:[%s0] sm:$0xff]
  %v21 = vld [vmem:[%s0 + $0x8] sm:$0xff]
  %v22 = vld [vmem:[%s0 + $0x10] sm:$0xff]
  %v23 = vld [vmem:[%s0 + $0x18] sm:$0xff]
  %v24 = vld [vmem:[%s0 + $0x20] sm:$0xff]
  %v25 = vld [vmem:[%s0 + $0x28] sm:$0xff]
  %v26 = vld [vmem:[%s0 + $0x30] sm:$0xff]
  %v27 = vld [vmem:[%s0 + $0x38] sm:$0xff]
  %v28 = vpack.c.bf16 %v20, %v20
  %v29 = vpack.c.bf16 %v21, %v21
  %v30 = vpack.c.bf16 %v22, %v22
  %v31 = vpack.c.bf16 %v23, %v23
  %v32 = vpack.c.bf16 %v24, %v24
  %v33 = vpack.c.bf16 %v25, %v25
  %v34 = vpack.c.bf16 %v26, %v26
  %v35 = vpack.c.bf16 %v27, %v27
  %v36 = vld [vmem:[%s1] sm:$0xff]
  %v37 = vld [vmem:[%s1 + $0x8] sm:$0xff]
  %v38 = vld [vmem:[%s1 + $0x10] sm:$0xff]
  %v39 = vld [vmem:[%s1 + $0x18] sm:$0xff]
  %v40 = vld [vmem:[%s1 + $0x20] sm:$0xff]
  %v41 = vld [vmem:[%s1 + $0x28] sm:$0xff]
  %v42 = vld [vmem:[%s1 + $0x30] sm:$0xff]
  %v43 = vld [vmem:[%s1 + $0x38] sm:$0xff]
  %v44 = vld [vmem:[%s1 + $0x40] sm:$0xff]
  %v45 = vld [vmem:[%s1 + $0x48] sm:$0xff]
  %v46 = vld [vmem:[%s1 + $0x50] sm:$0xff]
  %v47 = vld [vmem:[%s1 + $0x58] sm:$0xff]
  %v48 = vld [vmem:[%s1 + $0x60] sm:$0xff]
  %v49 = vld [vmem:[%s1 + $0x68] sm:$0xff]
  %v50 = vld [vmem:[%s1 + $0x70] sm:$0xff]
  %v51 = vld [vmem:[%s1 + $0x78] sm:$0xff]
  %v52 = vld [vmem:[%s1 + $0x80] sm:$0xff]
  %v53 = vld [vmem:[%s1 + $0x88] sm:$0xff]
  %v54 = vld [vmem:[%s1 + $0x90] sm:$0xff]
  %v55 = vld [vmem:[%s1 + $0x98] sm:$0xff]
  %v56 = vld [vmem:[%s1 + $0xa0] sm:$0xff]
  %v57 = vld [vmem:[%s1 + $0xa8] sm:$0xff]
  %v58 = vld [vmem:[%s1 + $0xb0] sm:$0xff]
  %v59 = vld [vmem:[%s1 + $0xb8] sm:$0xff]
  %v60 = vld [vmem:[%s1 + $0xc0] sm:$0xff]
  %v61 = vld [vmem:[%s1 + $0xc8] sm:$0xff]
  %v62 = vld [vmem:[%s1 + $0xd0] sm:$0xff]
  %v63 = vld [vmem:[%s1 + $0xd8] sm:$0xff]
  %v64 = vld [vmem:[%s1 + $0xe0] sm:$0xff]
  %v65 = vld [vmem:[%s1 + $0xe8] sm:$0xff]
  %v66 = vld [vmem:[%s1 + $0xf0] sm:$0xff]
  %v67 = vld [vmem:[%s1 + $0xf8] sm:$0xff]
  %v68 = vld [vmem:[%s1 + $0x100] sm:$0xff]
  %v69 = vld [vmem:[%s1 + $0x108] sm:$0xff]
  %v70 = vld [vmem:[%s1 + $0x110] sm:$0xff]
  %v71 = vld [vmem:[%s1 + $0x118] sm:$0xff]
  %v72 = vld [vmem:[%s1 + $0x120] sm:$0xff]
  %v73 = vld [vmem:[%s1 + $0x128] sm:$0xff]
  %v74 = vld [vmem:[%s1 + $0x130] sm:$0xff]
  %v75 = vld [vmem:[%s1 + $0x138] sm:$0xff]
  %v76 = vld [vmem:[%s1 + $0x140] sm:$0xff]
  %v77 = vld [vmem:[%s1 + $0x148] sm:$0xff]
  %v78 = vld [vmem:[%s1 + $0x150] sm:$0xff]
  %v79 = vld [vmem:[%s1 + $0x158] sm:$0xff]
  %v80 = vld [vmem:[%s1 + $0x160] sm:$0xff]
  %v81 = vld [vmem:[%s1 + $0x168] sm:$0xff]
  %v82 = vld [vmem:[%s1 + $0x170] sm:$0xff]
  %v83 = vld [vmem:[%s1 + $0x178] sm:$0xff]
  %v84 = vld [vmem:[%s1 + $0x180] sm:$0xff]
  %v85 = vld [vmem:[%s1 + $0x188] sm:$0xff]
  %v86 = vld [vmem:[%s1 + $0x190] sm:$0xff]
  %v87 = vld [vmem:[%s1 + $0x198] sm:$0xff]
  %v88 = vld [vmem:[%s1 + $0x1a0] sm:$0xff]
  %v89 = vld [vmem:[%s1 + $0x1a8] sm:$0xff]
  %v90 = vld [vmem:[%s1 + $0x1b0] sm:$0xff]
  %v91 = vld [vmem:[%s1 + $0x1b8] sm:$0xff]
  %v92 = vld [vmem:[%s1 + $0x1c0] sm:$0xff]
  %v93 = vld [vmem:[%s1 + $0x1c8] sm:$0xff]
  %v94 = vld [vmem:[%s1 + $0x1d0] sm:$0xff]
  %v95 = vld [vmem:[%s1 + $0x1d8] sm:$0xff]
  %v96 = vld [vmem:[%s1 + $0x1e0] sm:$0xff]
  %v97 = vld [vmem:[%s1 + $0x1e8] sm:$0xff]
  %v98 = vld [vmem:[%s1 + $0x1f0] sm:$0xff]
  %v99 = vld [vmem:[%s1 + $0x1f8] sm:$0xff]
  %v100 = vld [vmem:[%s1 + $0x200] sm:$0xff]
  %v101 = vld [vmem:[%s1 + $0x208] sm:$0xff]
  %v102 = vld [vmem:[%s1 + $0x210] sm:$0xff]
  %v103 = vld [vmem:[%s1 + $0x218] sm:$0xff]
  %v104 = vld [vmem:[%s1 + $0x220] sm:$0xff]
  %v105 = vld [vmem:[%s1 + $0x228] sm:$0xff]
  %v106 = vld [vmem:[%s1 + $0x230] sm:$0xff]
  %v107 = vld [vmem:[%s1 + $0x238] sm:$0xff]
  %v108 = vld [vmem:[%s1 + $0x240] sm:$0xff]
  %v109 = vld [vmem:[%s1 + $0x248] sm:$0xff]
  %v110 = vld [vmem:[%s1 + $0x250] sm:$0xff]
  %v111 = vld [vmem:[%s1 + $0x258] sm:$0xff]
  %v112 = vld [vmem:[%s1 + $0x260] sm:$0xff]
  %v113 = vld [vmem:[%s1 + $0x268] sm:$0xff]
  %v114 = vld [vmem:[%s1 + $0x270] sm:$0xff]
  %v115 = vld [vmem:[%s1 + $0x278] sm:$0xff]
  %v116 = vld [vmem:[%s1 + $0x280] sm:$0xff]
  %v117 = vld [vmem:[%s1 + $0x288] sm:$0xff]
  %v118 = vld [vmem:[%s1 + $0x290] sm:$0xff]
  %v119 = vld [vmem:[%s1 + $0x298] sm:$0xff]
  %v120 = vld [vmem:[%s1 + $0x2a0] sm:$0xff]
  %v121 = vld [vmem:[%s1 + $0x2a8] sm:$0xff]
  %v122 = vld [vmem:[%s1 + $0x2b0] sm:$0xff]
  %v123 = vld [vmem:[%s1 + $0x2b8] sm:$0xff]
  %v124 = vld [vmem:[%s1 + $0x2c0] sm:$0xff]
  %v125 = vld [vmem:[%s1 + $0x2c8] sm:$0xff]
  %v126 = vld [vmem:[%s1 + $0x2d0] sm:$0xff]
  %v127 = vld [vmem:[%s1 + $0x2d8] sm:$0xff]
  %v128 = vld [vmem:[%s1 + $0x2e0] sm:$0xff]
  %v129 = vld [vmem:[%s1 + $0x2e8] sm:$0xff]
  %v130 = vld [vmem:[%s1 + $0x2f0] sm:$0xff]
  %v131 = vld [vmem:[%s1 + $0x2f8] sm:$0xff]
  %v132 = vld [vmem:[%s1 + $0x300] sm:$0xff]
  %v133 = vld [vmem:[%s1 + $0x308] sm:$0xff]
  %v134 = vld [vmem:[%s1 + $0x310] sm:$0xff]
  %v135 = vld [vmem:[%s1 + $0x318] sm:$0xff]
  %v136 = vld [vmem:[%s1 + $0x320] sm:$0xff]
  %v137 = vld [vmem:[%s1 + $0x328] sm:$0xff]
  %v138 = vld [vmem:[%s1 + $0x330] sm:$0xff]
  %v139 = vld [vmem:[%s1 + $0x338] sm:$0xff]
  %v140 = vld [vmem:[%s1 + $0x340] sm:$0xff]
  %v141 = vld [vmem:[%s1 + $0x348] sm:$0xff]
  %v142 = vld [vmem:[%s1 + $0x350] sm:$0xff]
  %v143 = vld [vmem:[%s1 + $0x358] sm:$0xff]
  %v144 = vld [vmem:[%s1 + $0x360] sm:$0xff]
  %v145 = vld [vmem:[%s1 + $0x368] sm:$0xff]
  %v146 = vld [vmem:[%s1 + $0x370] sm:$0xff]
  %v147 = vld [vmem:[%s1 + $0x378] sm:$0xff]
  %v148 = vld [vmem:[%s1 + $0x380] sm:$0xff]
  %v149 = vld [vmem:[%s1 + $0x388] sm:$0xff]
  %v150 = vld [vmem:[%s1 + $0x390] sm:$0xff]
  %v151 = vld [vmem:[%s1 + $0x398] sm:$0xff]
  %v152 = vld [vmem:[%s1 + $0x3a0] sm:$0xff]
  %v153 = vld [vmem:[%s1 + $0x3a8] sm:$0xff]
  %v154 = vld [vmem:[%s1 + $0x3b0] sm:$0xff]
  %v155 = vld [vmem:[%s1 + $0x3b8] sm:$0xff]
  %v156 = vld [vmem:[%s1 + $0x3c0] sm:$0xff]
  %v157 = vld [vmem:[%s1 + $0x3c8] sm:$0xff]
  %v158 = vld [vmem:[%s1 + $0x3d0] sm:$0xff]
  %v159 = vld [vmem:[%s1 + $0x3d8] sm:$0xff]
  %v160 = vld [vmem:[%s1 + $0x3e0] sm:$0xff]
  %v161 = vld [vmem:[%s1 + $0x3e8] sm:$0xff]
  %v162 = vld [vmem:[%s1 + $0x3f0] sm:$0xff]
  %v163 = vld [vmem:[%s1 + $0x3f8] sm:$0xff]
  %v164 = vld [vmem:[%s1 + $0x400] sm:$0xff]
  %v165 = vld [vmem:[%s1 + $0x408] sm:$0xff]
  %v166 = vld [vmem:[%s1 + $0x410] sm:$0xff]
  %v167 = vld [vmem:[%s1 + $0x418] sm:$0xff]
  %v168 = vld [vmem:[%s1 + $0x420] sm:$0xff]
  %v169 = vld [vmem:[%s1 + $0x428] sm:$0xff]
  %v170 = vld [vmem:[%s1 + $0x430] sm:$0xff]
  %v171 = vld [vmem:[%s1 + $0x438] sm:$0xff]
  %v172 = vld [vmem:[%s1 + $0x440] sm:$0xff]
  %v173 = vld [vmem:[%s1 + $0x448] sm:$0xff]
  %v174 = vld [vmem:[%s1 + $0x450] sm:$0xff]
  %v175 = vld [vmem:[%s1 + $0x458] sm:$0xff]
  %v176 = vld [vmem:[%s1 + $0x460] sm:$0xff]
  %v177 = vld [vmem:[%s1 + $0x468] sm:$0xff]
  %v178 = vld [vmem:[%s1 + $0x470] sm:$0xff]
  %v179 = vld [vmem:[%s1 + $0x478] sm:$0xff]
  %v180 = vld [vmem:[%s1 + $0x480] sm:$0xff]
  %v181 = vld [vmem:[%s1 + $0x488] sm:$0xff]
  %v182 = vld [vmem:[%s1 + $0x490] sm:$0xff]
  %v183 = vld [vmem:[%s1 + $0x498] sm:$0xff]
  %v184 = vld [vmem:[%s1 + $0x4a0] sm:$0xff]
  %v185 = vld [vmem:[%s1 + $0x4a8] sm:$0xff]
  %v186 = vld [vmem:[%s1 + $0x4b0] sm:$0xff]
  %v187 = vld [vmem:[%s1 + $0x4b8] sm:$0xff]
  %v188 = vld [vmem:[%s1 + $0x4c0] sm:$0xff]
  %v189 = vld [vmem:[%s1 + $0x4c8] sm:$0xff]
  %v190 = vld [vmem:[%s1 + $0x4d0] sm:$0xff]
  %v191 = vld [vmem:[%s1 + $0x4d8] sm:$0xff]
  %v192 = vld [vmem:[%s1 + $0x4e0] sm:$0xff]
  %v193 = vld [vmem:[%s1 + $0x4e8] sm:$0xff]
  %v194 = vld [vmem:[%s1 + $0x4f0] sm:$0xff]
  %v195 = vld [vmem:[%s1 + $0x4f8] sm:$0xff]
  %v196 = vld [vmem:[%s1 + $0x500] sm:$0xff]
  %v197 = vld [vmem:[%s1 + $0x508] sm:$0xff]
  %v198 = vld [vmem:[%s1 + $0x510] sm:$0xff]
  %v199 = vld [vmem:[%s1 + $0x518] sm:$0xff]
  %v200 = vld [vmem:[%s1 + $0x520] sm:$0xff]
  %v201 = vld [vmem:[%s1 + $0x528] sm:$0xff]
  %v202 = vld [vmem:[%s1 + $0x530] sm:$0xff]
  %v203 = vld [vmem:[%s1 + $0x538] sm:$0xff]
  %v204 = vld [vmem:[%s1 + $0x540] sm:$0xff]
  %v205 = vld [vmem:[%s1 + $0x548] sm:$0xff]
  %v206 = vld [vmem:[%s1 + $0x550] sm:$0xff]
  %v207 = vld [vmem:[%s1 + $0x558] sm:$0xff]
  %v208 = vld [vmem:[%s1 + $0x560] sm:$0xff]
  %v209 = vld [vmem:[%s1 + $0x568] sm:$0xff]
  %v210 = vld [vmem:[%s1 + $0x570] sm:$0xff]
  %v211 = vld [vmem:[%s1 + $0x578] sm:$0xff]
  %v212 = vld [vmem:[%s1 + $0x580] sm:$0xff]
  %v213 = vld [vmem:[%s1 + $0x588] sm:$0xff]
  %v214 = vld [vmem:[%s1 + $0x590] sm:$0xff]
  %v215 = vld [vmem:[%s1 + $0x598] sm:$0xff]
  %v216 = vld [vmem:[%s1 + $0x5a0] sm:$0xff]
  %v217 = vld [vmem:[%s1 + $0x5a8] sm:$0xff]
  %v218 = vld [vmem:[%s1 + $0x5b0] sm:$0xff]
  %v219 = vld [vmem:[%s1 + $0x5b8] sm:$0xff]
  %v220 = vld [vmem:[%s1 + $0x5c0] sm:$0xff]
  %v221 = vld [vmem:[%s1 + $0x5c8] sm:$0xff]
  %v222 = vld [vmem:[%s1 + $0x5d0] sm:$0xff]
  %v223 = vld [vmem:[%s1 + $0x5d8] sm:$0xff]
  %v224 = vld [vmem:[%s1 + $0x5e0] sm:$0xff]
  %v225 = vld [vmem:[%s1 + $0x5e8] sm:$0xff]
  %v226 = vld [vmem:[%s1 + $0x5f0] sm:$0xff]
  %v227 = vld [vmem:[%s1 + $0x5f8] sm:$0xff]
  %v228 = vld [vmem:[%s1 + $0x600] sm:$0xff]
  %v229 = vld [vmem:[%s1 + $0x608] sm:$0xff]
  %v230 = vld [vmem:[%s1 + $0x610] sm:$0xff]
  %v231 = vld [vmem:[%s1 + $0x618] sm:$0xff]
  %v232 = vld [vmem:[%s1 + $0x620] sm:$0xff]
  %v233 = vld [vmem:[%s1 + $0x628] sm:$0xff]
  %v234 = vld [vmem:[%s1 + $0x630] sm:$0xff]
  %v235 = vld [vmem:[%s1 + $0x638] sm:$0xff]
  %v236 = vld [vmem:[%s1 + $0x640] sm:$0xff]
  %v237 = vld [vmem:[%s1 + $0x648] sm:$0xff]
  %v238 = vld [vmem:[%s1 + $0x650] sm:$0xff]
  %v239 = vld [vmem:[%s1 + $0x658] sm:$0xff]
  %v240 = vld [vmem:[%s1 + $0x660] sm:$0xff]
  %v241 = vld [vmem:[%s1 + $0x668] sm:$0xff]
  %v242 = vld [vmem:[%s1 + $0x670] sm:$0xff]
  %v243 = vld [vmem:[%s1 + $0x678] sm:$0xff]
  %v244 = vld [vmem:[%s1 + $0x680] sm:$0xff]
  %v245 = vld [vmem:[%s1 + $0x688] sm:$0xff]
  %v246 = vld [vmem:[%s1 + $0x690] sm:$0xff]
  %v247 = vld [vmem:[%s1 + $0x698] sm:$0xff]
  %v248 = vld [vmem:[%s1 + $0x6a0] sm:$0xff]
  %v249 = vld [vmem:[%s1 + $0x6a8] sm:$0xff]
  %v250 = vld [vmem:[%s1 + $0x6b0] sm:$0xff]
  %v251 = vld [vmem:[%s1 + $0x6b8] sm:$0xff]
  %v252 = vld [vmem:[%s1 + $0x6c0] sm:$0xff]
  %v253 = vld [vmem:[%s1 + $0x6c8] sm:$0xff]
  %v254 = vld [vmem:[%s1 + $0x6d0] sm:$0xff]
  %v255 = vld [vmem:[%s1 + $0x6d8] sm:$0xff]
  %v256 = vld [vmem:[%s1 + $0x6e0] sm:$0xff]
  %v257 = vld [vmem:[%s1 + $0x6e8] sm:$0xff]
  %v258 = vld [vmem:[%s1 + $0x6f0] sm:$0xff]
  %v259 = vld [vmem:[%s1 + $0x6f8] sm:$0xff]
  %v260 = vld [vmem:[%s1 + $0x700] sm:$0xff]
  %v261 = vld [vmem:[%s1 + $0x708] sm:$0xff]
  %v262 = vld [vmem:[%s1 + $0x710] sm:$0xff]
  %v263 = vld [vmem:[%s1 + $0x718] sm:$0xff]
  %v264 = vld [vmem:[%s1 + $0x720] sm:$0xff]
  %v265 = vld [vmem:[%s1 + $0x728] sm:$0xff]
  %v266 = vld [vmem:[%s1 + $0x730] sm:$0xff]
  %v267 = vld [vmem:[%s1 + $0x738] sm:$0xff]
  %v268 = vld [vmem:[%s1 + $0x740] sm:$0xff]
  %v269 = vld [vmem:[%s1 + $0x748] sm:$0xff]
  %v270 = vld [vmem:[%s1 + $0x750] sm:$0xff]
  %v271 = vld [vmem:[%s1 + $0x758] sm:$0xff]
  %v272 = vld [vmem:[%s1 + $0x760] sm:$0xff]
  %v273 = vld [vmem:[%s1 + $0x768] sm:$0xff]
  %v274 = vld [vmem:[%s1 + $0x770] sm:$0xff]
  %v275 = vld [vmem:[%s1 + $0x778] sm:$0xff]
  %v276 = vld [vmem:[%s1 + $0x780] sm:$0xff]
  %v277 = vld [vmem:[%s1 + $0x788] sm:$0xff]
  %v278 = vld [vmem:[%s1 + $0x790] sm:$0xff]
  %v279 = vld [vmem:[%s1 + $0x798] sm:$0xff]
  %v280 = vld [vmem:[%s1 + $0x7a0] sm:$0xff]
  %v281 = vld [vmem:[%s1 + $0x7a8] sm:$0xff]
  %v282 = vld [vmem:[%s1 + $0x7b0] sm:$0xff]
  %v283 = vld [vmem:[%s1 + $0x7b8] sm:$0xff]
  %v284 = vld [vmem:[%s1 + $0x7c0] sm:$0xff]
  %v285 = vld [vmem:[%s1 + $0x7c8] sm:$0xff]
  %v286 = vld [vmem:[%s1 + $0x7d0] sm:$0xff]
  %v287 = vld [vmem:[%s1 + $0x7d8] sm:$0xff]
  %v288 = vld [vmem:[%s1 + $0x7e0] sm:$0xff]
  %v289 = vld [vmem:[%s1 + $0x7e8] sm:$0xff]
  %v290 = vld [vmem:[%s1 + $0x7f0] sm:$0xff]
  %v291 = vld [vmem:[%s1 + $0x7f8] sm:$0xff]
  %v292 = vld [vmem:[%s1 + $0x800] sm:$0xff]
  %v293 = vld [vmem:[%s1 + $0x808] sm:$0xff]
  %v294 = vld [vmem:[%s1 + $0x810] sm:$0xff]
  %v295 = vld [vmem:[%s1 + $0x818] sm:$0xff]
  %v296 = vld [vmem:[%s1 + $0x820] sm:$0xff]
  %v297 = vld [vmem:[%s1 + $0x828] sm:$0xff]
  %v298 = vld [vmem:[%s1 + $0x830] sm:$0xff]
  %v299 = vld [vmem:[%s1 + $0x838] sm:$0xff]
  %v300 = vld [vmem:[%s1 + $0x840] sm:$0xff]
  %v301 = vld [vmem:[%s1 + $0x848] sm:$0xff]
  %v302 = vld [vmem:[%s1 + $0x850] sm:$0xff]
  %v303 = vld [vmem:[%s1 + $0x858] sm:$0xff]
  %v304 = vld [vmem:[%s1 + $0x860] sm:$0xff]
  %v305 = vld [vmem:[%s1 + $0x868] sm:$0xff]
  %v306 = vld [vmem:[%s1 + $0x870] sm:$0xff]
  %v307 = vld [vmem:[%s1 + $0x878] sm:$0xff]
  %v308 = vld [vmem:[%s1 + $0x880] sm:$0xff]
  %v309 = vld [vmem:[%s1 + $0x888] sm:$0xff]
  %v310 = vld [vmem:[%s1 + $0x890] sm:$0xff]
  %v311 = vld [vmem:[%s1 + $0x898] sm:$0xff]
  %v312 = vld [vmem:[%s1 + $0x8a0] sm:$0xff]
  %v313 = vld [vmem:[%s1 + $0x8a8] sm:$0xff]
  %v314 = vld [vmem:[%s1 + $0x8b0] sm:$0xff]
  %v315 = vld [vmem:[%s1 + $0x8b8] sm:$0xff]
  %v316 = vld [vmem:[%s1 + $0x8c0] sm:$0xff]
  %v317 = vld [vmem:[%s1 + $0x8c8] sm:$0xff]
  %v318 = vld [vmem:[%s1 + $0x8d0] sm:$0xff]
  %v319 = vld [vmem:[%s1 + $0x8d8] sm:$0xff]
  %v320 = vld [vmem:[%s1 + $0x8e0] sm:$0xff]
  %v321 = vld [vmem:[%s1 + $0x8e8] sm:$0xff]
  %v322 = vld [vmem:[%s1 + $0x8f0] sm:$0xff]
  %v323 = vld [vmem:[%s1 + $0x8f8] sm:$0xff]
  %v324 = vld [vmem:[%s1 + $0x900] sm:$0xff]
  %v325 = vld [vmem:[%s1 + $0x908] sm:$0xff]
  %v326 = vld [vmem:[%s1 + $0x910] sm:$0xff]
  %v327 = vld [vmem:[%s1 + $0x918] sm:$0xff]
  %v328 = vld [vmem:[%s1 + $0x920] sm:$0xff]
  %v329 = vld [vmem:[%s1 + $0x928] sm:$0xff]
  %v330 = vld [vmem:[%s1 + $0x930] sm:$0xff]
  %v331 = vld [vmem:[%s1 + $0x938] sm:$0xff]
  %v332 = vld [vmem:[%s1 + $0x940] sm:$0xff]
  %v333 = vld [vmem:[%s1 + $0x948] sm:$0xff]
  %v334 = vld [vmem:[%s1 + $0x950] sm:$0xff]
  %v335 = vld [vmem:[%s1 + $0x958] sm:$0xff]
  %v336 = vld [vmem:[%s1 + $0x960] sm:$0xff]
  %v337 = vld [vmem:[%s1 + $0x968] sm:$0xff]
  %v338 = vld [vmem:[%s1 + $0x970] sm:$0xff]
  %v339 = vld [vmem:[%s1 + $0x978] sm:$0xff]
  %v340 = vld [vmem:[%s1 + $0x980] sm:$0xff]
  %v341 = vld [vmem:[%s1 + $0x988] sm:$0xff]
  %v342 = vld [vmem:[%s1 + $0x990] sm:$0xff]
  %v343 = vld [vmem:[%s1 + $0x998] sm:$0xff]
  %v344 = vld [vmem:[%s1 + $0x9a0] sm:$0xff]
  %v345 = vld [vmem:[%s1 + $0x9a8] sm:$0xff]
  %v346 = vld [vmem:[%s1 + $0x9b0] sm:$0xff]
  %v347 = vld [vmem:[%s1 + $0x9b8] sm:$0xff]
  %v348 = vld [vmem:[%s1 + $0x9c0] sm:$0xff]
  %v349 = vld [vmem:[%s1 + $0x9c8] sm:$0xff]
  %v350 = vld [vmem:[%s1 + $0x9d0] sm:$0xff]
  %v351 = vld [vmem:[%s1 + $0x9d8] sm:$0xff]
  %v352 = vld [vmem:[%s1 + $0x9e0] sm:$0xff]
  %v353 = vld [vmem:[%s1 + $0x9e8] sm:$0xff]
  %v354 = vld [vmem:[%s1 + $0x9f0] sm:$0xff]
  %v355 = vld [vmem:[%s1 + $0x9f8] sm:$0xff]
  %v356 = vld [vmem:[%s1 + $0xa00] sm:$0xff]
  %v357 = vld [vmem:[%s1 + $0xa08] sm:$0xff]
  %v358 = vld [vmem:[%s1 + $0xa10] sm:$0xff]
  %v359 = vld [vmem:[%s1 + $0xa18] sm:$0xff]
  %v360 = vld [vmem:[%s1 + $0xa20] sm:$0xff]
  %v361 = vld [vmem:[%s1 + $0xa28] sm:$0xff]
  %v362 = vld [vmem:[%s1 + $0xa30] sm:$0xff]
  %v363 = vld [vmem:[%s1 + $0xa38] sm:$0xff]
  %v364 = vld [vmem:[%s1 + $0xa40] sm:$0xff]
  %v365 = vld [vmem:[%s1 + $0xa48] sm:$0xff]
  %v366 = vld [vmem:[%s1 + $0xa50] sm:$0xff]
  %v367 = vld [vmem:[%s1 + $0xa58] sm:$0xff]
  %v368 = vld [vmem:[%s1 + $0xa60] sm:$0xff]
  %v369 = vld [vmem:[%s1 + $0xa68] sm:$0xff]
  %v370 = vld [vmem:[%s1 + $0xa70] sm:$0xff]
  %v371 = vld [vmem:[%s1 + $0xa78] sm:$0xff]
  %v372 = vld [vmem:[%s1 + $0xa80] sm:$0xff]
  %v373 = vld [vmem:[%s1 + $0xa88] sm:$0xff]
  %v374 = vld [vmem:[%s1 + $0xa90] sm:$0xff]
  %v375 = vld [vmem:[%s1 + $0xa98] sm:$0xff]
  %v376 = vld [vmem:[%s1 + $0xaa0] sm:$0xff]
  %v377 = vld [vmem:[%s1 + $0xaa8] sm:$0xff]
  %v378 = vld [vmem:[%s1 + $0xab0] sm:$0xff]
  %v379 = vld [vmem:[%s1 + $0xab8] sm:$0xff]
  %v380 = vld [vmem:[%s1 + $0xac0] sm:$0xff]
  %v381 = vld [vmem:[%s1 + $0xac8] sm:$0xff]
  %v382 = vld [vmem:[%s1 + $0xad0] sm:$0xff]
  %v383 = vld [vmem:[%s1 + $0xad8] sm:$0xff]
  %v384 = vld [vmem:[%s1 + $0xae0] sm:$0xff]
  %v385 = vld [vmem:[%s1 + $0xae8] sm:$0xff]
  %v386 = vld [vmem:[%s1 + $0xaf0] sm:$0xff]
  %v387 = vld [vmem:[%s1 + $0xaf8] sm:$0xff]
  %v388 = vld [vmem:[%s1 + $0xb00] sm:$0xff]
  %v389 = vld [vmem:[%s1 + $0xb08] sm:$0xff]
  %v390 = vld [vmem:[%s1 + $0xb10] sm:$0xff]
  %v391 = vld [vmem:[%s1 + $0xb18] sm:$0xff]
  %v392 = vld [vmem:[%s1 + $0xb20] sm:$0xff]
  %v393 = vld [vmem:[%s1 + $0xb28] sm:$0xff]
  %v394 = vld [vmem:[%s1 + $0xb30] sm:$0xff]
  %v395 = vld [vmem:[%s1 + $0xb38] sm:$0xff]
  %v396 = vld [vmem:[%s1 + $0xb40] sm:$0xff]
  %v397 = vld [vmem:[%s1 + $0xb48] sm:$0xff]
  %v398 = vld [vmem:[%s1 + $0xb50] sm:$0xff]
  %v399 = vld [vmem:[%s1 + $0xb58] sm:$0xff]
  %v400 = vld [vmem:[%s1 + $0xb60] sm:$0xff]
  %v401 = vld [vmem:[%s1 + $0xb68] sm:$0xff]
  %v402 = vld [vmem:[%s1 + $0xb70] sm:$0xff]
  %v403 = vld [vmem:[%s1 + $0xb78] sm:$0xff]
  %v404 = vld [vmem:[%s1 + $0xb80] sm:$0xff]
  %v405 = vld [vmem:[%s1 + $0xb88] sm:$0xff]
  %v406 = vld [vmem:[%s1 + $0xb90] sm:$0xff]
  %v407 = vld [vmem:[%s1 + $0xb98] sm:$0xff]
  %v408 = vld [vmem:[%s1 + $0xba0] sm:$0xff]
  %v409 = vld [vmem:[%s1 + $0xba8] sm:$0xff]
  %v410 = vld [vmem:[%s1 + $0xbb0] sm:$0xff]
  %v411 = vld [vmem:[%s1 + $0xbb8] sm:$0xff]
  %v412 = vld [vmem:[%s1 + $0xbc0] sm:$0xff]
  %v413 = vld [vmem:[%s1 + $0xbc8] sm:$0xff]
  %v414 = vld [vmem:[%s1 + $0xbd0] sm:$0xff]
  %v415 = vld [vmem:[%s1 + $0xbd8] sm:$0xff]
  %v416 = vld [vmem:[%s1 + $0xbe0] sm:$0xff]
  %v417 = vld [vmem:[%s1 + $0xbe8] sm:$0xff]
  %v418 = vld [vmem:[%s1 + $0xbf0] sm:$0xff]
  %v419 = vld [vmem:[%s1 + $0xbf8] sm:$0xff]
  %v420 = vld [vmem:[%s1 + $0xc00] sm:$0xff]
  %v421 = vld [vmem:[%s1 + $0xc08] sm:$0xff]
  %v422 = vld [vmem:[%s1 + $0xc10] sm:$0xff]
  %v423 = vld [vmem:[%s1 + $0xc18] sm:$0xff]
  %v424 = vld [vmem:[%s1 + $0xc20] sm:$0xff]
  %v425 = vld [vmem:[%s1 + $0xc28] sm:$0xff]
  %v426 = vld [vmem:[%s1 + $0xc30] sm:$0xff]
  %v427 = vld [vmem:[%s1 + $0xc38] sm:$0xff]
  %v428 = vld [vmem:[%s1 + $0xc40] sm:$0xff]
  %v429 = vld [vmem:[%s1 + $0xc48] sm:$0xff]
  %v430 = vld [vmem:[%s1 + $0xc50] sm:$0xff]
  %v431 = vld [vmem:[%s1 + $0xc58] sm:$0xff]
  %v432 = vld [vmem:[%s1 + $0xc60] sm:$0xff]
  %v433 = vld [vmem:[%s1 + $0xc68] sm:$0xff]
  %v434 = vld [vmem:[%s1 + $0xc70] sm:$0xff]
  %v435 = vld [vmem:[%s1 + $0xc78] sm:$0xff]
  %v436 = vld [vmem:[%s1 + $0xc80] sm:$0xff]
  %v437 = vld [vmem:[%s1 + $0xc88] sm:$0xff]
  %v438 = vld [vmem:[%s1 + $0xc90] sm:$0xff]
  %v439 = vld [vmem:[%s1 + $0xc98] sm:$0xff]
  %v440 = vld [vmem:[%s1 + $0xca0] sm:$0xff]
  %v441 = vld [vmem:[%s1 + $0xca8] sm:$0xff]
  %v442 = vld [vmem:[%s1 + $0xcb0] sm:$0xff]
  %v443 = vld [vmem:[%s1 + $0xcb8] sm:$0xff]
  %v444 = vld [vmem:[%s1 + $0xcc0] sm:$0xff]
  %v445 = vld [vmem:[%s1 + $0xcc8] sm:$0xff]
  %v446 = vld [vmem:[%s1 + $0xcd0] sm:$0xff]
  %v447 = vld [vmem:[%s1 + $0xcd8] sm:$0xff]
  %v448 = vld [vmem:[%s1 + $0xce0] sm:$0xff]
  %v449 = vld [vmem:[%s1 + $0xce8] sm:$0xff]
  %v450 = vld [vmem:[%s1 + $0xcf0] sm:$0xff]
  %v451 = vld [vmem:[%s1 + $0xcf8] sm:$0xff]
  %v452 = vld [vmem:[%s1 + $0xd00] sm:$0xff]
  %v453 = vld [vmem:[%s1 + $0xd08] sm:$0xff]
  %v454 = vld [vmem:[%s1 + $0xd10] sm:$0xff]
  %v455 = vld [vmem:[%s1 + $0xd18] sm:$0xff]
  %v456 = vld [vmem:[%s1 + $0xd20] sm:$0xff]
  %v457 = vld [vmem:[%s1 + $0xd28] sm:$0xff]
  %v458 = vld [vmem:[%s1 + $0xd30] sm:$0xff]
  %v459 = vld [vmem:[%s1 + $0xd38] sm:$0xff]
  %v460 = vld [vmem:[%s1 + $0xd40] sm:$0xff]
  %v461 = vld [vmem:[%s1 + $0xd48] sm:$0xff]
  %v462 = vld [vmem:[%s1 + $0xd50] sm:$0xff]
  %v463 = vld [vmem:[%s1 + $0xd58] sm:$0xff]
  %v464 = vld [vmem:[%s1 + $0xd60] sm:$0xff]
  %v465 = vld [vmem:[%s1 + $0xd68] sm:$0xff]
  %v466 = vld [vmem:[%s1 + $0xd70] sm:$0xff]
  %v467 = vld [vmem:[%s1 + $0xd78] sm:$0xff]
  %v468 = vld [vmem:[%s1 + $0xd80] sm:$0xff]
  %v469 = vld [vmem:[%s1 + $0xd88] sm:$0xff]
  %v470 = vld [vmem:[%s1 + $0xd90] sm:$0xff]
  %v471 = vld [vmem:[%s1 + $0xd98] sm:$0xff]
  %v472 = vld [vmem:[%s1 + $0xda0] sm:$0xff]
  %v473 = vld [vmem:[%s1 + $0xda8] sm:$0xff]
  %v474 = vld [vmem:[%s1 + $0xdb0] sm:$0xff]
  %v475 = vld [vmem:[%s1 + $0xdb8] sm:$0xff]
  %v476 = vld [vmem:[%s1 + $0xdc0] sm:$0xff]
  %v477 = vld [vmem:[%s1 + $0xdc8] sm:$0xff]
  %v478 = vld [vmem:[%s1 + $0xdd0] sm:$0xff]
  %v479 = vld [vmem:[%s1 + $0xdd8] sm:$0xff]
  %v480 = vld [vmem:[%s1 + $0xde0] sm:$0xff]
  %v481 = vld [vmem:[%s1 + $0xde8] sm:$0xff]
  %v482 = vld [vmem:[%s1 + $0xdf0] sm:$0xff]
  %v483 = vld [vmem:[%s1 + $0xdf8] sm:$0xff]
  %v484 = vld [vmem:[%s1 + $0xe00] sm:$0xff]
  %v485 = vld [vmem:[%s1 + $0xe08] sm:$0xff]
  %v486 = vld [vmem:[%s1 + $0xe10] sm:$0xff]
  %v487 = vld [vmem:[%s1 + $0xe18] sm:$0xff]
  %v488 = vld [vmem:[%s1 + $0xe20] sm:$0xff]
  %v489 = vld [vmem:[%s1 + $0xe28] sm:$0xff]
  %v490 = vld [vmem:[%s1 + $0xe30] sm:$0xff]
  %v491 = vld [vmem:[%s1 + $0xe38] sm:$0xff]
  %v492 = vld [vmem:[%s1 + $0xe40] sm:$0xff]
  %v493 = vld [vmem:[%s1 + $0xe48] sm:$0xff]
  %v494 = vld [vmem:[%s1 + $0xe50] sm:$0xff]
  %v495 = vld [vmem:[%s1 + $0xe58] sm:$0xff]
  %v496 = vld [vmem:[%s1 + $0xe60] sm:$0xff]
  %v497 = vld [vmem:[%s1 + $0xe68] sm:$0xff]
  %v498 = vld [vmem:[%s1 + $0xe70] sm:$0xff]
  %v499 = vld [vmem:[%s1 + $0xe78] sm:$0xff]
  %v500 = vld [vmem:[%s1 + $0xe80] sm:$0xff]
  %v501 = vld [vmem:[%s1 + $0xe88] sm:$0xff]
  %v502 = vld [vmem:[%s1 + $0xe90] sm:$0xff]
  %v503 = vld [vmem:[%s1 + $0xe98] sm:$0xff]
  %v504 = vld [vmem:[%s1 + $0xea0] sm:$0xff]
  %v505 = vld [vmem:[%s1 + $0xea8] sm:$0xff]
  %v506 = vld [vmem:[%s1 + $0xeb0] sm:$0xff]
  %v507 = vld [vmem:[%s1 + $0xeb8] sm:$0xff]
  %v508 = vld [vmem:[%s1 + $0xec0] sm:$0xff]
  %v509 = vld [vmem:[%s1 + $0xec8] sm:$0xff]
  %v510 = vld [vmem:[%s1 + $0xed0] sm:$0xff]
  %v511 = vld [vmem:[%s1 + $0xed8] sm:$0xff]
  %v512 = vld [vmem:[%s1 + $0xee0] sm:$0xff]
  %v513 = vld [vmem:[%s1 + $0xee8] sm:$0xff]
  %v514 = vld [vmem:[%s1 + $0xef0] sm:$0xff]
  %v515 = vld [vmem:[%s1 + $0xef8] sm:$0xff]
  %v516 = vld [vmem:[%s1 + $0xf00] sm:$0xff]
  %v517 = vld [vmem:[%s1 + $0xf08] sm:$0xff]
  %v518 = vld [vmem:[%s1 + $0xf10] sm:$0xff]
  %v519 = vld [vmem:[%s1 + $0xf18] sm:$0xff]
  %v520 = vld [vmem:[%s1 + $0xf20] sm:$0xff]
  %v521 = vld [vmem:[%s1 + $0xf28] sm:$0xff]
  %v522 = vld [vmem:[%s1 + $0xf30] sm:$0xff]
  %v523 = vld [vmem:[%s1 + $0xf38] sm:$0xff]
  %v524 = vld [vmem:[%s1 + $0xf40] sm:$0xff]
  %v525 = vld [vmem:[%s1 + $0xf48] sm:$0xff]
  %v526 = vld [vmem:[%s1 + $0xf50] sm:$0xff]
  %v527 = vld [vmem:[%s1 + $0xf58] sm:$0xff]
  %v528 = vld [vmem:[%s1 + $0xf60] sm:$0xff]
  %v529 = vld [vmem:[%s1 + $0xf68] sm:$0xff]
  %v530 = vld [vmem:[%s1 + $0xf70] sm:$0xff]
  %v531 = vld [vmem:[%s1 + $0xf78] sm:$0xff]
  %v532 = vld [vmem:[%s1 + $0xf80] sm:$0xff]
  %v533 = vld [vmem:[%s1 + $0xf88] sm:$0xff]
  %v534 = vld [vmem:[%s1 + $0xf90] sm:$0xff]
  %v535 = vld [vmem:[%s1 + $0xf98] sm:$0xff]
  %v536 = vld [vmem:[%s1 + $0xfa0] sm:$0xff]
  %v537 = vld [vmem:[%s1 + $0xfa8] sm:$0xff]
  %v538 = vld [vmem:[%s1 + $0xfb0] sm:$0xff]
  %v539 = vld [vmem:[%s1 + $0xfb8] sm:$0xff]
  %v540 = vld [vmem:[%s1 + $0xfc0] sm:$0xff]
  %v541 = vld [vmem:[%s1 + $0xfc8] sm:$0xff]
  %v542 = vld [vmem:[%s1 + $0xfd0] sm:$0xff]
  %v543 = vld [vmem:[%s1 + $0xfd8] sm:$0xff]
  %v544 = vld [vmem:[%s1 + $0xfe0] sm:$0xff]
  %v545 = vld [vmem:[%s1 + $0xfe8] sm:$0xff]
  %v546 = vld [vmem:[%s1 + $0xff0] sm:$0xff]
  %v547 = vld [vmem:[%s1 + $0xff8] sm:$0xff]
  %v548 = vld [vmem:[#allocation2] sm:$0xff]
  %v549 = vpack.c.bf16 %v548, %v548
  %v550 = vld [vmem:[%s2] sm:$0xff]
  %v551 = vld [vmem:[%s2 + $0x8] sm:$0xff]
  %v552 = vld [vmem:[%s2 + $0x10] sm:$0xff]
  %v553 = vld [vmem:[%s2 + $0x18] sm:$0xff]
  %v554 = vld [vmem:[%s2 + $0x20] sm:$0xff]
  %v555 = vld [vmem:[%s2 + $0x28] sm:$0xff]
  %v556 = vld [vmem:[%s2 + $0x30] sm:$0xff]
  %v557 = vld [vmem:[%s2 + $0x38] sm:$0xff]
  %v558 = vld [vmem:[%s2 + $0x40] sm:$0xff]
  %v559 = vld [vmem:[%s2 + $0x48] sm:$0xff]
  %v560 = vld [vmem:[%s2 + $0x50] sm:$0xff]
  %v561 = vld [vmem:[%s2 + $0x58] sm:$0xff]
  %v562 = vld [vmem:[%s2 + $0x60] sm:$0xff]
  %v563 = vld [vmem:[%s2 + $0x68] sm:$0xff]
  %v564 = vld [vmem:[%s2 + $0x70] sm:$0xff]
  %v565 = vld [vmem:[%s2 + $0x78] sm:$0xff]
  %v566 = vld [vmem:[%s2 + $0x80] sm:$0xff]
  %v567 = vld [vmem:[%s2 + $0x88] sm:$0xff]
  %v568 = vld [vmem:[%s2 + $0x90] sm:$0xff]
  %v569 = vld [vmem:[%s2 + $0x98] sm:$0xff]
  %v570 = vld [vmem:[%s2 + $0xa0] sm:$0xff]
  %v571 = vld [vmem:[%s2 + $0xa8] sm:$0xff]
  %v572 = vld [vmem:[%s2 + $0xb0] sm:$0xff]
  %v573 = vld [vmem:[%s2 + $0xb8] sm:$0xff]
  %v574 = vld [vmem:[%s2 + $0xc0] sm:$0xff]
  %v575 = vld [vmem:[%s2 + $0xc8] sm:$0xff]
  %v576 = vld [vmem:[%s2 + $0xd0] sm:$0xff]
  %v577 = vld [vmem:[%s2 + $0xd8] sm:$0xff]
  %v578 = vld [vmem:[%s2 + $0xe0] sm:$0xff]
  %v579 = vld [vmem:[%s2 + $0xe8] sm:$0xff]
  %v580 = vld [vmem:[%s2 + $0xf0] sm:$0xff]
  %v581 = vld [vmem:[%s2 + $0xf8] sm:$0xff]
  %v582 = vld [vmem:[%s2 + $0x100] sm:$0xff]
  %v583 = vld [vmem:[%s2 + $0x108] sm:$0xff]
  %v584 = vld [vmem:[%s2 + $0x110] sm:$0xff]
  %v585 = vld [vmem:[%s2 + $0x118] sm:$0xff]
  %v586 = vld [vmem:[%s2 + $0x120] sm:$0xff]
  %v587 = vld [vmem:[%s2 + $0x128] sm:$0xff]
  %v588 = vld [vmem:[%s2 + $0x130] sm:$0xff]
  %v589 = vld [vmem:[%s2 + $0x138] sm:$0xff]
  %v590 = vld [vmem:[%s2 + $0x140] sm:$0xff]
  %v591 = vld [vmem:[%s2 + $0x148] sm:$0xff]
  %v592 = vld [vmem:[%s2 + $0x150] sm:$0xff]
  %v593 = vld [vmem:[%s2 + $0x158] sm:$0xff]
  %v594 = vld [vmem:[%s2 + $0x160] sm:$0xff]
  %v595 = vld [vmem:[%s2 + $0x168] sm:$0xff]
  %v596 = vld [vmem:[%s2 + $0x170] sm:$0xff]
  %v597 = vld [vmem:[%s2 + $0x178] sm:$0xff]
  %v598 = vld [vmem:[%s2 + $0x180] sm:$0xff]
  %v599 = vld [vmem:[%s2 + $0x188] sm:$0xff]
  %v600 = vld [vmem:[%s2 + $0x190] sm:$0xff]
  %v601 = vld [vmem:[%s2 + $0x198] sm:$0xff]
  %v602 = vld [vmem:[%s2 + $0x1a0] sm:$0xff]
  %v603 = vld [vmem:[%s2 + $0x1a8] sm:$0xff]
  %v604 = vld [vmem:[%s2 + $0x1b0] sm:$0xff]
  %v605 = vld [vmem:[%s2 + $0x1b8] sm:$0xff]
  %v606 = vld [vmem:[%s2 + $0x1c0] sm:$0xff]
  %v607 = vld [vmem:[%s2 + $0x1c8] sm:$0xff]
  %v608 = vld [vmem:[%s2 + $0x1d0] sm:$0xff]
  %v609 = vld [vmem:[%s2 + $0x1d8] sm:$0xff]
  %v610 = vld [vmem:[%s2 + $0x1e0] sm:$0xff]
  %v611 = vld [vmem:[%s2 + $0x1e8] sm:$0xff]
  %v612 = vld [vmem:[%s2 + $0x1f0] sm:$0xff]
  %v613 = vld [vmem:[%s2 + $0x1f8] sm:$0xff]
  %v678 = vunpack.c.l.b16 %v550
  %v679 = vunpack.c.h.b16 %v550
  %v680 = vunpack.c.l.b16 %v551
  %v681 = vunpack.c.h.b16 %v551
  %v682 = vunpack.c.l.b16 %v552
  %v683 = vunpack.c.h.b16 %v552
  %v684 = vunpack.c.l.b16 %v553
  %v685 = vunpack.c.h.b16 %v553
  %v686 = vunpack.c.l.b16 %v554
  %v687 = vunpack.c.h.b16 %v554
  %v688 = vunpack.c.l.b16 %v555
  %v689 = vunpack.c.h.b16 %v555
  %v690 = vunpack.c.l.b16 %v556
  %v691 = vunpack.c.h.b16 %v556
  %v692 = vunpack.c.l.b16 %v557
  %v693 = vunpack.c.h.b16 %v557
  %v694 = vunpack.c.l.b16 %v558
  %v695 = vunpack.c.h.b16 %v558
  %v696 = vunpack.c.l.b16 %v559
  %v697 = vunpack.c.h.b16 %v559
  %v698 = vunpack.c.l.b16 %v560
  %v699 = vunpack.c.h.b16 %v560
  %v700 = vunpack.c.l.b16 %v561
  %v701 = vunpack.c.h.b16 %v561
  %v702 = vunpack.c.l.b16 %v562
  %v703 = vunpack.c.h.b16 %v562
  %v704 = vunpack.c.l.b16 %v563
  %v705 = vunpack.c.h.b16 %v563
  %v706 = vunpack.c.l.b16 %v564
  %v707 = vunpack.c.h.b16 %v564
  %v708 = vunpack.c.l.b16 %v565
  %v709 = vunpack.c.h.b16 %v565
  %v710 = vunpack.c.l.b16 %v566
  %v711 = vunpack.c.h.b16 %v566
  %v712 = vunpack.c.l.b16 %v567
  %v713 = vunpack.c.h.b16 %v567
  %v714 = vunpack.c.l.b16 %v568
  %v715 = vunpack.c.h.b16 %v568
  %v716 = vunpack.c.l.b16 %v569
  %v717 = vunpack.c.h.b16 %v569
  %v718 = vunpack.c.l.b16 %v570
  %v719 = vunpack.c.h.b16 %v570
  %v720 = vunpack.c.l.b16 %v571
  %v721 = vunpack.c.h.b16 %v571
  %v722 = vunpack.c.l.b16 %v572
  %v723 = vunpack.c.h.b16 %v572
  %v724 = vunpack.c.l.b16 %v573
  %v725 = vunpack.c.h.b16 %v573
  %v726 = vunpack.c.l.b16 %v574
  %v727 = vunpack.c.h.b16 %v574
  %v728 = vunpack.c.l.b16 %v575
  %v729 = vunpack.c.h.b16 %v575
  %v730 = vunpack.c.l.b16 %v576
  %v731 = vunpack.c.h.b16 %v576
  %v732 = vunpack.c.l.b16 %v577
  %v733 = vunpack.c.h.b16 %v577
  %v734 = vunpack.c.l.b16 %v578
  %v735 = vunpack.c.h.b16 %v578
  %v736 = vunpack.c.l.b16 %v579
  %v737 = vunpack.c.h.b16 %v579
  %v738 = vunpack.c.l.b16 %v580
  %v739 = vunpack.c.h.b16 %v580
  %v740 = vunpack.c.l.b16 %v581
  %v741 = vunpack.c.h.b16 %v581
  %v742 = vunpack.c.l.b16 %v582
  %v743 = vunpack.c.h.b16 %v582
  %v744 = vunpack.c.l.b16 %v583
  %v745 = vunpack.c.h.b16 %v583
  %v746 = vunpack.c.l.b16 %v584
  %v747 = vunpack.c.h.b16 %v584
  %v748 = vunpack.c.l.b16 %v585
  %v749 = vunpack.c.h.b16 %v585
  %v750 = vunpack.c.l.b16 %v586
  %v751 = vunpack.c.h.b16 %v586
  %v752 = vunpack.c.l.b16 %v587
  %v753 = vunpack.c.h.b16 %v587
  %v754 = vunpack.c.l.b16 %v588
  %v755 = vunpack.c.h.b16 %v588
  %v756 = vunpack.c.l.b16 %v589
  %v757 = vunpack.c.h.b16 %v589
  %v758 = vunpack.c.l.b16 %v590
  %v759 = vunpack.c.h.b16 %v590
  %v760 = vunpack.c.l.b16 %v591
  %v761 = vunpack.c.h.b16 %v591
  %v762 = vunpack.c.l.b16 %v592
  %v763 = vunpack.c.h.b16 %v592
  %v764 = vunpack.c.l.b16 %v593
  %v765 = vunpack.c.h.b16 %v593
  %v766 = vunpack.c.l.b16 %v594
  %v767 = vunpack.c.h.b16 %v594
  %v768 = vunpack.c.l.b16 %v595
  %v769 = vunpack.c.h.b16 %v595
  %v770 = vunpack.c.l.b16 %v596
  %v771 = vunpack.c.h.b16 %v596
  %v772 = vunpack.c.l.b16 %v597
  %v773 = vunpack.c.h.b16 %v597
  %v774 = vunpack.c.l.b16 %v598
  %v775 = vunpack.c.h.b16 %v598
  %v776 = vunpack.c.l.b16 %v599
  %v777 = vunpack.c.h.b16 %v599
  %v778 = vunpack.c.l.b16 %v600
  %v779 = vunpack.c.h.b16 %v600
  %v780 = vunpack.c.l.b16 %v601
  %v781 = vunpack.c.h.b16 %v601
  %v782 = vunpack.c.l.b16 %v602
  %v783 = vunpack.c.h.b16 %v602
  %v784 = vunpack.c.l.b16 %v603
  %v785 = vunpack.c.h.b16 %v603
  %v786 = vunpack.c.l.b16 %v604
  %v787 = vunpack.c.h.b16 %v604
  %v788 = vunpack.c.l.b16 %v605
  %v789 = vunpack.c.h.b16 %v605
  %v790 = vunpack.c.l.b16 %v606
  %v791 = vunpack.c.h.b16 %v606
  %v792 = vunpack.c.l.b16 %v607
  %v793 = vunpack.c.h.b16 %v607
  %v794 = vunpack.c.l.b16 %v608
  %v795 = vunpack.c.h.b16 %v608
  %v796 = vunpack.c.l.b16 %v609
  %v797 = vunpack.c.h.b16 %v609
  %v798 = vunpack.c.l.b16 %v610
  %v799 = vunpack.c.h.b16 %v610
  %v800 = vunpack.c.l.b16 %v611
  %v801 = vunpack.c.h.b16 %v611
  %v802 = vunpack.c.l.b16 %v612
  %v803 = vunpack.c.h.b16 %v612
  %v804 = vunpack.c.l.b16 %v613
  %v805 = vunpack.c.h.b16 %v613
  %v806 = vpack.c.b16 %v686, %v678
  %v807 = vpack.c.b16 %v687, %v679
  %v808 = vpack.c.b16 %v688, %v680
  %v809 = vpack.c.b16 %v689, %v681
  %v810 = vpack.c.b16 %v690, %v682
  %v811 = vpack.c.b16 %v691, %v683
  %v812 = vpack.c.b16 %v692, %v684
  %v813 = vpack.c.b16 %v693, %v685
  %v814 = vpack.c.b16 %v702, %v694
  %v815 = vpack.c.b16 %v703, %v695
  %v816 = vpack.c.b16 %v704, %v696
  %v817 = vpack.c.b16 %v705, %v697
  %v818 = vpack.c.b16 %v706, %v698
  %v819 = vpack.c.b16 %v707, %v699
  %v820 = vpack.c.b16 %v708, %v700
  %v821 = vpack.c.b16 %v709, %v701
  %v822 = vpack.c.b16 %v718, %v710
  %v823 = vpack.c.b16 %v719, %v711
  %v824 = vpack.c.b16 %v720, %v712
  %v825 = vpack.c.b16 %v721, %v713
  %v826 = vpack.c.b16 %v722, %v714
  %v827 = vpack.c.b16 %v723, %v715
  %v828 = vpack.c.b16 %v724, %v716
  %v829 = vpack.c.b16 %v725, %v717
  %v830 = vpack.c.b16 %v734, %v726
  %v831 = vpack.c.b16 %v735, %v727
  %v832 = vpack.c.b16 %v736, %v728
  %v833 = vpack.c.b16 %v737, %v729
  %v834 = vpack.c.b16 %v738, %v730
  %v835 = vpack.c.b16 %v739, %v731
  %v836 = vpack.c.b16 %v740, %v732
  %v837 = vpack.c.b16 %v741, %v733
  %v838 = vpack.c.b16 %v750, %v742
  %v839 = vpack.c.b16 %v751, %v743
  %v840 = vpack.c.b16 %v752, %v744
  %v841 = vpack.c.b16 %v753, %v745
  %v842 = vpack.c.b16 %v754, %v746
  %v843 = vpack.c.b16 %v755, %v747
  %v844 = vpack.c.b16 %v756, %v748
  %v845 = vpack.c.b16 %v757, %v749
  %v846 = vpack.c.b16 %v766, %v758
  %v847 = vpack.c.b16 %v767, %v759
  %v848 = vpack.c.b16 %v768, %v760
  %v849 = vpack.c.b16 %v769, %v761
  %v850 = vpack.c.b16 %v770, %v762
  %v851 = vpack.c.b16 %v771, %v763
  %v852 = vpack.c.b16 %v772, %v764
  %v853 = vpack.c.b16 %v773, %v765
  %v854 = vpack.c.b16 %v782, %v774
  %v855 = vpack.c.b16 %v783, %v775
  %v856 = vpack.c.b16 %v784, %v776
  %v857 = vpack.c.b16 %v785, %v777
  %v858 = vpack.c.b16 %v786, %v778
  %v859 = vpack.c.b16 %v787, %v779
  %v860 = vpack.c.b16 %v788, %v780
  %v861 = vpack.c.b16 %v789, %v781
  %v862 = vpack.c.b16 %v798, %v790
  %v863 = vpack.c.b16 %v799, %v791
  %v864 = vpack.c.b16 %v800, %v792
  %v865 = vpack.c.b16 %v801, %v793
  %v866 = vpack.c.b16 %v802, %v794
  %v867 = vpack.c.b16 %v803, %v795
  %v868 = vpack.c.b16 %v804, %v796
  %v869 = vpack.c.b16 %v805, %v797
  %934 = vmatprep.subr.bf16.mxu0 %v863
  %935 = vmatpush1.bf16.msra.mxu0 %v862
  %936 = vmatprep.subr.bf16.mxu0 %v855
  %937 = vmatpush1.bf16.msra.mxu0 %v854
  %938 = vmatprep.subr.bf16.mxu0 %v847
  %939 = vmatpush1.bf16.msra.mxu0 %v846
  %940 = vmatprep.subr.bf16.mxu0 %v839
  %941 = vmatpush1.bf16.msra.mxu0 %v838
  %942 = vmatprep.subr.bf16.mxu0 %v831
  %943 = vmatpush1.bf16.msra.mxu0 %v830
  %944 = vmatprep.subr.bf16.mxu0 %v823
  %945 = vmatpush1.bf16.msra.mxu0 %v822
  %946 = vmatprep.subr.bf16.mxu0 %v815
  %947 = vmatpush1.bf16.msra.mxu0 %v814
  %948 = vmatprep.subr.bf16.mxu0 %v807
  %949 = vmatpush1.bf16.msra.mxu0 %v806
  %950 = vmatprep.subr.bf16.mxu0 0
  %951 = vmatpush2.bf16.msra.mxu0 0
  %952 = vmatprep.subr.bf16.mxu0 0
  %953 = vmatpush2.bf16.msra.mxu0 0
  %954 = vmatprep.subr.bf16.mxu0 0
  %955 = vmatpush2.bf16.msra.mxu0 0
  %956 = vmatprep.subr.bf16.mxu0 0
  %957 = vmatpush2.bf16.msra.mxu0 0
  %958 = vmatprep.subr.bf16.mxu0 0
  %959 = vmatpush2.bf16.msra.mxu0 0
  %960 = vmatprep.subr.bf16.mxu0 0
  %961 = vmatpush2.bf16.msra.mxu0 0
  %962 = vmatprep.subr.bf16.mxu0 0
  %963 = vmatpush2.bf16.msra.mxu0 0
  %964 = vmatprep.subr.bf16.mxu0 0
  %965 = vmatpush2.bf16.msra.mxu0 0
  %966 = vmatprep.mubr.bf16.mxu0 0
  %967 = vmatmul.mubr.bf16.gmra.mxu0 %v549
  %v968 = vpop.f32.mrf.mxu0
  %v969 = vadd.f32 0.0, %v968
  %v970 = vpop.f32.mrf.mxu0
  %v971 = vadd.f32 0.0, %v970
  %v972 = vpop.f32.mrf.mxu0
  %v973 = vpop.f32.mrf.mxu0
  %974 = vdwg.mxu0
  %975 = vmatprep.subr.bf16.mxu0 %v865
  %976 = vmatpush1.bf16.msra.mxu0 %v864
  %977 = vmatprep.subr.bf16.mxu0 %v857
  %978 = vmatpush1.bf16.msra.mxu0 %v856
  %979 = vmatprep.subr.bf16.mxu0 %v849
  %980 = vmatpush1.bf16.msra.mxu0 %v848
  %981 = vmatprep.subr.bf16.mxu0 %v841
  %982 = vmatpush1.bf16.msra.mxu0 %v840
  %983 = vmatprep.subr.bf16.mxu0 %v833
  %984 = vmatpush1.bf16.msra.mxu0 %v832
  %985 = vmatprep.subr.bf16.mxu0 %v825
  %986 = vmatpush1.bf16.msra.mxu0 %v824
  %987 = vmatprep.subr.bf16.mxu0 %v817
  %988 = vmatpush1.bf16.msra.mxu0 %v816
  %989 = vmatprep.subr.bf16.mxu0 %v809
  %990 = vmatpush1.bf16.msra.mxu0 %v808
  %991 = vmatprep.subr.bf16.mxu0 0
  %992 = vmatpush2.bf16.msra.mxu0 0
  %993 = vmatprep.subr.bf16.mxu0 0
  %994 = vmatpush2.bf16.msra.mxu0 0
  %995 = vmatprep.subr.bf16.mxu0 0
  %996 = vmatpush2.bf16.msra.mxu0 0
  %997 = vmatprep.subr.bf16.mxu0 0
  %998 = vmatpush2.bf16.msra.mxu0 0
  %999 = vmatprep.subr.bf16.mxu0 0
  %1000 = vmatpush2.bf16.msra.mxu0 0
  %1001 = vmatprep.subr.bf16.mxu0 0
  %1002 = vmatpush2.bf16.msra.mxu0 0
  %1003 = vmatprep.subr.bf16.mxu0 0
  %1004 = vmatpush2.bf16.msra.mxu0 0
  %1005 = vmatprep.subr.bf16.mxu0 0
  %1006 = vmatpush2.bf16.msra.mxu0 0
  %1007 = vmatprep.mubr.bf16.mxu0 0
  %1008 = vmatmul.mubr.bf16.gmra.mxu0 %v549
  %v1009 = vpop.f32.mrf.mxu0
  %v1010 = vadd.f32 0.0, %v1009
  %v1011 = vpop.f32.mrf.mxu0
  %v1012 = vadd.f32 0.0, %v1011
  %v1013 = vpop.f32.mrf.mxu0
  %v1014 = vpop.f32.mrf.mxu0
  %1015 = vdwg.mxu0
  %1016 = vmatprep.subr.bf16.mxu0 %v867
  %1017 = vmatpush1.bf16.msra.mxu0 %v866
  %1018 = vmatprep.subr.bf16.mxu0 %v859
  %1019 = vmatpush1.bf16.msra.mxu0 %v858
  %1020 = vmatprep.subr.bf16.mxu0 %v851
  %1021 = vmatpush1.bf16.msra.mxu0 %v850
  %1022 = vmatprep.subr.bf16.mxu0 %v843
  %1023 = vmatpush1.bf16.msra.mxu0 %v842
  %1024 = vmatprep.subr.bf16.mxu0 %v835
  %1025 = vmatpush1.bf16.msra.mxu0 %v834
  %1026 = vmatprep.subr.bf16.mxu0 %v827
  %1027 = vmatpush1.bf16.msra.mxu0 %v826
  %1028 = vmatprep.subr.bf16.mxu0 %v819
  %1029 = vmatpush1.bf16.msra.mxu0 %v818
  %1030 = vmatprep.subr.bf16.mxu0 %v811
  %1031 = vmatpush1.bf16.msra.mxu0 %v810
  %1032 = vmatprep.subr.bf16.mxu0 0
  %1033 = vmatpush2.bf16.msra.mxu0 0
  %1034 = vmatprep.subr.bf16.mxu0 0
  %1035 = vmatpush2.bf16.msra.mxu0 0
  %1036 = vmatprep.subr.bf16.mxu0 0
  %1037 = vmatpush2.bf16.msra.mxu0 0
  %1038 = vmatprep.subr.bf16.mxu0 0
  %1039 = vmatpush2.bf16.msra.mxu0 0
  %1040 = vmatprep.subr.bf16.mxu0 0
  %1041 = vmatpush2.bf16.msra.mxu0 0
  %1042 = vmatprep.subr.bf16.mxu0 0
  %1043 = vmatpush2.bf16.msra.mxu0 0
  %1044 = vmatprep.subr.bf16.mxu0 0
  %1045 = vmatpush2.bf16.msra.mxu0 0
  %1046 = vmatprep.subr.bf16.mxu0 0
  %1047 = vmatpush2.bf16.msra.mxu0 0
  %1048 = vmatprep.mubr.bf16.mxu0 0
  %1049 = vmatmul.mubr.bf16.gmra.mxu0 %v549
  %v1050 = vpop.f32.mrf.mxu0
  %v1051 = vadd.f32 0.0, %v1050
  %v1052 = vpop.f32.mrf.mxu0
  %v1053 = vadd.f32 0.0, %v1052
  %v1054 = vpop.f32.mrf.mxu0
  %v1055 = vpop.f32.mrf.mxu0
  %1056 = vdwg.mxu0
  %1057 = vmatprep.subr.bf16.mxu0 %v869
  %1058 = vmatpush1.bf16.msra.mxu0 %v868
  %1059 = vmatprep.subr.bf16.mxu0 %v861
  %1060 = vmatpush1.bf16.msra.mxu0 %v860
  %1061 = vmatprep.subr.bf16.mxu0 %v853
  %1062 = vmatpush1.bf16.msra.mxu0 %v852
  %1063 = vmatprep.subr.bf16.mxu0 %v845
  %1064 = vmatpush1.bf16.msra.mxu0 %v844
  %1065 = vmatprep.subr.bf16.mxu0 %v837
  %1066 = vmatpush1.bf16.msra.mxu0 %v836
  %1067 = vmatprep.subr.bf16.mxu0 %v829
  %1068 = vmatpush1.bf16.msra.mxu0 %v828
  %1069 = vmatprep.subr.bf16.mxu0 %v821
  %1070 = vmatpush1.bf16.msra.mxu0 %v820
  %1071 = vmatprep.subr.bf16.mxu0 %v813
  %1072 = vmatpush1.bf16.msra.mxu0 %v812
  %1073 = vmatprep.subr.bf16.mxu0 0
  %1074 = vmatpush2.bf16.msra.mxu0 0
  %1075 = vmatprep.subr.bf16.mxu0 0
  %1076 = vmatpush2.bf16.msra.mxu0 0
  %1077 = vmatprep.subr.bf16.mxu0 0
  %1078 = vmatpush2.bf16.msra.mxu0 0
  %1079 = vmatprep.subr.bf16.mxu0 0
  %1080 = vmatpush2.bf16.msra.mxu0 0
  %1081 = vmatprep.subr.bf16.mxu0 0
  %1082 = vmatpush2.bf16.msra.mxu0 0
  %1083 = vmatprep.subr.bf16.mxu0 0
  %1084 = vmatpush2.bf16.msra.mxu0 0
  %1085 = vmatprep.subr.bf16.mxu0 0
  %1086 = vmatpush2.bf16.msra.mxu0 0
  %1087 = vmatprep.subr.bf16.mxu0 0
  %1088 = vmatpush2.bf16.msra.mxu0 0
  %1089 = vmatprep.mubr.bf16.mxu0 0
  %1090 = vmatmul.mubr.bf16.gmra.mxu0 %v549
  %v1091 = vpop.f32.mrf.mxu0
  %v1092 = vadd.f32 0.0, %v1091
  %v1093 = vpop.f32.mrf.mxu0
  %v1094 = vadd.f32 0.0, %v1093
  %v1095 = vpop.f32.mrf.mxu0
  %v1096 = vpop.f32.mrf.mxu0
  %1097 = vdwg.mxu0
  %v1610 = vunpack.c.l.b16 %v36
  %v1611 = vunpack.c.h.b16 %v36
  %v1612 = vunpack.c.l.b16 %v37
  %v1613 = vunpack.c.h.b16 %v37
  %v1614 = vunpack.c.l.b16 %v38
  %v1615 = vunpack.c.h.b16 %v38
  %v1616 = vunpack.c.l.b16 %v39
  %v1617 = vunpack.c.h.b16 %v39
  %v1618 = vunpack.c.l.b16 %v40
  %v1619 = vunpack.c.h.b16 %v40
  %v1620 = vunpack.c.l.b16 %v41
  %v1621 = vunpack.c.h.b16 %v41
  %v1622 = vunpack.c.l.b16 %v42
  %v1623 = vunpack.c.h.b16 %v42
  %v1624 = vunpack.c.l.b16 %v43
  %v1625 = vunpack.c.h.b16 %v43
  %v1626 = vunpack.c.l.b16 %v44
  %v1627 = vunpack.c.h.b16 %v44
  %v1628 = vunpack.c.l.b16 %v45
  %v1629 = vunpack.c.h.b16 %v45
  %v1630 = vunpack.c.l.b16 %v46
  %v1631 = vunpack.c.h.b16 %v46
  %v1632 = vunpack.c.l.b16 %v47
  %v1633 = vunpack.c.h.b16 %v47
  %v1634 = vunpack.c.l.b16 %v48
  %v1635 = vunpack.c.h.b16 %v48
  %v1636 = vunpack.c.l.b16 %v49
  %v1637 = vunpack.c.h.b16 %v49
  %v1638 = vunpack.c.l.b16 %v50
  %v1639 = vunpack.c.h.b16 %v50
  %v1640 = vunpack.c.l.b16 %v51
  %v1641 = vunpack.c.h.b16 %v51
  %v1642 = vunpack.c.l.b16 %v52
  %v1643 = vunpack.c.h.b16 %v52
  %v1644 = vunpack.c.l.b16 %v53
  %v1645 = vunpack.c.h.b16 %v53
  %v1646 = vunpack.c.l.b16 %v54
  %v1647 = vunpack.c.h.b16 %v54
  %v1648 = vunpack.c.l.b16 %v55
  %v1649 = vunpack.c.h.b16 %v55
  %v1650 = vunpack.c.l.b16 %v56
  %v1651 = vunpack.c.h.b16 %v56
  %v1652 = vunpack.c.l.b16 %v57
  %v1653 = vunpack.c.h.b16 %v57
  %v1654 = vunpack.c.l.b16 %v58
  %v1655 = vunpack.c.h.b16 %v58
  %v1656 = vunpack.c.l.b16 %v59
  %v1657 = vunpack.c.h.b16 %v59
  %v1658 = vunpack.c.l.b16 %v60
  %v1659 = vunpack.c.h.b16 %v60
  %v1660 = vunpack.c.l.b16 %v61
  %v1661 = vunpack.c.h.b16 %v61
  %v1662 = vunpack.c.l.b16 %v62
  %v1663 = vunpack.c.h.b16 %v62
  %v1664 = vunpack.c.l.b16 %v63
  %v1665 = vunpack.c.h.b16 %v63
  %v1666 = vunpack.c.l.b16 %v64
  %v1667 = vunpack.c.h.b16 %v64
  %v1668 = vunpack.c.l.b16 %v65
  %v1669 = vunpack.c.h.b16 %v65
  %v1670 = vunpack.c.l.b16 %v66
  %v1671 = vunpack.c.h.b16 %v66
  %v1672 = vunpack.c.l.b16 %v67
  %v1673 = vunpack.c.h.b16 %v67
  %v1674 = vunpack.c.l.b16 %v68
  %v1675 = vunpack.c.h.b16 %v68
  %v1676 = vunpack.c.l.b16 %v69
  %v1677 = vunpack.c.h.b16 %v69
  %v1678 = vunpack.c.l.b16 %v70
  %v1679 = vunpack.c.h.b16 %v70
  %v1680 = vunpack.c.l.b16 %v71
  %v1681 = vunpack.c.h.b16 %v71
  %v1682 = vunpack.c.l.b16 %v72
  %v1683 = vunpack.c.h.b16 %v72
  %v1684 = vunpack.c.l.b16 %v73
  %v1685 = vunpack.c.h.b16 %v73
  %v1686 = vunpack.c.l.b16 %v74
  %v1687 = vunpack.c.h.b16 %v74
  %v1688 = vunpack.c.l.b16 %v75
  %v1689 = vunpack.c.h.b16 %v75
  %v1690 = vunpack.c.l.b16 %v76
  %v1691 = vunpack.c.h.b16 %v76
  %v1692 = vunpack.c.l.b16 %v77
  %v1693 = vunpack.c.h.b16 %v77
  %v1694 = vunpack.c.l.b16 %v78
  %v1695 = vunpack.c.h.b16 %v78
  %v1696 = vunpack.c.l.b16 %v79
  %v1697 = vunpack.c.h.b16 %v79
  %v1698 = vunpack.c.l.b16 %v80
  %v1699 = vunpack.c.h.b16 %v80
  %v1700 = vunpack.c.l.b16 %v81
  %v1701 = vunpack.c.h.b16 %v81
  %v1702 = vunpack.c.l.b16 %v82
  %v1703 = vunpack.c.h.b16 %v82
  %v1704 = vunpack.c.l.b16 %v83
  %v1705 = vunpack.c.h.b16 %v83
  %v1706 = vunpack.c.l.b16 %v84
  %v1707 = vunpack.c.h.b16 %v84
  %v1708 = vunpack.c.l.b16 %v85
  %v1709 = vunpack.c.h.b16 %v85
  %v1710 = vunpack.c.l.b16 %v86
  %v1711 = vunpack.c.h.b16 %v86
  %v1712 = vunpack.c.l.b16 %v87
  %v1713 = vunpack.c.h.b16 %v87
  %v1714 = vunpack.c.l.b16 %v88
  %v1715 = vunpack.c.h.b16 %v88
  %v1716 = vunpack.c.l.b16 %v89
  %v1717 = vunpack.c.h.b16 %v89
  %v1718 = vunpack.c.l.b16 %v90
  %v1719 = vunpack.c.h.b16 %v90
  %v1720 = vunpack.c.l.b16 %v91
  %v1721 = vunpack.c.h.b16 %v91
  %v1722 = vunpack.c.l.b16 %v92
  %v1723 = vunpack.c.h.b16 %v92
  %v1724 = vunpack.c.l.b16 %v93
  %v1725 = vunpack.c.h.b16 %v93
  %v1726 = vunpack.c.l.b16 %v94
  %v1727 = vunpack.c.h.b16 %v94
  %v1728 = vunpack.c.l.b16 %v95
  %v1729 = vunpack.c.h.b16 %v95
  %v1730 = vunpack.c.l.b16 %v96
  %v1731 = vunpack.c.h.b16 %v96
  %v1732 = vunpack.c.l.b16 %v97
  %v1733 = vunpack.c.h.b16 %v97
  %v1734 = vunpack.c.l.b16 %v98
  %v1735 = vunpack.c.h.b16 %v98
  %v1736 = vunpack.c.l.b16 %v99
  %v1737 = vunpack.c.h.b16 %v99
  %v1738 = vunpack.c.l.b16 %v100
  %v1739 = vunpack.c.h.b16 %v100
  %v1740 = vunpack.c.l.b16 %v101
  %v1741 = vunpack.c.h.b16 %v101
  %v1742 = vunpack.c.l.b16 %v102
  %v1743 = vunpack.c.h.b16 %v102
  %v1744 = vunpack.c.l.b16 %v103
  %v1745 = vunpack.c.h.b16 %v103
  %v1746 = vunpack.c.l.b16 %v104
  %v1747 = vunpack.c.h.b16 %v104
  %v1748 = vunpack.c.l.b16 %v105
  %v1749 = vunpack.c.h.b16 %v105
  %v1750 = vunpack.c.l.b16 %v106
  %v1751 = vunpack.c.h.b16 %v106
  %v1752 = vunpack.c.l.b16 %v107
  %v1753 = vunpack.c.h.b16 %v107
  %v1754 = vunpack.c.l.b16 %v108
  %v1755 = vunpack.c.h.b16 %v108
  %v1756 = vunpack.c.l.b16 %v109
  %v1757 = vunpack.c.h.b16 %v109
  %v1758 = vunpack.c.l.b16 %v110
  %v1759 = vunpack.c.h.b16 %v110
  %v1760 = vunpack.c.l.b16 %v111
  %v1761 = vunpack.c.h.b16 %v111
  %v1762 = vunpack.c.l.b16 %v112
  %v1763 = vunpack.c.h.b16 %v112
  %v1764 = vunpack.c.l.b16 %v113
  %v1765 = vunpack.c.h.b16 %v113
  %v1766 = vunpack.c.l.b16 %v114
  %v1767 = vunpack.c.h.b16 %v114
  %v1768 = vunpack.c.l.b16 %v115
  %v1769 = vunpack.c.h.b16 %v115
  %v1770 = vunpack.c.l.b16 %v116
  %v1771 = vunpack.c.h.b16 %v116
  %v1772 = vunpack.c.l.b16 %v117
  %v1773 = vunpack.c.h.b16 %v117
  %v1774 = vunpack.c.l.b16 %v118
  %v1775 = vunpack.c.h.b16 %v118
  %v1776 = vunpack.c.l.b16 %v119
  %v1777 = vunpack.c.h.b16 %v119
  %v1778 = vunpack.c.l.b16 %v120
  %v1779 = vunpack.c.h.b16 %v120
  %v1780 = vunpack.c.l.b16 %v121
  %v1781 = vunpack.c.h.b16 %v121
  %v1782 = vunpack.c.l.b16 %v122
  %v1783 = vunpack.c.h.b16 %v122
  %v1784 = vunpack.c.l.b16 %v123
  %v1785 = vunpack.c.h.b16 %v123
  %v1786 = vunpack.c.l.b16 %v124
  %v1787 = vunpack.c.h.b16 %v124
  %v1788 = vunpack.c.l.b16 %v125
  %v1789 = vunpack.c.h.b16 %v125
  %v1790 = vunpack.c.l.b16 %v126
  %v1791 = vunpack.c.h.b16 %v126
  %v1792 = vunpack.c.l.b16 %v127
  %v1793 = vunpack.c.h.b16 %v127
  %v1794 = vunpack.c.l.b16 %v128
  %v1795 = vunpack.c.h.b16 %v128
  %v1796 = vunpack.c.l.b16 %v129
  %v1797 = vunpack.c.h.b16 %v129
  %v1798 = vunpack.c.l.b16 %v130
  %v1799 = vunpack.c.h.b16 %v130
  %v1800 = vunpack.c.l.b16 %v131
  %v1801 = vunpack.c.h.b16 %v131
  %v1802 = vunpack.c.l.b16 %v132
  %v1803 = vunpack.c.h.b16 %v132
  %v1804 = vunpack.c.l.b16 %v133
  %v1805 = vunpack.c.h.b16 %v133
  %v1806 = vunpack.c.l.b16 %v134
  %v1807 = vunpack.c.h.b16 %v134
  %v1808 = vunpack.c.l.b16 %v135
  %v1809 = vunpack.c.h.b16 %v135
  %v1810 = vunpack.c.l.b16 %v136
  %v1811 = vunpack.c.h.b16 %v136
  %v1812 = vunpack.c.l.b16 %v137
  %v1813 = vunpack.c.h.b16 %v137
  %v1814 = vunpack.c.l.b16 %v138
  %v1815 = vunpack.c.h.b16 %v138
  %v1816 = vunpack.c.l.b16 %v139
  %v1817 = vunpack.c.h.b16 %v139
  %v1818 = vunpack.c.l.b16 %v140
  %v1819 = vunpack.c.h.b16 %v140
  %v1820 = vunpack.c.l.b16 %v141
  %v1821 = vunpack.c.h.b16 %v141
  %v1822 = vunpack.c.l.b16 %v142
  %v1823 = vunpack.c.h.b16 %v142
  %v1824 = vunpack.c.l.b16 %v143
  %v1825 = vunpack.c.h.b16 %v143
  %v1826 = vunpack.c.l.b16 %v144
  %v1827 = vunpack.c.h.b16 %v144
  %v1828 = vunpack.c.l.b16 %v145
  %v1829 = vunpack.c.h.b16 %v145
  %v1830 = vunpack.c.l.b16 %v146
  %v1831 = vunpack.c.h.b16 %v146
  %v1832 = vunpack.c.l.b16 %v147
  %v1833 = vunpack.c.h.b16 %v147
  %v1834 = vunpack.c.l.b16 %v148
  %v1835 = vunpack.c.h.b16 %v148
  %v1836 = vunpack.c.l.b16 %v149
  %v1837 = vunpack.c.h.b16 %v149
  %v1838 = vunpack.c.l.b16 %v150
  %v1839 = vunpack.c.h.b16 %v150
  %v1840 = vunpack.c.l.b16 %v151
  %v1841 = vunpack.c.h.b16 %v151
  %v1842 = vunpack.c.l.b16 %v152
  %v1843 = vunpack.c.h.b16 %v152
  %v1844 = vunpack.c.l.b16 %v153
  %v1845 = vunpack.c.h.b16 %v153
  %v1846 = vunpack.c.l.b16 %v154
  %v1847 = vunpack.c.h.b16 %v154
  %v1848 = vunpack.c.l.b16 %v155
  %v1849 = vunpack.c.h.b16 %v155
  %v1850 = vunpack.c.l.b16 %v156
  %v1851 = vunpack.c.h.b16 %v156
  %v1852 = vunpack.c.l.b16 %v157
  %v1853 = vunpack.c.h.b16 %v157
  %v1854 = vunpack.c.l.b16 %v158
  %v1855 = vunpack.c.h.b16 %v158
  %v1856 = vunpack.c.l.b16 %v159
  %v1857 = vunpack.c.h.b16 %v159
  %v1858 = vunpack.c.l.b16 %v160
  %v1859 = vunpack.c.h.b16 %v160
  %v1860 = vunpack.c.l.b16 %v161
  %v1861 = vunpack.c.h.b16 %v161
  %v1862 = vunpack.c.l.b16 %v162
  %v1863 = vunpack.c.h.b16 %v162
  %v1864 = vunpack.c.l.b16 %v163
  %v1865 = vunpack.c.h.b16 %v163
  %v1866 = vunpack.c.l.b16 %v164
  %v1867 = vunpack.c.h.b16 %v164
  %v1868 = vunpack.c.l.b16 %v165
  %v1869 = vunpack.c.h.b16 %v165
  %v1870 = vunpack.c.l.b16 %v166
  %v1871 = vunpack.c.h.b16 %v166
  %v1872 = vunpack.c.l.b16 %v167
  %v1873 = vunpack.c.h.b16 %v167
  %v1874 = vunpack.c.l.b16 %v168
  %v1875 = vunpack.c.h.b16 %v168
  %v1876 = vunpack.c.l.b16 %v169
  %v1877 = vunpack.c.h.b16 %v169
  %v1878 = vunpack.c.l.b16 %v170
  %v1879 = vunpack.c.h.b16 %v170
  %v1880 = vunpack.c.l.b16 %v171
  %v1881 = vunpack.c.h.b16 %v171
  %v1882 = vunpack.c.l.b16 %v172
  %v1883 = vunpack.c.h.b16 %v172
  %v1884 = vunpack.c.l.b16 %v173
  %v1885 = vunpack.c.h.b16 %v173
  %v1886 = vunpack.c.l.b16 %v174
  %v1887 = vunpack.c.h.b16 %v174
  %v1888 = vunpack.c.l.b16 %v175
  %v1889 = vunpack.c.h.b16 %v175
  %v1890 = vunpack.c.l.b16 %v176
  %v1891 = vunpack.c.h.b16 %v176
  %v1892 = vunpack.c.l.b16 %v177
  %v1893 = vunpack.c.h.b16 %v177
  %v1894 = vunpack.c.l.b16 %v178
  %v1895 = vunpack.c.h.b16 %v178
  %v1896 = vunpack.c.l.b16 %v179
  %v1897 = vunpack.c.h.b16 %v179
  %v1898 = vunpack.c.l.b16 %v180
  %v1899 = vunpack.c.h.b16 %v180
  %v1900 = vunpack.c.l.b16 %v181
  %v1901 = vunpack.c.h.b16 %v181
  %v1902 = vunpack.c.l.b16 %v182
  %v1903 = vunpack.c.h.b16 %v182
  %v1904 = vunpack.c.l.b16 %v183
  %v1905 = vunpack.c.h.b16 %v183
  %v1906 = vunpack.c.l.b16 %v184
  %v1907 = vunpack.c.h.b16 %v184
  %v1908 = vunpack.c.l.b16 %v185
  %v1909 = vunpack.c.h.b16 %v185
  %v1910 = vunpack.c.l.b16 %v186
  %v1911 = vunpack.c.h.b16 %v186
  %v1912 = vunpack.c.l.b16 %v187
  %v1913 = vunpack.c.h.b16 %v187
  %v1914 = vunpack.c.l.b16 %v188
  %v1915 = vunpack.c.h.b16 %v188
  %v1916 = vunpack.c.l.b16 %v189
  %v1917 = vunpack.c.h.b16 %v189
  %v1918 = vunpack.c.l.b16 %v190
  %v1919 = vunpack.c.h.b16 %v190
  %v1920 = vunpack.c.l.b16 %v191
  %v1921 = vunpack.c.h.b16 %v191
  %v1922 = vunpack.c.l.b16 %v192
  %v1923 = vunpack.c.h.b16 %v192
  %v1924 = vunpack.c.l.b16 %v193
  %v1925 = vunpack.c.h.b16 %v193
  %v1926 = vunpack.c.l.b16 %v194
  %v1927 = vunpack.c.h.b16 %v194
  %v1928 = vunpack.c.l.b16 %v195
  %v1929 = vunpack.c.h.b16 %v195
  %v1930 = vunpack.c.l.b16 %v196
  %v1931 = vunpack.c.h.b16 %v196
  %v1932 = vunpack.c.l.b16 %v197
  %v1933 = vunpack.c.h.b16 %v197
  %v1934 = vunpack.c.l.b16 %v198
  %v1935 = vunpack.c.h.b16 %v198
  %v1936 = vunpack.c.l.b16 %v199
  %v1937 = vunpack.c.h.b16 %v199
  %v1938 = vunpack.c.l.b16 %v200
  %v1939 = vunpack.c.h.b16 %v200
  %v1940 = vunpack.c.l.b16 %v201
  %v1941 = vunpack.c.h.b16 %v201
  %v1942 = vunpack.c.l.b16 %v202
  %v1943 = vunpack.c.h.b16 %v202
  %v1944 = vunpack.c.l.b16 %v203
  %v1945 = vunpack.c.h.b16 %v203
  %v1946 = vunpack.c.l.b16 %v204
  %v1947 = vunpack.c.h.b16 %v204
  %v1948 = vunpack.c.l.b16 %v205
  %v1949 = vunpack.c.h.b16 %v205
  %v1950 = vunpack.c.l.b16 %v206
  %v1951 = vunpack.c.h.b16 %v206
  %v1952 = vunpack.c.l.b16 %v207
  %v1953 = vunpack.c.h.b16 %v207
  %v1954 = vunpack.c.l.b16 %v208
  %v1955 = vunpack.c.h.b16 %v208
  %v1956 = vunpack.c.l.b16 %v209
  %v1957 = vunpack.c.h.b16 %v209
  %v1958 = vunpack.c.l.b16 %v210
  %v1959 = vunpack.c.h.b16 %v210
  %v1960 = vunpack.c.l.b16 %v211
  %v1961 = vunpack.c.h.b16 %v211
  %v1962 = vunpack.c.l.b16 %v212
  %v1963 = vunpack.c.h.b16 %v212
  %v1964 = vunpack.c.l.b16 %v213
  %v1965 = vunpack.c.h.b16 %v213
  %v1966 = vunpack.c.l.b16 %v214
  %v1967 = vunpack.c.h.b16 %v214
  %v1968 = vunpack.c.l.b16 %v215
  %v1969 = vunpack.c.h.b16 %v215
  %v1970 = vunpack.c.l.b16 %v216
  %v1971 = vunpack.c.h.b16 %v216
  %v1972 = vunpack.c.l.b16 %v217
  %v1973 = vunpack.c.h.b16 %v217
  %v1974 = vunpack.c.l.b16 %v218
  %v1975 = vunpack.c.h.b16 %v218
  %v1976 = vunpack.c.l.b16 %v219
  %v1977 = vunpack.c.h.b16 %v219
  %v1978 = vunpack.c.l.b16 %v220
  %v1979 = vunpack.c.h.b16 %v220
  %v1980 = vunpack.c.l.b16 %v221
  %v1981 = vunpack.c.h.b16 %v221
  %v1982 = vunpack.c.l.b16 %v222
  %v1983 = vunpack.c.h.b16 %v222
  %v1984 = vunpack.c.l.b16 %v223
  %v1985 = vunpack.c.h.b16 %v223
  %v1986 = vunpack.c.l.b16 %v224
  %v1987 = vunpack.c.h.b16 %v224
  %v1988 = vunpack.c.l.b16 %v225
  %v1989 = vunpack.c.h.b16 %v225
  %v1990 = vunpack.c.l.b16 %v226
  %v1991 = vunpack.c.h.b16 %v226
  %v1992 = vunpack.c.l.b16 %v227
  %v1993 = vunpack.c.h.b16 %v227
  %v1994 = vunpack.c.l.b16 %v228
  %v1995 = vunpack.c.h.b16 %v228
  %v1996 = vunpack.c.l.b16 %v229
  %v1997 = vunpack.c.h.b16 %v229
  %v1998 = vunpack.c.l.b16 %v230
  %v1999 = vunpack.c.h.b16 %v230
  %v2000 = vunpack.c.l.b16 %v231
  %v2001 = vunpack.c.h.b16 %v231
  %v2002 = vunpack.c.l.b16 %v232
  %v2003 = vunpack.c.h.b16 %v232
  %v2004 = vunpack.c.l.b16 %v233
  %v2005 = vunpack.c.h.b16 %v233
  %v2006 = vunpack.c.l.b16 %v234
  %v2007 = vunpack.c.h.b16 %v234
  %v2008 = vunpack.c.l.b16 %v235
  %v2009 = vunpack.c.h.b16 %v235
  %v2010 = vunpack.c.l.b16 %v236
  %v2011 = vunpack.c.h.b16 %v236
  %v2012 = vunpack.c.l.b16 %v237
  %v2013 = vunpack.c.h.b16 %v237
  %v2014 = vunpack.c.l.b16 %v238
  %v2015 = vunpack.c.h.b16 %v238
  %v2016 = vunpack.c.l.b16 %v239
  %v2017 = vunpack.c.h.b16 %v239
  %v2018 = vunpack.c.l.b16 %v240
  %v2019 = vunpack.c.h.b16 %v240
  %v2020 = vunpack.c.l.b16 %v241
  %v2021 = vunpack.c.h.b16 %v241
  %v2022 = vunpack.c.l.b16 %v242
  %v2023 = vunpack.c.h.b16 %v242
  %v2024 = vunpack.c.l.b16 %v243
  %v2025 = vunpack.c.h.b16 %v243
  %v2026 = vunpack.c.l.b16 %v244
  %v2027 = vunpack.c.h.b16 %v244
  %v2028 = vunpack.c.l.b16 %v245
  %v2029 = vunpack.c.h.b16 %v245
  %v2030 = vunpack.c.l.b16 %v246
  %v2031 = vunpack.c.h.b16 %v246
  %v2032 = vunpack.c.l.b16 %v247
  %v2033 = vunpack.c.h.b16 %v247
  %v2034 = vunpack.c.l.b16 %v248
  %v2035 = vunpack.c.h.b16 %v248
  %v2036 = vunpack.c.l.b16 %v249
  %v2037 = vunpack.c.h.b16 %v249
  %v2038 = vunpack.c.l.b16 %v250
  %v2039 = vunpack.c.h.b16 %v250
  %v2040 = vunpack.c.l.b16 %v251
  %v2041 = vunpack.c.h.b16 %v251
  %v2042 = vunpack.c.l.b16 %v252
  %v2043 = vunpack.c.h.b16 %v252
  %v2044 = vunpack.c.l.b16 %v253
  %v2045 = vunpack.c.h.b16 %v253
  %v2046 = vunpack.c.l.b16 %v254
  %v2047 = vunpack.c.h.b16 %v254
  %v2048 = vunpack.c.l.b16 %v255
  %v2049 = vunpack.c.h.b16 %v255
  %v2050 = vunpack.c.l.b16 %v256
  %v2051 = vunpack.c.h.b16 %v256
  %v2052 = vunpack.c.l.b16 %v257
  %v2053 = vunpack.c.h.b16 %v257
  %v2054 = vunpack.c.l.b16 %v258
  %v2055 = vunpack.c.h.b16 %v258
  %v2056 = vunpack.c.l.b16 %v259
  %v2057 = vunpack.c.h.b16 %v259
  %v2058 = vunpack.c.l.b16 %v260
  %v2059 = vunpack.c.h.b16 %v260
  %v2060 = vunpack.c.l.b16 %v261
  %v2061 = vunpack.c.h.b16 %v261
  %v2062 = vunpack.c.l.b16 %v262
  %v2063 = vunpack.c.h.b16 %v262
  %v2064 = vunpack.c.l.b16 %v263
  %v2065 = vunpack.c.h.b16 %v263
  %v2066 = vunpack.c.l.b16 %v264
  %v2067 = vunpack.c.h.b16 %v264
  %v2068 = vunpack.c.l.b16 %v265
  %v2069 = vunpack.c.h.b16 %v265
  %v2070 = vunpack.c.l.b16 %v266
  %v2071 = vunpack.c.h.b16 %v266
  %v2072 = vunpack.c.l.b16 %v267
  %v2073 = vunpack.c.h.b16 %v267
  %v2074 = vunpack.c.l.b16 %v268
  %v2075 = vunpack.c.h.b16 %v268
  %v2076 = vunpack.c.l.b16 %v269
  %v2077 = vunpack.c.h.b16 %v269
  %v2078 = vunpack.c.l.b16 %v270
  %v2079 = vunpack.c.h.b16 %v270
  %v2080 = vunpack.c.l.b16 %v271
  %v2081 = vunpack.c.h.b16 %v271
  %v2082 = vunpack.c.l.b16 %v272
  %v2083 = vunpack.c.h.b16 %v272
  %v2084 = vunpack.c.l.b16 %v273
  %v2085 = vunpack.c.h.b16 %v273
  %v2086 = vunpack.c.l.b16 %v274
  %v2087 = vunpack.c.h.b16 %v274
  %v2088 = vunpack.c.l.b16 %v275
  %v2089 = vunpack.c.h.b16 %v275
  %v2090 = vunpack.c.l.b16 %v276
  %v2091 = vunpack.c.h.b16 %v276
  %v2092 = vunpack.c.l.b16 %v277
  %v2093 = vunpack.c.h.b16 %v277
  %v2094 = vunpack.c.l.b16 %v278
  %v2095 = vunpack.c.h.b16 %v278
  %v2096 = vunpack.c.l.b16 %v279
  %v2097 = vunpack.c.h.b16 %v279
  %v2098 = vunpack.c.l.b16 %v280
  %v2099 = vunpack.c.h.b16 %v280
  %v2100 = vunpack.c.l.b16 %v281
  %v2101 = vunpack.c.h.b16 %v281
  %v2102 = vunpack.c.l.b16 %v282
  %v2103 = vunpack.c.h.b16 %v282
  %v2104 = vunpack.c.l.b16 %v283
  %v2105 = vunpack.c.h.b16 %v283
  %v2106 = vunpack.c.l.b16 %v284
  %v2107 = vunpack.c.h.b16 %v284
  %v2108 = vunpack.c.l.b16 %v285
  %v2109 = vunpack.c.h.b16 %v285
  %v2110 = vunpack.c.l.b16 %v286
  %v2111 = vunpack.c.h.b16 %v286
  %v2112 = vunpack.c.l.b16 %v287
  %v2113 = vunpack.c.h.b16 %v287
  %v2114 = vunpack.c.l.b16 %v288
  %v2115 = vunpack.c.h.b16 %v288
  %v2116 = vunpack.c.l.b16 %v289
  %v2117 = vunpack.c.h.b16 %v289
  %v2118 = vunpack.c.l.b16 %v290
  %v2119 = vunpack.c.h.b16 %v290
  %v2120 = vunpack.c.l.b16 %v291
  %v2121 = vunpack.c.h.b16 %v291
  %v2122 = vunpack.c.l.b16 %v292
  %v2123 = vunpack.c.h.b16 %v292
  %v2124 = vunpack.c.l.b16 %v293
  %v2125 = vunpack.c.h.b16 %v293
  %v2126 = vunpack.c.l.b16 %v294
  %v2127 = vunpack.c.h.b16 %v294
  %v2128 = vunpack.c.l.b16 %v295
  %v2129 = vunpack.c.h.b16 %v295
  %v2130 = vunpack.c.l.b16 %v296
  %v2131 = vunpack.c.h.b16 %v296
  %v2132 = vunpack.c.l.b16 %v297
  %v2133 = vunpack.c.h.b16 %v297
  %v2134 = vunpack.c.l.b16 %v298
  %v2135 = vunpack.c.h.b16 %v298
  %v2136 = vunpack.c.l.b16 %v299
  %v2137 = vunpack.c.h.b16 %v299
  %v2138 = vunpack.c.l.b16 %v300
  %v2139 = vunpack.c.h.b16 %v300
  %v2140 = vunpack.c.l.b16 %v301
  %v2141 = vunpack.c.h.b16 %v301
  %v2142 = vunpack.c.l.b16 %v302
  %v2143 = vunpack.c.h.b16 %v302
  %v2144 = vunpack.c.l.b16 %v303
  %v2145 = vunpack.c.h.b16 %v303
  %v2146 = vunpack.c.l.b16 %v304
  %v2147 = vunpack.c.h.b16 %v304
  %v2148 = vunpack.c.l.b16 %v305
  %v2149 = vunpack.c.h.b16 %v305
  %v2150 = vunpack.c.l.b16 %v306
  %v2151 = vunpack.c.h.b16 %v306
  %v2152 = vunpack.c.l.b16 %v307
  %v2153 = vunpack.c.h.b16 %v307
  %v2154 = vunpack.c.l.b16 %v308
  %v2155 = vunpack.c.h.b16 %v308
  %v2156 = vunpack.c.l.b16 %v309
  %v2157 = vunpack.c.h.b16 %v309
  %v2158 = vunpack.c.l.b16 %v310
  %v2159 = vunpack.c.h.b16 %v310
  %v2160 = vunpack.c.l.b16 %v311
  %v2161 = vunpack.c.h.b16 %v311
  %v2162 = vunpack.c.l.b16 %v312
  %v2163 = vunpack.c.h.b16 %v312
  %v2164 = vunpack.c.l.b16 %v313
  %v2165 = vunpack.c.h.b16 %v313
  %v2166 = vunpack.c.l.b16 %v314
  %v2167 = vunpack.c.h.b16 %v314
  %v2168 = vunpack.c.l.b16 %v315
  %v2169 = vunpack.c.h.b16 %v315
  %v2170 = vunpack.c.l.b16 %v316
  %v2171 = vunpack.c.h.b16 %v316
  %v2172 = vunpack.c.l.b16 %v317
  %v2173 = vunpack.c.h.b16 %v317
  %v2174 = vunpack.c.l.b16 %v318
  %v2175 = vunpack.c.h.b16 %v318
  %v2176 = vunpack.c.l.b16 %v319
  %v2177 = vunpack.c.h.b16 %v319
  %v2178 = vunpack.c.l.b16 %v320
  %v2179 = vunpack.c.h.b16 %v320
  %v2180 = vunpack.c.l.b16 %v321
  %v2181 = vunpack.c.h.b16 %v321
  %v2182 = vunpack.c.l.b16 %v322
  %v2183 = vunpack.c.h.b16 %v322
  %v2184 = vunpack.c.l.b16 %v323
  %v2185 = vunpack.c.h.b16 %v323
  %v2186 = vunpack.c.l.b16 %v324
  %v2187 = vunpack.c.h.b16 %v324
  %v2188 = vunpack.c.l.b16 %v325
  %v2189 = vunpack.c.h.b16 %v325
  %v2190 = vunpack.c.l.b16 %v326
  %v2191 = vunpack.c.h.b16 %v326
  %v2192 = vunpack.c.l.b16 %v327
  %v2193 = vunpack.c.h.b16 %v327
  %v2194 = vunpack.c.l.b16 %v328
  %v2195 = vunpack.c.h.b16 %v328
  %v2196 = vunpack.c.l.b16 %v329
  %v2197 = vunpack.c.h.b16 %v329
  %v2198 = vunpack.c.l.b16 %v330
  %v2199 = vunpack.c.h.b16 %v330
  %v2200 = vunpack.c.l.b16 %v331
  %v2201 = vunpack.c.h.b16 %v331
  %v2202 = vunpack.c.l.b16 %v332
  %v2203 = vunpack.c.h.b16 %v332
  %v2204 = vunpack.c.l.b16 %v333
  %v2205 = vunpack.c.h.b16 %v333
  %v2206 = vunpack.c.l.b16 %v334
  %v2207 = vunpack.c.h.b16 %v334
  %v2208 = vunpack.c.l.b16 %v335
  %v2209 = vunpack.c.h.b16 %v335
  %v2210 = vunpack.c.l.b16 %v336
  %v2211 = vunpack.c.h.b16 %v336
  %v2212 = vunpack.c.l.b16 %v337
  %v2213 = vunpack.c.h.b16 %v337
  %v2214 = vunpack.c.l.b16 %v338
  %v2215 = vunpack.c.h.b16 %v338
  %v2216 = vunpack.c.l.b16 %v339
  %v2217 = vunpack.c.h.b16 %v339
  %v2218 = vunpack.c.l.b16 %v340
  %v2219 = vunpack.c.h.b16 %v340
  %v2220 = vunpack.c.l.b16 %v341
  %v2221 = vunpack.c.h.b16 %v341
  %v2222 = vunpack.c.l.b16 %v342
  %v2223 = vunpack.c.h.b16 %v342
  %v2224 = vunpack.c.l.b16 %v343
  %v2225 = vunpack.c.h.b16 %v343
  %v2226 = vunpack.c.l.b16 %v344
  %v2227 = vunpack.c.h.b16 %v344
  %v2228 = vunpack.c.l.b16 %v345
  %v2229 = vunpack.c.h.b16 %v345
  %v2230 = vunpack.c.l.b16 %v346
  %v2231 = vunpack.c.h.b16 %v346
  %v2232 = vunpack.c.l.b16 %v347
  %v2233 = vunpack.c.h.b16 %v347
  %v2234 = vunpack.c.l.b16 %v348
  %v2235 = vunpack.c.h.b16 %v348
  %v2236 = vunpack.c.l.b16 %v349
  %v2237 = vunpack.c.h.b16 %v349
  %v2238 = vunpack.c.l.b16 %v350
  %v2239 = vunpack.c.h.b16 %v350
  %v2240 = vunpack.c.l.b16 %v351
  %v2241 = vunpack.c.h.b16 %v351
  %v2242 = vunpack.c.l.b16 %v352
  %v2243 = vunpack.c.h.b16 %v352
  %v2244 = vunpack.c.l.b16 %v353
  %v2245 = vunpack.c.h.b16 %v353
  %v2246 = vunpack.c.l.b16 %v354
  %v2247 = vunpack.c.h.b16 %v354
  %v2248 = vunpack.c.l.b16 %v355
  %v2249 = vunpack.c.h.b16 %v355
  %v2250 = vunpack.c.l.b16 %v356
  %v2251 = vunpack.c.h.b16 %v356
  %v2252 = vunpack.c.l.b16 %v357
  %v2253 = vunpack.c.h.b16 %v357
  %v2254 = vunpack.c.l.b16 %v358
  %v2255 = vunpack.c.h.b16 %v358
  %v2256 = vunpack.c.l.b16 %v359
  %v2257 = vunpack.c.h.b16 %v359
  %v2258 = vunpack.c.l.b16 %v360
  %v2259 = vunpack.c.h.b16 %v360
  %v2260 = vunpack.c.l.b16 %v361
  %v2261 = vunpack.c.h.b16 %v361
  %v2262 = vunpack.c.l.b16 %v362
  %v2263 = vunpack.c.h.b16 %v362
  %v2264 = vunpack.c.l.b16 %v363
  %v2265 = vunpack.c.h.b16 %v363
  %v2266 = vunpack.c.l.b16 %v364
  %v2267 = vunpack.c.h.b16 %v364
  %v2268 = vunpack.c.l.b16 %v365
  %v2269 = vunpack.c.h.b16 %v365
  %v2270 = vunpack.c.l.b16 %v366
  %v2271 = vunpack.c.h.b16 %v366
  %v2272 = vunpack.c.l.b16 %v367
  %v2273 = vunpack.c.h.b16 %v367
  %v2274 = vunpack.c.l.b16 %v368
  %v2275 = vunpack.c.h.b16 %v368
  %v2276 = vunpack.c.l.b16 %v369
  %v2277 = vunpack.c.h.b16 %v369
  %v2278 = vunpack.c.l.b16 %v370
  %v2279 = vunpack.c.h.b16 %v370
  %v2280 = vunpack.c.l.b16 %v371
  %v2281 = vunpack.c.h.b16 %v371
  %v2282 = vunpack.c.l.b16 %v372
  %v2283 = vunpack.c.h.b16 %v372
  %v2284 = vunpack.c.l.b16 %v373
  %v2285 = vunpack.c.h.b16 %v373
  %v2286 = vunpack.c.l.b16 %v374
  %v2287 = vunpack.c.h.b16 %v374
  %v2288 = vunpack.c.l.b16 %v375
  %v2289 = vunpack.c.h.b16 %v375
  %v2290 = vunpack.c.l.b16 %v376
  %v2291 = vunpack.c.h.b16 %v376
  %v2292 = vunpack.c.l.b16 %v377
  %v2293 = vunpack.c.h.b16 %v377
  %v2294 = vunpack.c.l.b16 %v378
  %v2295 = vunpack.c.h.b16 %v378
  %v2296 = vunpack.c.l.b16 %v379
  %v2297 = vunpack.c.h.b16 %v379
  %v2298 = vunpack.c.l.b16 %v380
  %v2299 = vunpack.c.h.b16 %v380
  %v2300 = vunpack.c.l.b16 %v381
  %v2301 = vunpack.c.h.b16 %v381
  %v2302 = vunpack.c.l.b16 %v382
  %v2303 = vunpack.c.h.b16 %v382
  %v2304 = vunpack.c.l.b16 %v383
  %v2305 = vunpack.c.h.b16 %v383
  %v2306 = vunpack.c.l.b16 %v384
  %v2307 = vunpack.c.h.b16 %v384
  %v2308 = vunpack.c.l.b16 %v385
  %v2309 = vunpack.c.h.b16 %v385
  %v2310 = vunpack.c.l.b16 %v386
  %v2311 = vunpack.c.h.b16 %v386
  %v2312 = vunpack.c.l.b16 %v387
  %v2313 = vunpack.c.h.b16 %v387
  %v2314 = vunpack.c.l.b16 %v388
  %v2315 = vunpack.c.h.b16 %v388
  %v2316 = vunpack.c.l.b16 %v389
  %v2317 = vunpack.c.h.b16 %v389
  %v2318 = vunpack.c.l.b16 %v390
  %v2319 = vunpack.c.h.b16 %v390
  %v2320 = vunpack.c.l.b16 %v391
  %v2321 = vunpack.c.h.b16 %v391
  %v2322 = vunpack.c.l.b16 %v392
  %v2323 = vunpack.c.h.b16 %v392
  %v2324 = vunpack.c.l.b16 %v393
  %v2325 = vunpack.c.h.b16 %v393
  %v2326 = vunpack.c.l.b16 %v394
  %v2327 = vunpack.c.h.b16 %v394
  %v2328 = vunpack.c.l.b16 %v395
  %v2329 = vunpack.c.h.b16 %v395
  %v2330 = vunpack.c.l.b16 %v396
  %v2331 = vunpack.c.h.b16 %v396
  %v2332 = vunpack.c.l.b16 %v397
  %v2333 = vunpack.c.h.b16 %v397
  %v2334 = vunpack.c.l.b16 %v398
  %v2335 = vunpack.c.h.b16 %v398
  %v2336 = vunpack.c.l.b16 %v399
  %v2337 = vunpack.c.h.b16 %v399
  %v2338 = vunpack.c.l.b16 %v400
  %v2339 = vunpack.c.h.b16 %v400
  %v2340 = vunpack.c.l.b16 %v401
  %v2341 = vunpack.c.h.b16 %v401
  %v2342 = vunpack.c.l.b16 %v402
  %v2343 = vunpack.c.h.b16 %v402
  %v2344 = vunpack.c.l.b16 %v403
  %v2345 = vunpack.c.h.b16 %v403
  %v2346 = vunpack.c.l.b16 %v404
  %v2347 = vunpack.c.h.b16 %v404
  %v2348 = vunpack.c.l.b16 %v405
  %v2349 = vunpack.c.h.b16 %v405
  %v2350 = vunpack.c.l.b16 %v406
  %v2351 = vunpack.c.h.b16 %v406
  %v2352 = vunpack.c.l.b16 %v407
  %v2353 = vunpack.c.h.b16 %v407
  %v2354 = vunpack.c.l.b16 %v408
  %v2355 = vunpack.c.h.b16 %v408
  %v2356 = vunpack.c.l.b16 %v409
  %v2357 = vunpack.c.h.b16 %v409
  %v2358 = vunpack.c.l.b16 %v410
  %v2359 = vunpack.c.h.b16 %v410
  %v2360 = vunpack.c.l.b16 %v411
  %v2361 = vunpack.c.h.b16 %v411
  %v2362 = vunpack.c.l.b16 %v412
  %v2363 = vunpack.c.h.b16 %v412
  %v2364 = vunpack.c.l.b16 %v413
  %v2365 = vunpack.c.h.b16 %v413
  %v2366 = vunpack.c.l.b16 %v414
  %v2367 = vunpack.c.h.b16 %v414
  %v2368 = vunpack.c.l.b16 %v415
  %v2369 = vunpack.c.h.b16 %v415
  %v2370 = vunpack.c.l.b16 %v416
  %v2371 = vunpack.c.h.b16 %v416
  %v2372 = vunpack.c.l.b16 %v417
  %v2373 = vunpack.c.h.b16 %v417
  %v2374 = vunpack.c.l.b16 %v418
  %v2375 = vunpack.c.h.b16 %v418
  %v2376 = vunpack.c.l.b16 %v419
  %v2377 = vunpack.c.h.b16 %v419
  %v2378 = vunpack.c.l.b16 %v420
  %v2379 = vunpack.c.h.b16 %v420
  %v2380 = vunpack.c.l.b16 %v421
  %v2381 = vunpack.c.h.b16 %v421
  %v2382 = vunpack.c.l.b16 %v422
  %v2383 = vunpack.c.h.b16 %v422
  %v2384 = vunpack.c.l.b16 %v423
  %v2385 = vunpack.c.h.b16 %v423
  %v2386 = vunpack.c.l.b16 %v424
  %v2387 = vunpack.c.h.b16 %v424
  %v2388 = vunpack.c.l.b16 %v425
  %v2389 = vunpack.c.h.b16 %v425
  %v2390 = vunpack.c.l.b16 %v426
  %v2391 = vunpack.c.h.b16 %v426
  %v2392 = vunpack.c.l.b16 %v427
  %v2393 = vunpack.c.h.b16 %v427
  %v2394 = vunpack.c.l.b16 %v428
  %v2395 = vunpack.c.h.b16 %v428
  %v2396 = vunpack.c.l.b16 %v429
  %v2397 = vunpack.c.h.b16 %v429
  %v2398 = vunpack.c.l.b16 %v430
  %v2399 = vunpack.c.h.b16 %v430
  %v2400 = vunpack.c.l.b16 %v431
  %v2401 = vunpack.c.h.b16 %v431
  %v2402 = vunpack.c.l.b16 %v432
  %v2403 = vunpack.c.h.b16 %v432
  %v2404 = vunpack.c.l.b16 %v433
  %v2405 = vunpack.c.h.b16 %v433
  %v2406 = vunpack.c.l.b16 %v434
  %v2407 = vunpack.c.h.b16 %v434
  %v2408 = vunpack.c.l.b16 %v435
  %v2409 = vunpack.c.h.b16 %v435
  %v2410 = vunpack.c.l.b16 %v436
  %v2411 = vunpack.c.h.b16 %v436
  %v2412 = vunpack.c.l.b16 %v437
  %v2413 = vunpack.c.h.b16 %v437
  %v2414 = vunpack.c.l.b16 %v438
  %v2415 = vunpack.c.h.b16 %v438
  %v2416 = vunpack.c.l.b16 %v439
  %v2417 = vunpack.c.h.b16 %v439
  %v2418 = vunpack.c.l.b16 %v440
  %v2419 = vunpack.c.h.b16 %v440
  %v2420 = vunpack.c.l.b16 %v441
  %v2421 = vunpack.c.h.b16 %v441
  %v2422 = vunpack.c.l.b16 %v442
  %v2423 = vunpack.c.h.b16 %v442
  %v2424 = vunpack.c.l.b16 %v443
  %v2425 = vunpack.c.h.b16 %v443
  %v2426 = vunpack.c.l.b16 %v444
  %v2427 = vunpack.c.h.b16 %v444
  %v2428 = vunpack.c.l.b16 %v445
  %v2429 = vunpack.c.h.b16 %v445
  %v2430 = vunpack.c.l.b16 %v446
  %v2431 = vunpack.c.h.b16 %v446
  %v2432 = vunpack.c.l.b16 %v447
  %v2433 = vunpack.c.h.b16 %v447
  %v2434 = vunpack.c.l.b16 %v448
  %v2435 = vunpack.c.h.b16 %v448
  %v2436 = vunpack.c.l.b16 %v449
  %v2437 = vunpack.c.h.b16 %v449
  %v2438 = vunpack.c.l.b16 %v450
  %v2439 = vunpack.c.h.b16 %v450
  %v2440 = vunpack.c.l.b16 %v451
  %v2441 = vunpack.c.h.b16 %v451
  %v2442 = vunpack.c.l.b16 %v452
  %v2443 = vunpack.c.h.b16 %v452
  %v2444 = vunpack.c.l.b16 %v453
  %v2445 = vunpack.c.h.b16 %v453
  %v2446 = vunpack.c.l.b16 %v454
  %v2447 = vunpack.c.h.b16 %v454
  %v2448 = vunpack.c.l.b16 %v455
  %v2449 = vunpack.c.h.b16 %v455
  %v2450 = vunpack.c.l.b16 %v456
  %v2451 = vunpack.c.h.b16 %v456
  %v2452 = vunpack.c.l.b16 %v457
  %v2453 = vunpack.c.h.b16 %v457
  %v2454 = vunpack.c.l.b16 %v458
  %v2455 = vunpack.c.h.b16 %v458
  %v2456 = vunpack.c.l.b16 %v459
  %v2457 = vunpack.c.h.b16 %v459
  %v2458 = vunpack.c.l.b16 %v460
  %v2459 = vunpack.c.h.b16 %v460
  %v2460 = vunpack.c.l.b16 %v461
  %v2461 = vunpack.c.h.b16 %v461
  %v2462 = vunpack.c.l.b16 %v462
  %v2463 = vunpack.c.h.b16 %v462
  %v2464 = vunpack.c.l.b16 %v463
  %v2465 = vunpack.c.h.b16 %v463
  %v2466 = vunpack.c.l.b16 %v464
  %v2467 = vunpack.c.h.b16 %v464
  %v2468 = vunpack.c.l.b16 %v465
  %v2469 = vunpack.c.h.b16 %v465
  %v2470 = vunpack.c.l.b16 %v466
  %v2471 = vunpack.c.h.b16 %v466
  %v2472 = vunpack.c.l.b16 %v467
  %v2473 = vunpack.c.h.b16 %v467
  %v2474 = vunpack.c.l.b16 %v468
  %v2475 = vunpack.c.h.b16 %v468
  %v2476 = vunpack.c.l.b16 %v469
  %v2477 = vunpack.c.h.b16 %v469
  %v2478 = vunpack.c.l.b16 %v470
  %v2479 = vunpack.c.h.b16 %v470
  %v2480 = vunpack.c.l.b16 %v471
  %v2481 = vunpack.c.h.b16 %v471
  %v2482 = vunpack.c.l.b16 %v472
  %v2483 = vunpack.c.h.b16 %v472
  %v2484 = vunpack.c.l.b16 %v473
  %v2485 = vunpack.c.h.b16 %v473
  %v2486 = vunpack.c.l.b16 %v474
  %v2487 = vunpack.c.h.b16 %v474
  %v2488 = vunpack.c.l.b16 %v475
  %v2489 = vunpack.c.h.b16 %v475
  %v2490 = vunpack.c.l.b16 %v476
  %v2491 = vunpack.c.h.b16 %v476
  %v2492 = vunpack.c.l.b16 %v477
  %v2493 = vunpack.c.h.b16 %v477
  %v2494 = vunpack.c.l.b16 %v478
  %v2495 = vunpack.c.h.b16 %v478
  %v2496 = vunpack.c.l.b16 %v479
  %v2497 = vunpack.c.h.b16 %v479
  %v2498 = vunpack.c.l.b16 %v480
  %v2499 = vunpack.c.h.b16 %v480
  %v2500 = vunpack.c.l.b16 %v481
  %v2501 = vunpack.c.h.b16 %v481
  %v2502 = vunpack.c.l.b16 %v482
  %v2503 = vunpack.c.h.b16 %v482
  %v2504 = vunpack.c.l.b16 %v483
  %v2505 = vunpack.c.h.b16 %v483
  %v2506 = vunpack.c.l.b16 %v484
  %v2507 = vunpack.c.h.b16 %v484
  %v2508 = vunpack.c.l.b16 %v485
  %v2509 = vunpack.c.h.b16 %v485
  %v2510 = vunpack.c.l.b16 %v486
  %v2511 = vunpack.c.h.b16 %v486
  %v2512 = vunpack.c.l.b16 %v487
  %v2513 = vunpack.c.h.b16 %v487
  %v2514 = vunpack.c.l.b16 %v488
  %v2515 = vunpack.c.h.b16 %v488
  %v2516 = vunpack.c.l.b16 %v489
  %v2517 = vunpack.c.h.b16 %v489
  %v2518 = vunpack.c.l.b16 %v490
  %v2519 = vunpack.c.h.b16 %v490
  %v2520 = vunpack.c.l.b16 %v491
  %v2521 = vunpack.c.h.b16 %v491
  %v2522 = vunpack.c.l.b16 %v492
  %v2523 = vunpack.c.h.b16 %v492
  %v2524 = vunpack.c.l.b16 %v493
  %v2525 = vunpack.c.h.b16 %v493
  %v2526 = vunpack.c.l.b16 %v494
  %v2527 = vunpack.c.h.b16 %v494
  %v2528 = vunpack.c.l.b16 %v495
  %v2529 = vunpack.c.h.b16 %v495
  %v2530 = vunpack.c.l.b16 %v496
  %v2531 = vunpack.c.h.b16 %v496
  %v2532 = vunpack.c.l.b16 %v497
  %v2533 = vunpack.c.h.b16 %v497
  %v2534 = vunpack.c.l.b16 %v498
  %v2535 = vunpack.c.h.b16 %v498
  %v2536 = vunpack.c.l.b16 %v499
  %v2537 = vunpack.c.h.b16 %v499
  %v2538 = vunpack.c.l.b16 %v500
  %v2539 = vunpack.c.h.b16 %v500
  %v2540 = vunpack.c.l.b16 %v501
  %v2541 = vunpack.c.h.b16 %v501
  %v2542 = vunpack.c.l.b16 %v502
  %v2543 = vunpack.c.h.b16 %v502
  %v2544 = vunpack.c.l.b16 %v503
  %v2545 = vunpack.c.h.b16 %v503
  %v2546 = vunpack.c.l.b16 %v504
  %v2547 = vunpack.c.h.b16 %v504
  %v2548 = vunpack.c.l.b16 %v505
  %v2549 = vunpack.c.h.b16 %v505
  %v2550 = vunpack.c.l.b16 %v506
  %v2551 = vunpack.c.h.b16 %v506
  %v2552 = vunpack.c.l.b16 %v507
  %v2553 = vunpack.c.h.b16 %v507
  %v2554 = vunpack.c.l.b16 %v508
  %v2555 = vunpack.c.h.b16 %v508
  %v2556 = vunpack.c.l.b16 %v509
  %v2557 = vunpack.c.h.b16 %v509
  %v2558 = vunpack.c.l.b16 %v510
  %v2559 = vunpack.c.h.b16 %v510
  %v2560 = vunpack.c.l.b16 %v511
  %v2561 = vunpack.c.h.b16 %v511
  %v2562 = vunpack.c.l.b16 %v512
  %v2563 = vunpack.c.h.b16 %v512
  %v2564 = vunpack.c.l.b16 %v513
  %v2565 = vunpack.c.h.b16 %v513
  %v2566 = vunpack.c.l.b16 %v514
  %v2567 = vunpack.c.h.b16 %v514
  %v2568 = vunpack.c.l.b16 %v515
  %v2569 = vunpack.c.h.b16 %v515
  %v2570 = vunpack.c.l.b16 %v516
  %v2571 = vunpack.c.h.b16 %v516
  %v2572 = vunpack.c.l.b16 %v517
  %v2573 = vunpack.c.h.b16 %v517
  %v2574 = vunpack.c.l.b16 %v518
  %v2575 = vunpack.c.h.b16 %v518
  %v2576 = vunpack.c.l.b16 %v519
  %v2577 = vunpack.c.h.b16 %v519
  %v2578 = vunpack.c.l.b16 %v520
  %v2579 = vunpack.c.h.b16 %v520
  %v2580 = vunpack.c.l.b16 %v521
  %v2581 = vunpack.c.h.b16 %v521
  %v2582 = vunpack.c.l.b16 %v522
  %v2583 = vunpack.c.h.b16 %v522
  %v2584 = vunpack.c.l.b16 %v523
  %v2585 = vunpack.c.h.b16 %v523
  %v2586 = vunpack.c.l.b16 %v524
  %v2587 = vunpack.c.h.b16 %v524
  %v2588 = vunpack.c.l.b16 %v525
  %v2589 = vunpack.c.h.b16 %v525
  %v2590 = vunpack.c.l.b16 %v526
  %v2591 = vunpack.c.h.b16 %v526
  %v2592 = vunpack.c.l.b16 %v527
  %v2593 = vunpack.c.h.b16 %v527
  %v2594 = vunpack.c.l.b16 %v528
  %v2595 = vunpack.c.h.b16 %v528
  %v2596 = vunpack.c.l.b16 %v529
  %v2597 = vunpack.c.h.b16 %v529
  %v2598 = vunpack.c.l.b16 %v530
  %v2599 = vunpack.c.h.b16 %v530
  %v2600 = vunpack.c.l.b16 %v531
  %v2601 = vunpack.c.h.b16 %v531
  %v2602 = vunpack.c.l.b16 %v532
  %v2603 = vunpack.c.h.b16 %v532
  %v2604 = vunpack.c.l.b16 %v533
  %v2605 = vunpack.c.h.b16 %v533
  %v2606 = vunpack.c.l.b16 %v534
  %v2607 = vunpack.c.h.b16 %v534
  %v2608 = vunpack.c.l.b16 %v535
  %v2609 = vunpack.c.h.b16 %v535
  %v2610 = vunpack.c.l.b16 %v536
  %v2611 = vunpack.c.h.b16 %v536
  %v2612 = vunpack.c.l.b16 %v537
  %v2613 = vunpack.c.h.b16 %v537
  %v2614 = vunpack.c.l.b16 %v538
  %v2615 = vunpack.c.h.b16 %v538
  %v2616 = vunpack.c.l.b16 %v539
  %v2617 = vunpack.c.h.b16 %v539
  %v2618 = vunpack.c.l.b16 %v540
  %v2619 = vunpack.c.h.b16 %v540
  %v2620 = vunpack.c.l.b16 %v541
  %v2621 = vunpack.c.h.b16 %v541
  %v2622 = vunpack.c.l.b16 %v542
  %v2623 = vunpack.c.h.b16 %v542
  %v2624 = vunpack.c.l.b16 %v543
  %v2625 = vunpack.c.h.b16 %v543
  %v2626 = vunpack.c.l.b16 %v544
  %v2627 = vunpack.c.h.b16 %v544
  %v2628 = vunpack.c.l.b16 %v545
  %v2629 = vunpack.c.h.b16 %v545
  %v2630 = vunpack.c.l.b16 %v546
  %v2631 = vunpack.c.h.b16 %v546
  %v2632 = vunpack.c.l.b16 %v547
  %v2633 = vunpack.c.h.b16 %v547
  %v2634 = vpack.c.b16 %v1618, %v1610
  %v2635 = vpack.c.b16 %v1619, %v1611
  %v2636 = vpack.c.b16 %v1620, %v1612
  %v2637 = vpack.c.b16 %v1621, %v1613
  %v2638 = vpack.c.b16 %v1622, %v1614
  %v2639 = vpack.c.b16 %v1623, %v1615
  %v2640 = vpack.c.b16 %v1624, %v1616
  %v2641 = vpack.c.b16 %v1625, %v1617
  %v2642 = vpack.c.b16 %v1634, %v1626
  %v2643 = vpack.c.b16 %v1635, %v1627
  %v2644 = vpack.c.b16 %v1636, %v1628
  %v2645 = vpack.c.b16 %v1637, %v1629
  %v2646 = vpack.c.b16 %v1638, %v1630
  %v2647 = vpack.c.b16 %v1639, %v1631
  %v2648 = vpack.c.b16 %v1640, %v1632
  %v2649 = vpack.c.b16 %v1641, %v1633
  %v2650 = vpack.c.b16 %v1650, %v1642
  %v2651 = vpack.c.b16 %v1651, %v1643
  %v2652 = vpack.c.b16 %v1652, %v1644
  %v2653 = vpack.c.b16 %v1653, %v1645
  %v2654 = vpack.c.b16 %v1654, %v1646
  %v2655 = vpack.c.b16 %v1655, %v1647
  %v2656 = vpack.c.b16 %v1656, %v1648
  %v2657 = vpack.c.b16 %v1657, %v1649
  %v2658 = vpack.c.b16 %v1666, %v1658
  %v2659 = vpack.c.b16 %v1667, %v1659
  %v2660 = vpack.c.b16 %v1668, %v1660
  %v2661 = vpack.c.b16 %v1669, %v1661
  %v2662 = vpack.c.b16 %v1670, %v1662
  %v2663 = vpack.c.b16 %v1671, %v1663
  %v2664 = vpack.c.b16 %v1672, %v1664
  %v2665 = vpack.c.b16 %v1673, %v1665
  %v2666 = vpack.c.b16 %v1682, %v1674
  %v2667 = vpack.c.b16 %v1683, %v1675
  %v2668 = vpack.c.b16 %v1684, %v1676
  %v2669 = vpack.c.b16 %v1685, %v1677
  %v2670 = vpack.c.b16 %v1686, %v1678
  %v2671 = vpack.c.b16 %v1687, %v1679
  %v2672 = vpack.c.b16 %v1688, %v1680
  %v2673 = vpack.c.b16 %v1689, %v1681
  %v2674 = vpack.c.b16 %v1698, %v1690
  %v2675 = vpack.c.b16 %v1699, %v1691
  %v2676 = vpack.c.b16 %v1700, %v1692
  %v2677 = vpack.c.b16 %v1701, %v1693
  %v2678 = vpack.c.b16 %v1702, %v1694
  %v2679 = vpack.c.b16 %v1703, %v1695
  %v2680 = vpack.c.b16 %v1704, %v1696
  %v2681 = vpack.c.b16 %v1705, %v1697
  %v2682 = vpack.c.b16 %v1714, %v1706
  %v2683 = vpack.c.b16 %v1715, %v1707
  %v2684 = vpack.c.b16 %v1716, %v1708
  %v2685 = vpack.c.b16 %v1717, %v1709
  %v2686 = vpack.c.b16 %v1718, %v1710
  %v2687 = vpack.c.b16 %v1719, %v1711
  %v2688 = vpack.c.b16 %v1720, %v1712
  %v2689 = vpack.c.b16 %v1721, %v1713
  %v2690 = vpack.c.b16 %v1730, %v1722
  %v2691 = vpack.c.b16 %v1731, %v1723
  %v2692 = vpack.c.b16 %v1732, %v1724
  %v2693 = vpack.c.b16 %v1733, %v1725
  %v2694 = vpack.c.b16 %v1734, %v1726
  %v2695 = vpack.c.b16 %v1735, %v1727
  %v2696 = vpack.c.b16 %v1736, %v1728
  %v2697 = vpack.c.b16 %v1737, %v1729
  %v2698 = vpack.c.b16 %v1746, %v1738
  %v2699 = vpack.c.b16 %v1747, %v1739
  %v2700 = vpack.c.b16 %v1748, %v1740
  %v2701 = vpack.c.b16 %v1749, %v1741
  %v2702 = vpack.c.b16 %v1750, %v1742
  %v2703 = vpack.c.b16 %v1751, %v1743
  %v2704 = vpack.c.b16 %v1752, %v1744
  %v2705 = vpack.c.b16 %v1753, %v1745
  %v2706 = vpack.c.b16 %v1762, %v1754
  %v2707 = vpack.c.b16 %v1763, %v1755
  %v2708 = vpack.c.b16 %v1764, %v1756
  %v2709 = vpack.c.b16 %v1765, %v1757
  %v2710 = vpack.c.b16 %v1766, %v1758
  %v2711 = vpack.c.b16 %v1767, %v1759
  %v2712 = vpack.c.b16 %v1768, %v1760
  %v2713 = vpack.c.b16 %v1769, %v1761
  %v2714 = vpack.c.b16 %v1778, %v1770
  %v2715 = vpack.c.b16 %v1779, %v1771
  %v2716 = vpack.c.b16 %v1780, %v1772
  %v2717 = vpack.c.b16 %v1781, %v1773
  %v2718 = vpack.c.b16 %v1782, %v1774
  %v2719 = vpack.c.b16 %v1783, %v1775
  %v2720 = vpack.c.b16 %v1784, %v1776
  %v2721 = vpack.c.b16 %v1785, %v1777
  %v2722 = vpack.c.b16 %v1794, %v1786
  %v2723 = vpack.c.b16 %v1795, %v1787
  %v2724 = vpack.c.b16 %v1796, %v1788
  %v2725 = vpack.c.b16 %v1797, %v1789
  %v2726 = vpack.c.b16 %v1798, %v1790
  %v2727 = vpack.c.b16 %v1799, %v1791
  %v2728 = vpack.c.b16 %v1800, %v1792
  %v2729 = vpack.c.b16 %v1801, %v1793
  %v2730 = vpack.c.b16 %v1810, %v1802
  %v2731 = vpack.c.b16 %v1811, %v1803
  %v2732 = vpack.c.b16 %v1812, %v1804
  %v2733 = vpack.c.b16 %v1813, %v1805
  %v2734 = vpack.c.b16 %v1814, %v1806
  %v2735 = vpack.c.b16 %v1815, %v1807
  %v2736 = vpack.c.b16 %v1816, %v1808
  %v2737 = vpack.c.b16 %v1817, %v1809
  %v2738 = vpack.c.b16 %v1826, %v1818
  %v2739 = vpack.c.b16 %v1827, %v1819
  %v2740 = vpack.c.b16 %v1828, %v1820
  %v2741 = vpack.c.b16 %v1829, %v1821
  %v2742 = vpack.c.b16 %v1830, %v1822
  %v2743 = vpack.c.b16 %v1831, %v1823
  %v2744 = vpack.c.b16 %v1832, %v1824
  %v2745 = vpack.c.b16 %v1833, %v1825
  %v2746 = vpack.c.b16 %v1842, %v1834
  %v2747 = vpack.c.b16 %v1843, %v1835
  %v2748 = vpack.c.b16 %v1844, %v1836
  %v2749 = vpack.c.b16 %v1845, %v1837
  %v2750 = vpack.c.b16 %v1846, %v1838
  %v2751 = vpack.c.b16 %v1847, %v1839
  %v2752 = vpack.c.b16 %v1848, %v1840
  %v2753 = vpack.c.b16 %v1849, %v1841
  %v2754 = vpack.c.b16 %v1858, %v1850
  %v2755 = vpack.c.b16 %v1859, %v1851
  %v2756 = vpack.c.b16 %v1860, %v1852
  %v2757 = vpack.c.b16 %v1861, %v1853
  %v2758 = vpack.c.b16 %v1862, %v1854
  %v2759 = vpack.c.b16 %v1863, %v1855
  %v2760 = vpack.c.b16 %v1864, %v1856
  %v2761 = vpack.c.b16 %v1865, %v1857
  %v2762 = vpack.c.b16 %v1874, %v1866
  %v2763 = vpack.c.b16 %v1875, %v1867
  %v2764 = vpack.c.b16 %v1876, %v1868
  %v2765 = vpack.c.b16 %v1877, %v1869
  %v2766 = vpack.c.b16 %v1878, %v1870
  %v2767 = vpack.c.b16 %v1879, %v1871
  %v2768 = vpack.c.b16 %v1880, %v1872
  %v2769 = vpack.c.b16 %v1881, %v1873
  %v2770 = vpack.c.b16 %v1890, %v1882
  %v2771 = vpack.c.b16 %v1891, %v1883
  %v2772 = vpack.c.b16 %v1892, %v1884
  %v2773 = vpack.c.b16 %v1893, %v1885
  %v2774 = vpack.c.b16 %v1894, %v1886
  %v2775 = vpack.c.b16 %v1895, %v1887
  %v2776 = vpack.c.b16 %v1896, %v1888
  %v2777 = vpack.c.b16 %v1897, %v1889
  %v2778 = vpack.c.b16 %v1906, %v1898
  %v2779 = vpack.c.b16 %v1907, %v1899
  %v2780 = vpack.c.b16 %v1908, %v1900
  %v2781 = vpack.c.b16 %v1909, %v1901
  %v2782 = vpack.c.b16 %v1910, %v1902
  %v2783 = vpack.c.b16 %v1911, %v1903
  %v2784 = vpack.c.b16 %v1912, %v1904
  %v2785 = vpack.c.b16 %v1913, %v1905
  %v2786 = vpack.c.b16 %v1922, %v1914
  %v2787 = vpack.c.b16 %v1923, %v1915
  %v2788 = vpack.c.b16 %v1924, %v1916
  %v2789 = vpack.c.b16 %v1925, %v1917
  %v2790 = vpack.c.b16 %v1926, %v1918
  %v2791 = vpack.c.b16 %v1927, %v1919
  %v2792 = vpack.c.b16 %v1928, %v1920
  %v2793 = vpack.c.b16 %v1929, %v1921
  %v2794 = vpack.c.b16 %v1938, %v1930
  %v2795 = vpack.c.b16 %v1939, %v1931
  %v2796 = vpack.c.b16 %v1940, %v1932
  %v2797 = vpack.c.b16 %v1941, %v1933
  %v2798 = vpack.c.b16 %v1942, %v1934
  %v2799 = vpack.c.b16 %v1943, %v1935
  %v2800 = vpack.c.b16 %v1944, %v1936
  %v2801 = vpack.c.b16 %v1945, %v1937
  %v2802 = vpack.c.b16 %v1954, %v1946
  %v2803 = vpack.c.b16 %v1955, %v1947
  %v2804 = vpack.c.b16 %v1956, %v1948
  %v2805 = vpack.c.b16 %v1957, %v1949
  %v2806 = vpack.c.b16 %v1958, %v1950
  %v2807 = vpack.c.b16 %v1959, %v1951
  %v2808 = vpack.c.b16 %v1960, %v1952
  %v2809 = vpack.c.b16 %v1961, %v1953
  %v2810 = vpack.c.b16 %v1970, %v1962
  %v2811 = vpack.c.b16 %v1971, %v1963
  %v2812 = vpack.c.b16 %v1972, %v1964
  %v2813 = vpack.c.b16 %v1973, %v1965
  %v2814 = vpack.c.b16 %v1974, %v1966
  %v2815 = vpack.c.b16 %v1975, %v1967
  %v2816 = vpack.c.b16 %v1976, %v1968
  %v2817 = vpack.c.b16 %v1977, %v1969
  %v2818 = vpack.c.b16 %v1986, %v1978
  %v2819 = vpack.c.b16 %v1987, %v1979
  %v2820 = vpack.c.b16 %v1988, %v1980
  %v2821 = vpack.c.b16 %v1989, %v1981
  %v2822 = vpack.c.b16 %v1990, %v1982
  %v2823 = vpack.c.b16 %v1991, %v1983
  %v2824 = vpack.c.b16 %v1992, %v1984
  %v2825 = vpack.c.b16 %v1993, %v1985
  %v2826 = vpack.c.b16 %v2002, %v1994
  %v2827 = vpack.c.b16 %v2003, %v1995
  %v2828 = vpack.c.b16 %v2004, %v1996
  %v2829 = vpack.c.b16 %v2005, %v1997
  %v2830 = vpack.c.b16 %v2006, %v1998
  %v2831 = vpack.c.b16 %v2007, %v1999
  %v2832 = vpack.c.b16 %v2008, %v2000
  %v2833 = vpack.c.b16 %v2009, %v2001
  %v2834 = vpack.c.b16 %v2018, %v2010
  %v2835 = vpack.c.b16 %v2019, %v2011
  %v2836 = vpack.c.b16 %v2020, %v2012
  %v2837 = vpack.c.b16 %v2021, %v2013
  %v2838 = vpack.c.b16 %v2022, %v2014
  %v2839 = vpack.c.b16 %v2023, %v2015
  %v2840 = vpack.c.b16 %v2024, %v2016
  %v2841 = vpack.c.b16 %v2025, %v2017
  %v2842 = vpack.c.b16 %v2034, %v2026
  %v2843 = vpack.c.b16 %v2035, %v2027
  %v2844 = vpack.c.b16 %v2036, %v2028
  %v2845 = vpack.c.b16 %v2037, %v2029
  %v2846 = vpack.c.b16 %v2038, %v2030
  %v2847 = vpack.c.b16 %v2039, %v2031
  %v2848 = vpack.c.b16 %v2040, %v2032
  %v2849 = vpack.c.b16 %v2041, %v2033
  %v2850 = vpack.c.b16 %v2050, %v2042
  %v2851 = vpack.c.b16 %v2051, %v2043
  %v2852 = vpack.c.b16 %v2052, %v2044
  %v2853 = vpack.c.b16 %v2053, %v2045
  %v2854 = vpack.c.b16 %v2054, %v2046
  %v2855 = vpack.c.b16 %v2055, %v2047
  %v2856 = vpack.c.b16 %v2056, %v2048
  %v2857 = vpack.c.b16 %v2057, %v2049
  %v2858 = vpack.c.b16 %v2066, %v2058
  %v2859 = vpack.c.b16 %v2067, %v2059
  %v2860 = vpack.c.b16 %v2068, %v2060
  %v2861 = vpack.c.b16 %v2069, %v2061
  %v2862 = vpack.c.b16 %v2070, %v2062
  %v2863 = vpack.c.b16 %v2071, %v2063
  %v2864 = vpack.c.b16 %v2072, %v2064
  %v2865 = vpack.c.b16 %v2073, %v2065
  %v2866 = vpack.c.b16 %v2082, %v2074
  %v2867 = vpack.c.b16 %v2083, %v2075
  %v2868 = vpack.c.b16 %v2084, %v2076
  %v2869 = vpack.c.b16 %v2085, %v2077
  %v2870 = vpack.c.b16 %v2086, %v2078
  %v2871 = vpack.c.b16 %v2087, %v2079
  %v2872 = vpack.c.b16 %v2088, %v2080
  %v2873 = vpack.c.b16 %v2089, %v2081
  %v2874 = vpack.c.b16 %v2098, %v2090
  %v2875 = vpack.c.b16 %v2099, %v2091
  %v2876 = vpack.c.b16 %v2100, %v2092
  %v2877 = vpack.c.b16 %v2101, %v2093
  %v2878 = vpack.c.b16 %v2102, %v2094
  %v2879 = vpack.c.b16 %v2103, %v2095
  %v2880 = vpack.c.b16 %v2104, %v2096
  %v2881 = vpack.c.b16 %v2105, %v2097
  %v2882 = vpack.c.b16 %v2114, %v2106
  %v2883 = vpack.c.b16 %v2115, %v2107
  %v2884 = vpack.c.b16 %v2116, %v2108
  %v2885 = vpack.c.b16 %v2117, %v2109
  %v2886 = vpack.c.b16 %v2118, %v2110
  %v2887 = vpack.c.b16 %v2119, %v2111
  %v2888 = vpack.c.b16 %v2120, %v2112
  %v2889 = vpack.c.b16 %v2121, %v2113
  %v2890 = vpack.c.b16 %v2130, %v2122
  %v2891 = vpack.c.b16 %v2131, %v2123
  %v2892 = vpack.c.b16 %v2132, %v2124
  %v2893 = vpack.c.b16 %v2133, %v2125
  %v2894 = vpack.c.b16 %v2134, %v2126
  %v2895 = vpack.c.b16 %v2135, %v2127
  %v2896 = vpack.c.b16 %v2136, %v2128
  %v2897 = vpack.c.b16 %v2137, %v2129
  %v2898 = vpack.c.b16 %v2146, %v2138
  %v2899 = vpack.c.b16 %v2147, %v2139
  %v2900 = vpack.c.b16 %v2148, %v2140
  %v2901 = vpack.c.b16 %v2149, %v2141
  %v2902 = vpack.c.b16 %v2150, %v2142
  %v2903 = vpack.c.b16 %v2151, %v2143
  %v2904 = vpack.c.b16 %v2152, %v2144
  %v2905 = vpack.c.b16 %v2153, %v2145
  %v2906 = vpack.c.b16 %v2162, %v2154
  %v2907 = vpack.c.b16 %v2163, %v2155
  %v2908 = vpack.c.b16 %v2164, %v2156
  %v2909 = vpack.c.b16 %v2165, %v2157
  %v2910 = vpack.c.b16 %v2166, %v2158
  %v2911 = vpack.c.b16 %v2167, %v2159
  %v2912 = vpack.c.b16 %v2168, %v2160
  %v2913 = vpack.c.b16 %v2169, %v2161
  %v2914 = vpack.c.b16 %v2178, %v2170
  %v2915 = vpack.c.b16 %v2179, %v2171
  %v2916 = vpack.c.b16 %v2180, %v2172
  %v2917 = vpack.c.b16 %v2181, %v2173
  %v2918 = vpack.c.b16 %v2182, %v2174
  %v2919 = vpack.c.b16 %v2183, %v2175
  %v2920 = vpack.c.b16 %v2184, %v2176
  %v2921 = vpack.c.b16 %v2185, %v2177
  %v2922 = vpack.c.b16 %v2194, %v2186
  %v2923 = vpack.c.b16 %v2195, %v2187
  %v2924 = vpack.c.b16 %v2196, %v2188
  %v2925 = vpack.c.b16 %v2197, %v2189
  %v2926 = vpack.c.b16 %v2198, %v2190
  %v2927 = vpack.c.b16 %v2199, %v2191
  %v2928 = vpack.c.b16 %v2200, %v2192
  %v2929 = vpack.c.b16 %v2201, %v2193
  %v2930 = vpack.c.b16 %v2210, %v2202
  %v2931 = vpack.c.b16 %v2211, %v2203
  %v2932 = vpack.c.b16 %v2212, %v2204
  %v2933 = vpack.c.b16 %v2213, %v2205
  %v2934 = vpack.c.b16 %v2214, %v2206
  %v2935 = vpack.c.b16 %v2215, %v2207
  %v2936 = vpack.c.b16 %v2216, %v2208
  %v2937 = vpack.c.b16 %v2217, %v2209
  %v2938 = vpack.c.b16 %v2226, %v2218
  %v2939 = vpack.c.b16 %v2227, %v2219
  %v2940 = vpack.c.b16 %v2228, %v2220
  %v2941 = vpack.c.b16 %v2229, %v2221
  %v2942 = vpack.c.b16 %v2230, %v2222
  %v2943 = vpack.c.b16 %v2231, %v2223
  %v2944 = vpack.c.b16 %v2232, %v2224
  %v2945 = vpack.c.b16 %v2233, %v2225
  %v2946 = vpack.c.b16 %v2242, %v2234
  %v2947 = vpack.c.b16 %v2243, %v2235
  %v2948 = vpack.c.b16 %v2244, %v2236
  %v2949 = vpack.c.b16 %v2245, %v2237
  %v2950 = vpack.c.b16 %v2246, %v2238
  %v2951 = vpack.c.b16 %v2247, %v2239
  %v2952 = vpack.c.b16 %v2248, %v2240
  %v2953 = vpack.c.b16 %v2249, %v2241
  %v2954 = vpack.c.b16 %v2258, %v2250
  %v2955 = vpack.c.b16 %v2259, %v2251
  %v2956 = vpack.c.b16 %v2260, %v2252
  %v2957 = vpack.c.b16 %v2261, %v2253
  %v2958 = vpack.c.b16 %v2262, %v2254
  %v2959 = vpack.c.b16 %v2263, %v2255
  %v2960 = vpack.c.b16 %v2264, %v2256
  %v2961 = vpack.c.b16 %v2265, %v2257
  %v2962 = vpack.c.b16 %v2274, %v2266
  %v2963 = vpack.c.b16 %v2275, %v2267
  %v2964 = vpack.c.b16 %v2276, %v2268
  %v2965 = vpack.c.b16 %v2277, %v2269
  %v2966 = vpack.c.b16 %v2278, %v2270
  %v2967 = vpack.c.b16 %v2279, %v2271
  %v2968 = vpack.c.b16 %v2280, %v2272
  %v2969 = vpack.c.b16 %v2281, %v2273
  %v2970 = vpack.c.b16 %v2290, %v2282
  %v2971 = vpack.c.b16 %v2291, %v2283
  %v2972 = vpack.c.b16 %v2292, %v2284
  %v2973 = vpack.c.b16 %v2293, %v2285
  %v2974 = vpack.c.b16 %v2294, %v2286
  %v2975 = vpack.c.b16 %v2295, %v2287
  %v2976 = vpack.c.b16 %v2296, %v2288
  %v2977 = vpack.c.b16 %v2297, %v2289
  %v2978 = vpack.c.b16 %v2306, %v2298
  %v2979 = vpack.c.b16 %v2307, %v2299
  %v2980 = vpack.c.b16 %v2308, %v2300
  %v2981 = vpack.c.b16 %v2309, %v2301
  %v2982 = vpack.c.b16 %v2310, %v2302
  %v2983 = vpack.c.b16 %v2311, %v2303
  %v2984 = vpack.c.b16 %v2312, %v2304
  %v2985 = vpack.c.b16 %v2313, %v2305
  %v2986 = vpack.c.b16 %v2322, %v2314
  %v2987 = vpack.c.b16 %v2323, %v2315
  %v2988 = vpack.c.b16 %v2324, %v2316
  %v2989 = vpack.c.b16 %v2325, %v2317
  %v2990 = vpack.c.b16 %v2326, %v2318
  %v2991 = vpack.c.b16 %v2327, %v2319
  %v2992 = vpack.c.b16 %v2328, %v2320
  %v2993 = vpack.c.b16 %v2329, %v2321
  %v2994 = vpack.c.b16 %v2338, %v2330
  %v2995 = vpack.c.b16 %v2339, %v2331
  %v2996 = vpack.c.b16 %v2340, %v2332
  %v2997 = vpack.c.b16 %v2341, %v2333
  %v2998 = vpack.c.b16 %v2342, %v2334
  %v2999 = vpack.c.b16 %v2343, %v2335
  %v3000 = vpack.c.b16 %v2344, %v2336
  %v3001 = vpack.c.b16 %v2345, %v2337
  %v3002 = vpack.c.b16 %v2354, %v2346
  %v3003 = vpack.c.b16 %v2355, %v2347
  %v3004 = vpack.c.b16 %v2356, %v2348
  %v3005 = vpack.c.b16 %v2357, %v2349
  %v3006 = vpack.c.b16 %v2358, %v2350
  %v3007 = vpack.c.b16 %v2359, %v2351
  %v3008 = vpack.c.b16 %v2360, %v2352
  %v3009 = vpack.c.b16 %v2361, %v2353
  %v3010 = vpack.c.b16 %v2370, %v2362
  %v3011 = vpack.c.b16 %v2371, %v2363
  %v3012 = vpack.c.b16 %v2372, %v2364
  %v3013 = vpack.c.b16 %v2373, %v2365
  %v3014 = vpack.c.b16 %v2374, %v2366
  %v3015 = vpack.c.b16 %v2375, %v2367
  %v3016 = vpack.c.b16 %v2376, %v2368
  %v3017 = vpack.c.b16 %v2377, %v2369
  %v3018 = vpack.c.b16 %v2386, %v2378
  %v3019 = vpack.c.b16 %v2387, %v2379
  %v3020 = vpack.c.b16 %v2388, %v2380
  %v3021 = vpack.c.b16 %v2389, %v2381
  %v3022 = vpack.c.b16 %v2390, %v2382
  %v3023 = vpack.c.b16 %v2391, %v2383
  %v3024 = vpack.c.b16 %v2392, %v2384
  %v3025 = vpack.c.b16 %v2393, %v2385
  %v3026 = vpack.c.b16 %v2402, %v2394
  %v3027 = vpack.c.b16 %v2403, %v2395
  %v3028 = vpack.c.b16 %v2404, %v2396
  %v3029 = vpack.c.b16 %v2405, %v2397
  %v3030 = vpack.c.b16 %v2406, %v2398
  %v3031 = vpack.c.b16 %v2407, %v2399
  %v3032 = vpack.c.b16 %v2408, %v2400
  %v3033 = vpack.c.b16 %v2409, %v2401
  %v3034 = vpack.c.b16 %v2418, %v2410
  %v3035 = vpack.c.b16 %v2419, %v2411
  %v3036 = vpack.c.b16 %v2420, %v2412
  %v3037 = vpack.c.b16 %v2421, %v2413
  %v3038 = vpack.c.b16 %v2422, %v2414
  %v3039 = vpack.c.b16 %v2423, %v2415
  %v3040 = vpack.c.b16 %v2424, %v2416
  %v3041 = vpack.c.b16 %v2425, %v2417
  %v3042 = vpack.c.b16 %v2434, %v2426
  %v3043 = vpack.c.b16 %v2435, %v2427
  %v3044 = vpack.c.b16 %v2436, %v2428
  %v3045 = vpack.c.b16 %v2437, %v2429
  %v3046 = vpack.c.b16 %v2438, %v2430
  %v3047 = vpack.c.b16 %v2439, %v2431
  %v3048 = vpack.c.b16 %v2440, %v2432
  %v3049 = vpack.c.b16 %v2441, %v2433
  %v3050 = vpack.c.b16 %v2450, %v2442
  %v3051 = vpack.c.b16 %v2451, %v2443
  %v3052 = vpack.c.b16 %v2452, %v2444
  %v3053 = vpack.c.b16 %v2453, %v2445
  %v3054 = vpack.c.b16 %v2454, %v2446
  %v3055 = vpack.c.b16 %v2455, %v2447
  %v3056 = vpack.c.b16 %v2456, %v2448
  %v3057 = vpack.c.b16 %v2457, %v2449
  %v3058 = vpack.c.b16 %v2466, %v2458
  %v3059 = vpack.c.b16 %v2467, %v2459
  %v3060 = vpack.c.b16 %v2468, %v2460
  %v3061 = vpack.c.b16 %v2469, %v2461
  %v3062 = vpack.c.b16 %v2470, %v2462
  %v3063 = vpack.c.b16 %v2471, %v2463
  %v3064 = vpack.c.b16 %v2472, %v2464
  %v3065 = vpack.c.b16 %v2473, %v2465
  %v3066 = vpack.c.b16 %v2482, %v2474
  %v3067 = vpack.c.b16 %v2483, %v2475
  %v3068 = vpack.c.b16 %v2484, %v2476
  %v3069 = vpack.c.b16 %v2485, %v2477
  %v3070 = vpack.c.b16 %v2486, %v2478
  %v3071 = vpack.c.b16 %v2487, %v2479
  %v3072 = vpack.c.b16 %v2488, %v2480
  %v3073 = vpack.c.b16 %v2489, %v2481
  %v3074 = vpack.c.b16 %v2498, %v2490
  %v3075 = vpack.c.b16 %v2499, %v2491
  %v3076 = vpack.c.b16 %v2500, %v2492
  %v3077 = vpack.c.b16 %v2501, %v2493
  %v3078 = vpack.c.b16 %v2502, %v2494
  %v3079 = vpack.c.b16 %v2503, %v2495
  %v3080 = vpack.c.b16 %v2504, %v2496
  %v3081 = vpack.c.b16 %v2505, %v2497
  %v3082 = vpack.c.b16 %v2514, %v2506
  %v3083 = vpack.c.b16 %v2515, %v2507
  %v3084 = vpack.c.b16 %v2516, %v2508
  %v3085 = vpack.c.b16 %v2517, %v2509
  %v3086 = vpack.c.b16 %v2518, %v2510
  %v3087 = vpack.c.b16 %v2519, %v2511
  %v3088 = vpack.c.b16 %v2520, %v2512
  %v3089 = vpack.c.b16 %v2521, %v2513
  %v3090 = vpack.c.b16 %v2530, %v2522
  %v3091 = vpack.c.b16 %v2531, %v2523
  %v3092 = vpack.c.b16 %v2532, %v2524
  %v3093 = vpack.c.b16 %v2533, %v2525
  %v3094 = vpack.c.b16 %v2534, %v2526
  %v3095 = vpack.c.b16 %v2535, %v2527
  %v3096 = vpack.c.b16 %v2536, %v2528
  %v3097 = vpack.c.b16 %v2537, %v2529
  %v3098 = vpack.c.b16 %v2546, %v2538
  %v3099 = vpack.c.b16 %v2547, %v2539
  %v3100 = vpack.c.b16 %v2548, %v2540
  %v3101 = vpack.c.b16 %v2549, %v2541
  %v3102 = vpack.c.b16 %v2550, %v2542
  %v3103 = vpack.c.b16 %v2551, %v2543
  %v3104 = vpack.c.b16 %v2552, %v2544
  %v3105 = vpack.c.b16 %v2553, %v2545
  %v3106 = vpack.c.b16 %v2562, %v2554
  %v3107 = vpack.c.b16 %v2563, %v2555
  %v3108 = vpack.c.b16 %v2564, %v2556
  %v3109 = vpack.c.b16 %v2565, %v2557
  %v3110 = vpack.c.b16 %v2566, %v2558
  %v3111 = vpack.c.b16 %v2567, %v2559
  %v3112 = vpack.c.b16 %v2568, %v2560
  %v3113 = vpack.c.b16 %v2569, %v2561
  %v3114 = vpack.c.b16 %v2578, %v2570
  %v3115 = vpack.c.b16 %v2579, %v2571
  %v3116 = vpack.c.b16 %v2580, %v2572
  %v3117 = vpack.c.b16 %v2581, %v2573
  %v3118 = vpack.c.b16 %v2582, %v2574
  %v3119 = vpack.c.b16 %v2583, %v2575
  %v3120 = vpack.c.b16 %v2584, %v2576
  %v3121 = vpack.c.b16 %v2585, %v2577
  %v3122 = vpack.c.b16 %v2594, %v2586
  %v3123 = vpack.c.b16 %v2595, %v2587
  %v3124 = vpack.c.b16 %v2596, %v2588
  %v3125 = vpack.c.b16 %v2597, %v2589
  %v3126 = vpack.c.b16 %v2598, %v2590
  %v3127 = vpack.c.b16 %v2599, %v2591
  %v3128 = vpack.c.b16 %v2600, %v2592
  %v3129 = vpack.c.b16 %v2601, %v2593
  %v3130 = vpack.c.b16 %v2610, %v2602
  %v3131 = vpack.c.b16 %v2611, %v2603
  %v3132 = vpack.c.b16 %v2612, %v2604
  %v3133 = vpack.c.b16 %v2613, %v2605
  %v3134 = vpack.c.b16 %v2614, %v2606
  %v3135 = vpack.c.b16 %v2615, %v2607
  %v3136 = vpack.c.b16 %v2616, %v2608
  %v3137 = vpack.c.b16 %v2617, %v2609
  %v3138 = vpack.c.b16 %v2626, %v2618
  %v3139 = vpack.c.b16 %v2627, %v2619
  %v3140 = vpack.c.b16 %v2628, %v2620
  %v3141 = vpack.c.b16 %v2629, %v2621
  %v3142 = vpack.c.b16 %v2630, %v2622
  %v3143 = vpack.c.b16 %v2631, %v2623
  %v3144 = vpack.c.b16 %v2632, %v2624
  %v3145 = vpack.c.b16 %v2633, %v2625
  %3658 = vmatprep.subr.bf16.mxu0 %v2691
  %3659 = vmatpush1.bf16.msra.mxu0 %v2690
  %3660 = vmatprep.subr.bf16.mxu0 %v2683
  %3661 = vmatpush1.bf16.msra.mxu0 %v2682
  %3662 = vmatprep.subr.bf16.mxu0 %v2675
  %3663 = vmatpush1.bf16.msra.mxu0 %v2674
  %3664 = vmatprep.subr.bf16.mxu0 %v2667
  %3665 = vmatpush1.bf16.msra.mxu0 %v2666
  %3666 = vmatprep.subr.bf16.mxu0 %v2659
  %3667 = vmatpush1.bf16.msra.mxu0 %v2658
  %3668 = vmatprep.subr.bf16.mxu0 %v2651
  %3669 = vmatpush1.bf16.msra.mxu0 %v2650
  %3670 = vmatprep.subr.bf16.mxu0 %v2643
  %3671 = vmatpush1.bf16.msra.mxu0 %v2642
  %3672 = vmatprep.subr.bf16.mxu0 %v2635
  %3673 = vmatpush1.bf16.msra.mxu0 %v2634
  %3674 = vmatprep.subr.bf16.mxu0 %v2755
  %3675 = vmatpush2.bf16.msra.mxu0 %v2754
  %3676 = vmatprep.subr.bf16.mxu0 %v2747
  %3677 = vmatpush2.bf16.msra.mxu0 %v2746
  %3678 = vmatprep.subr.bf16.mxu0 %v2739
  %3679 = vmatpush2.bf16.msra.mxu0 %v2738
  %3680 = vmatprep.subr.bf16.mxu0 %v2731
  %3681 = vmatpush2.bf16.msra.mxu0 %v2730
  %3682 = vmatprep.subr.bf16.mxu0 %v2723
  %3683 = vmatpush2.bf16.msra.mxu0 %v2722
  %3684 = vmatprep.subr.bf16.mxu0 %v2715
  %3685 = vmatpush2.bf16.msra.mxu0 %v2714
  %3686 = vmatprep.subr.bf16.mxu0 %v2707
  %3687 = vmatpush2.bf16.msra.mxu0 %v2706
  %3688 = vmatprep.subr.bf16.mxu0 %v2699
  %3689 = vmatpush2.bf16.msra.mxu0 %v2698
  %3690 = vmatprep.mubr.bf16.mxu0 %v29
  %3691 = vmatmul.mubr.bf16.gmra.mxu0 %v28
  %v3692 = vpop.f32.mrf.mxu0
  %v3693 = vadd.f32 %v969, %v3692
  %v3694 = vpop.f32.mrf.mxu0
  %v3695 = vadd.f32 %v971, %v3694
  %v3696 = vpop.f32.mrf.mxu0
  %v3697 = vpop.f32.mrf.mxu0
  %3698 = vdwg.mxu0
  %3699 = vmatprep.subr.bf16.mxu0 %v2819
  %3700 = vmatpush1.bf16.msra.mxu0 %v2818
  %3701 = vmatprep.subr.bf16.mxu0 %v2811
  %3702 = vmatpush1.bf16.msra.mxu0 %v2810
  %3703 = vmatprep.subr.bf16.mxu0 %v2803
  %3704 = vmatpush1.bf16.msra.mxu0 %v2802
  %3705 = vmatprep.subr.bf16.mxu0 %v2795
  %3706 = vmatpush1.bf16.msra.mxu0 %v2794
  %3707 = vmatprep.subr.bf16.mxu0 %v2787
  %3708 = vmatpush1.bf16.msra.mxu0 %v2786
  %3709 = vmatprep.subr.bf16.mxu0 %v2779
  %3710 = vmatpush1.bf16.msra.mxu0 %v2778
  %3711 = vmatprep.subr.bf16.mxu0 %v2771
  %3712 = vmatpush1.bf16.msra.mxu0 %v2770
  %3713 = vmatprep.subr.bf16.mxu0 %v2763
  %3714 = vmatpush1.bf16.msra.mxu0 %v2762
  %3715 = vmatprep.subr.bf16.mxu0 %v2883
  %3716 = vmatpush2.bf16.msra.mxu0 %v2882
  %3717 = vmatprep.subr.bf16.mxu0 %v2875
  %3718 = vmatpush2.bf16.msra.mxu0 %v2874
  %3719 = vmatprep.subr.bf16.mxu0 %v2867
  %3720 = vmatpush2.bf16.msra.mxu0 %v2866
  %3721 = vmatprep.subr.bf16.mxu0 %v2859
  %3722 = vmatpush2.bf16.msra.mxu0 %v2858
  %3723 = vmatprep.subr.bf16.mxu0 %v2851
  %3724 = vmatpush2.bf16.msra.mxu0 %v2850
  %3725 = vmatprep.subr.bf16.mxu0 %v2843
  %3726 = vmatpush2.bf16.msra.mxu0 %v2842
  %3727 = vmatprep.subr.bf16.mxu0 %v2835
  %3728 = vmatpush2.bf16.msra.mxu0 %v2834
  %3729 = vmatprep.subr.bf16.mxu0 %v2827
  %3730 = vmatpush2.bf16.msra.mxu0 %v2826
  %3731 = vmatprep.mubr.bf16.mxu0 %v31
  %3732 = vmatmul.mubr.bf16.gmra.mxu0 %v30
  %v3733 = vpop.f32.mrf.mxu0
  %v3734 = vadd.f32 %v3693, %v3733
  %v3735 = vpop.f32.mrf.mxu0
  %v3736 = vadd.f32 %v3695, %v3735
  %v3737 = vpop.f32.mrf.mxu0
  %v3738 = vpop.f32.mrf.mxu0
  %3739 = vdwg.mxu0
  %3740 = vmatprep.subr.bf16.mxu0 %v2947
  %3741 = vmatpush1.bf16.msra.mxu0 %v2946
  %3742 = vmatprep.subr.bf16.mxu0 %v2939
  %3743 = vmatpush1.bf16.msra.mxu0 %v2938
  %3744 = vmatprep.subr.bf16.mxu0 %v2931
  %3745 = vmatpush1.bf16.msra.mxu0 %v2930
  %3746 = vmatprep.subr.bf16.mxu0 %v2923
  %3747 = vmatpush1.bf16.msra.mxu0 %v2922
  %3748 = vmatprep.subr.bf16.mxu0 %v2915
  %3749 = vmatpush1.bf16.msra.mxu0 %v2914
  %3750 = vmatprep.subr.bf16.mxu0 %v2907
  %3751 = vmatpush1.bf16.msra.mxu0 %v2906
  %3752 = vmatprep.subr.bf16.mxu0 %v2899
  %3753 = vmatpush1.bf16.msra.mxu0 %v2898
  %3754 = vmatprep.subr.bf16.mxu0 %v2891
  %3755 = vmatpush1.bf16.msra.mxu0 %v2890
  %3756 = vmatprep.subr.bf16.mxu0 %v3011
  %3757 = vmatpush2.bf16.msra.mxu0 %v3010
  %3758 = vmatprep.subr.bf16.mxu0 %v3003
  %3759 = vmatpush2.bf16.msra.mxu0 %v3002
  %3760 = vmatprep.subr.bf16.mxu0 %v2995
  %3761 = vmatpush2.bf16.msra.mxu0 %v2994
  %3762 = vmatprep.subr.bf16.mxu0 %v2987
  %3763 = vmatpush2.bf16.msra.mxu0 %v2986
  %3764 = vmatprep.subr.bf16.mxu0 %v2979
  %3765 = vmatpush2.bf16.msra.mxu0 %v2978
  %3766 = vmatprep.subr.bf16.mxu0 %v2971
  %3767 = vmatpush2.bf16.msra.mxu0 %v2970
  %3768 = vmatprep.subr.bf16.mxu0 %v2963
  %3769 = vmatpush2.bf16.msra.mxu0 %v2962
  %3770 = vmatprep.subr.bf16.mxu0 %v2955
  %3771 = vmatpush2.bf16.msra.mxu0 %v2954
  %3772 = vmatprep.mubr.bf16.mxu0 %v33
  %3773 = vmatmul.mubr.bf16.gmra.mxu0 %v32
  %v3774 = vpop.f32.mrf.mxu0
  %v3775 = vadd.f32 %v3734, %v3774
  %v3776 = vpop.f32.mrf.mxu0
  %v3777 = vadd.f32 %v3736, %v3776
  %v3778 = vpop.f32.mrf.mxu0
  %v3779 = vpop.f32.mrf.mxu0
  %3780 = vdwg.mxu0
  %3781 = vmatprep.subr.bf16.mxu0 %v3075
  %3782 = vmatpush1.bf16.msra.mxu0 %v3074
  %3783 = vmatprep.subr.bf16.mxu0 %v3067
  %3784 = vmatpush1.bf16.msra.mxu0 %v3066
  %3785 = vmatprep.subr.bf16.mxu0 %v3059
  %3786 = vmatpush1.bf16.msra.mxu0 %v3058
  %3787 = vmatprep.subr.bf16.mxu0 %v3051
  %3788 = vmatpush1.bf16.msra.mxu0 %v3050
  %3789 = vmatprep.subr.bf16.mxu0 %v3043
  %3790 = vmatpush1.bf16.msra.mxu0 %v3042
  %3791 = vmatprep.subr.bf16.mxu0 %v3035
  %3792 = vmatpush1.bf16.msra.mxu0 %v3034
  %3793 = vmatprep.subr.bf16.mxu0 %v3027
  %3794 = vmatpush1.bf16.msra.mxu0 %v3026
  %3795 = vmatprep.subr.bf16.mxu0 %v3019
  %3796 = vmatpush1.bf16.msra.mxu0 %v3018
  %3797 = vmatprep.subr.bf16.mxu0 %v3139
  %3798 = vmatpush2.bf16.msra.mxu0 %v3138
  %3799 = vmatprep.subr.bf16.mxu0 %v3131
  %3800 = vmatpush2.bf16.msra.mxu0 %v3130
  %3801 = vmatprep.subr.bf16.mxu0 %v3123
  %3802 = vmatpush2.bf16.msra.mxu0 %v3122
  %3803 = vmatprep.subr.bf16.mxu0 %v3115
  %3804 = vmatpush2.bf16.msra.mxu0 %v3114
  %3805 = vmatprep.subr.bf16.mxu0 %v3107
  %3806 = vmatpush2.bf16.msra.mxu0 %v3106
  %3807 = vmatprep.subr.bf16.mxu0 %v3099
  %3808 = vmatpush2.bf16.msra.mxu0 %v3098
  %3809 = vmatprep.subr.bf16.mxu0 %v3091
  %3810 = vmatpush2.bf16.msra.mxu0 %v3090
  %3811 = vmatprep.subr.bf16.mxu0 %v3083
  %3812 = vmatpush2.bf16.msra.mxu0 %v3082
  %3813 = vmatprep.mubr.bf16.mxu0 %v35
  %3814 = vmatmul.mubr.bf16.gmra.mxu0 %v34
  %v3815 = vpop.f32.mrf.mxu0
  %v3816 = vadd.f32 %v3775, %v3815
  %v3817 = vpop.f32.mrf.mxu0
  %v3818 = vadd.f32 %v3777, %v3817
  %v3819 = vpop.f32.mrf.mxu0
  %v3820 = vpop.f32.mrf.mxu0
  %3821 = vdwg.mxu0
  %3822 = vmatprep.subr.bf16.mxu0 %v2693
  %3823 = vmatpush1.bf16.msra.mxu0 %v2692
  %3824 = vmatprep.subr.bf16.mxu0 %v2685
  %3825 = vmatpush1.bf16.msra.mxu0 %v2684
  %3826 = vmatprep.subr.bf16.mxu0 %v2677
  %3827 = vmatpush1.bf16.msra.mxu0 %v2676
  %3828 = vmatprep.subr.bf16.mxu0 %v2669
  %3829 = vmatpush1.bf16.msra.mxu0 %v2668
  %3830 = vmatprep.subr.bf16.mxu0 %v2661
  %3831 = vmatpush1.bf16.msra.mxu0 %v2660
  %3832 = vmatprep.subr.bf16.mxu0 %v2653
  %3833 = vmatpush1.bf16.msra.mxu0 %v2652
  %3834 = vmatprep.subr.bf16.mxu0 %v2645
  %3835 = vmatpush1.bf16.msra.mxu0 %v2644
  %3836 = vmatprep.subr.bf16.mxu0 %v2637
  %3837 = vmatpush1.bf16.msra.mxu0 %v2636
  %3838 = vmatprep.subr.bf16.mxu0 %v2757
  %3839 = vmatpush2.bf16.msra.mxu0 %v2756
  %3840 = vmatprep.subr.bf16.mxu0 %v2749
  %3841 = vmatpush2.bf16.msra.mxu0 %v2748
  %3842 = vmatprep.subr.bf16.mxu0 %v2741
  %3843 = vmatpush2.bf16.msra.mxu0 %v2740
  %3844 = vmatprep.subr.bf16.mxu0 %v2733
  %3845 = vmatpush2.bf16.msra.mxu0 %v2732
  %3846 = vmatprep.subr.bf16.mxu0 %v2725
  %3847 = vmatpush2.bf16.msra.mxu0 %v2724
  %3848 = vmatprep.subr.bf16.mxu0 %v2717
  %3849 = vmatpush2.bf16.msra.mxu0 %v2716
  %3850 = vmatprep.subr.bf16.mxu0 %v2709
  %3851 = vmatpush2.bf16.msra.mxu0 %v2708
  %3852 = vmatprep.subr.bf16.mxu0 %v2701
  %3853 = vmatpush2.bf16.msra.mxu0 %v2700
  %3854 = vmatprep.mubr.bf16.mxu0 %v29
  %3855 = vmatmul.mubr.bf16.gmra.mxu0 %v28
  %v3856 = vpop.f32.mrf.mxu0
  %v3857 = vadd.f32 %v1010, %v3856
  %v3858 = vpop.f32.mrf.mxu0
  %v3859 = vadd.f32 %v1012, %v3858
  %v3860 = vpop.f32.mrf.mxu0
  %v3861 = vpop.f32.mrf.mxu0
  %3862 = vdwg.mxu0
  %3863 = vmatprep.subr.bf16.mxu0 %v2821
  %3864 = vmatpush1.bf16.msra.mxu0 %v2820
  %3865 = vmatprep.subr.bf16.mxu0 %v2813
  %3866 = vmatpush1.bf16.msra.mxu0 %v2812
  %3867 = vmatprep.subr.bf16.mxu0 %v2805
  %3868 = vmatpush1.bf16.msra.mxu0 %v2804
  %3869 = vmatprep.subr.bf16.mxu0 %v2797
  %3870 = vmatpush1.bf16.msra.mxu0 %v2796
  %3871 = vmatprep.subr.bf16.mxu0 %v2789
  %3872 = vmatpush1.bf16.msra.mxu0 %v2788
  %3873 = vmatprep.subr.bf16.mxu0 %v2781
  %3874 = vmatpush1.bf16.msra.mxu0 %v2780
  %3875 = vmatprep.subr.bf16.mxu0 %v2773
  %3876 = vmatpush1.bf16.msra.mxu0 %v2772
  %3877 = vmatprep.subr.bf16.mxu0 %v2765
  %3878 = vmatpush1.bf16.msra.mxu0 %v2764
  %3879 = vmatprep.subr.bf16.mxu0 %v2885
  %3880 = vmatpush2.bf16.msra.mxu0 %v2884
  %3881 = vmatprep.subr.bf16.mxu0 %v2877
  %3882 = vmatpush2.bf16.msra.mxu0 %v2876
  %3883 = vmatprep.subr.bf16.mxu0 %v2869
  %3884 = vmatpush2.bf16.msra.mxu0 %v2868
  %3885 = vmatprep.subr.bf16.mxu0 %v2861
  %3886 = vmatpush2.bf16.msra.mxu0 %v2860
  %3887 = vmatprep.subr.bf16.mxu0 %v2853
  %3888 = vmatpush2.bf16.msra.mxu0 %v2852
  %3889 = vmatprep.subr.bf16.mxu0 %v2845
  %3890 = vmatpush2.bf16.msra.mxu0 %v2844
  %3891 = vmatprep.subr.bf16.mxu0 %v2837
  %3892 = vmatpush2.bf16.msra.mxu0 %v2836
  %3893 = vmatprep.subr.bf16.mxu0 %v2829
  %3894 = vmatpush2.bf16.msra.mxu0 %v2828
  %3895 = vmatprep.mubr.bf16.mxu0 %v31
  %3896 = vmatmul.mubr.bf16.gmra.mxu0 %v30
  %v3897 = vpop.f32.mrf.mxu0
  %v3898 = vadd.f32 %v3857, %v3897
  %v3899 = vpop.f32.mrf.mxu0
  %v3900 = vadd.f32 %v3859, %v3899
  %v3901 = vpop.f32.mrf.mxu0
  %v3902 = vpop.f32.mrf.mxu0
  %3903 = vdwg.mxu0
  %3904 = vmatprep.subr.bf16.mxu0 %v2949
  %3905 = vmatpush1.bf16.msra.mxu0 %v2948
  %3906 = vmatprep.subr.bf16.mxu0 %v2941
  %3907 = vmatpush1.bf16.msra.mxu0 %v2940
  %3908 = vmatprep.subr.bf16.mxu0 %v2933
  %3909 = vmatpush1.bf16.msra.mxu0 %v2932
  %3910 = vmatprep.subr.bf16.mxu0 %v2925
  %3911 = vmatpush1.bf16.msra.mxu0 %v2924
  %3912 = vmatprep.subr.bf16.mxu0 %v2917
  %3913 = vmatpush1.bf16.msra.mxu0 %v2916
  %3914 = vmatprep.subr.bf16.mxu0 %v2909
  %3915 = vmatpush1.bf16.msra.mxu0 %v2908
  %3916 = vmatprep.subr.bf16.mxu0 %v2901
  %3917 = vmatpush1.bf16.msra.mxu0 %v2900
  %3918 = vmatprep.subr.bf16.mxu0 %v2893
  %3919 = vmatpush1.bf16.msra.mxu0 %v2892
  %3920 = vmatprep.subr.bf16.mxu0 %v3013
  %3921 = vmatpush2.bf16.msra.mxu0 %v3012
  %3922 = vmatprep.subr.bf16.mxu0 %v3005
  %3923 = vmatpush2.bf16.msra.mxu0 %v3004
  %3924 = vmatprep.subr.bf16.mxu0 %v2997
  %3925 = vmatpush2.bf16.msra.mxu0 %v2996
  %3926 = vmatprep.subr.bf16.mxu0 %v2989
  %3927 = vmatpush2.bf16.msra.mxu0 %v2988
  %3928 = vmatprep.subr.bf16.mxu0 %v2981
  %3929 = vmatpush2.bf16.msra.mxu0 %v2980
  %3930 = vmatprep.subr.bf16.mxu0 %v2973
  %3931 = vmatpush2.bf16.msra.mxu0 %v2972
  %3932 = vmatprep.subr.bf16.mxu0 %v2965
  %3933 = vmatpush2.bf16.msra.mxu0 %v2964
  %3934 = vmatprep.subr.bf16.mxu0 %v2957
  %3935 = vmatpush2.bf16.msra.mxu0 %v2956
  %3936 = vmatprep.mubr.bf16.mxu0 %v33
  %3937 = vmatmul.mubr.bf16.gmra.mxu0 %v32
  %v3938 = vpop.f32.mrf.mxu0
  %v3939 = vadd.f32 %v3898, %v3938
  %v3940 = vpop.f32.mrf.mxu0
  %v3941 = vadd.f32 %v3900, %v3940
  %v3942 = vpop.f32.mrf.mxu0
  %v3943 = vpop.f32.mrf.mxu0
  %3944 = vdwg.mxu0
  %3945 = vmatprep.subr.bf16.mxu0 %v3077
  %3946 = vmatpush1.bf16.msra.mxu0 %v3076
  %3947 = vmatprep.subr.bf16.mxu0 %v3069
  %3948 = vmatpush1.bf16.msra.mxu0 %v3068
  %3949 = vmatprep.subr.bf16.mxu0 %v3061
  %3950 = vmatpush1.bf16.msra.mxu0 %v3060
  %3951 = vmatprep.subr.bf16.mxu0 %v3053
  %3952 = vmatpush1.bf16.msra.mxu0 %v3052
  %3953 = vmatprep.subr.bf16.mxu0 %v3045
  %3954 = vmatpush1.bf16.msra.mxu0 %v3044
  %3955 = vmatprep.subr.bf16.mxu0 %v3037
  %3956 = vmatpush1.bf16.msra.mxu0 %v3036
  %3957 = vmatprep.subr.bf16.mxu0 %v3029
  %3958 = vmatpush1.bf16.msra.mxu0 %v3028
  %3959 = vmatprep.subr.bf16.mxu0 %v3021
  %3960 = vmatpush1.bf16.msra.mxu0 %v3020
  %3961 = vmatprep.subr.bf16.mxu0 %v3141
  %3962 = vmatpush2.bf16.msra.mxu0 %v3140
  %3963 = vmatprep.subr.bf16.mxu0 %v3133
  %3964 = vmatpush2.bf16.msra.mxu0 %v3132
  %3965 = vmatprep.subr.bf16.mxu0 %v3125
  %3966 = vmatpush2.bf16.msra.mxu0 %v3124
  %3967 = vmatprep.subr.bf16.mxu0 %v3117
  %3968 = vmatpush2.bf16.msra.mxu0 %v3116
  %3969 = vmatprep.subr.bf16.mxu0 %v3109
  %3970 = vmatpush2.bf16.msra.mxu0 %v3108
  %3971 = vmatprep.subr.bf16.mxu0 %v3101
  %3972 = vmatpush2.bf16.msra.mxu0 %v3100
  %3973 = vmatprep.subr.bf16.mxu0 %v3093
  %3974 = vmatpush2.bf16.msra.mxu0 %v3092
  %3975 = vmatprep.subr.bf16.mxu0 %v3085
  %3976 = vmatpush2.bf16.msra.mxu0 %v3084
  %3977 = vmatprep.mubr.bf16.mxu0 %v35
  %3978 = vmatmul.mubr.bf16.gmra.mxu0 %v34
  %v3979 = vpop.f32.mrf.mxu0
  %v3980 = vadd.f32 %v3939, %v3979
  %v3981 = vpop.f32.mrf.mxu0
  %v3982 = vadd.f32 %v3941, %v3981
  %v3983 = vpop.f32.mrf.mxu0
  %v3984 = vpop.f32.mrf.mxu0
  %3985 = vdwg.mxu0
  %3986 = vmatprep.subr.bf16.mxu0 %v2695
  %3987 = vmatpush1.bf16.msra.mxu0 %v2694
  %3988 = vmatprep.subr.bf16.mxu0 %v2687
  %3989 = vmatpush1.bf16.msra.mxu0 %v2686
  %3990 = vmatprep.subr.bf16.mxu0 %v2679
  %3991 = vmatpush1.bf16.msra.mxu0 %v2678
  %3992 = vmatprep.subr.bf16.mxu0 %v2671
  %3993 = vmatpush1.bf16.msra.mxu0 %v2670
  %3994 = vmatprep.subr.bf16.mxu0 %v2663
  %3995 = vmatpush1.bf16.msra.mxu0 %v2662
  %3996 = vmatprep.subr.bf16.mxu0 %v2655
  %3997 = vmatpush1.bf16.msra.mxu0 %v2654
  %3998 = vmatprep.subr.bf16.mxu0 %v2647
  %3999 = vmatpush1.bf16.msra.mxu0 %v2646
  %4000 = vmatprep.subr.bf16.mxu0 %v2639
  %4001 = vmatpush1.bf16.msra.mxu0 %v2638
  %4002 = vmatprep.subr.bf16.mxu0 %v2759
  %4003 = vmatpush2.bf16.msra.mxu0 %v2758
  %4004 = vmatprep.subr.bf16.mxu0 %v2751
  %4005 = vmatpush2.bf16.msra.mxu0 %v2750
  %4006 = vmatprep.subr.bf16.mxu0 %v2743
  %4007 = vmatpush2.bf16.msra.mxu0 %v2742
  %4008 = vmatprep.subr.bf16.mxu0 %v2735
  %4009 = vmatpush2.bf16.msra.mxu0 %v2734
  %4010 = vmatprep.subr.bf16.mxu0 %v2727
  %4011 = vmatpush2.bf16.msra.mxu0 %v2726
  %4012 = vmatprep.subr.bf16.mxu0 %v2719
  %4013 = vmatpush2.bf16.msra.mxu0 %v2718
  %4014 = vmatprep.subr.bf16.mxu0 %v2711
  %4015 = vmatpush2.bf16.msra.mxu0 %v2710
  %4016 = vmatprep.subr.bf16.mxu0 %v2703
  %4017 = vmatpush2.bf16.msra.mxu0 %v2702
  %4018 = vmatprep.mubr.bf16.mxu0 %v29
  %4019 = vmatmul.mubr.bf16.gmra.mxu0 %v28
  %v4020 = vpop.f32.mrf.mxu0
  %v4021 = vadd.f32 %v1051, %v4020
  %v4022 = vpop.f32.mrf.mxu0
  %v4023 = vadd.f32 %v1053, %v4022
  %v4024 = vpop.f32.mrf.mxu0
  %v4025 = vpop.f32.mrf.mxu0
  %4026 = vdwg.mxu0
  %4027 = vmatprep.subr.bf16.mxu0 %v2823
  %4028 = vmatpush1.bf16.msra.mxu0 %v2822
  %4029 = vmatprep.subr.bf16.mxu0 %v2815
  %4030 = vmatpush1.bf16.msra.mxu0 %v2814
  %4031 = vmatprep.subr.bf16.mxu0 %v2807
  %4032 = vmatpush1.bf16.msra.mxu0 %v2806
  %4033 = vmatprep.subr.bf16.mxu0 %v2799
  %4034 = vmatpush1.bf16.msra.mxu0 %v2798
  %4035 = vmatprep.subr.bf16.mxu0 %v2791
  %4036 = vmatpush1.bf16.msra.mxu0 %v2790
  %4037 = vmatprep.subr.bf16.mxu0 %v2783
  %4038 = vmatpush1.bf16.msra.mxu0 %v2782
  %4039 = vmatprep.subr.bf16.mxu0 %v2775
  %4040 = vmatpush1.bf16.msra.mxu0 %v2774
  %4041 = vmatprep.subr.bf16.mxu0 %v2767
  %4042 = vmatpush1.bf16.msra.mxu0 %v2766
  %4043 = vmatprep.subr.bf16.mxu0 %v2887
  %4044 = vmatpush2.bf16.msra.mxu0 %v2886
  %4045 = vmatprep.subr.bf16.mxu0 %v2879
  %4046 = vmatpush2.bf16.msra.mxu0 %v2878
  %4047 = vmatprep.subr.bf16.mxu0 %v2871
  %4048 = vmatpush2.bf16.msra.mxu0 %v2870
  %4049 = vmatprep.subr.bf16.mxu0 %v2863
  %4050 = vmatpush2.bf16.msra.mxu0 %v2862
  %4051 = vmatprep.subr.bf16.mxu0 %v2855
  %4052 = vmatpush2.bf16.msra.mxu0 %v2854
  %4053 = vmatprep.subr.bf16.mxu0 %v2847
  %4054 = vmatpush2.bf16.msra.mxu0 %v2846
  %4055 = vmatprep.subr.bf16.mxu0 %v2839
  %4056 = vmatpush2.bf16.msra.mxu0 %v2838
  %4057 = vmatprep.subr.bf16.mxu0 %v2831
  %4058 = vmatpush2.bf16.msra.mxu0 %v2830
  %4059 = vmatprep.mubr.bf16.mxu0 %v31
  %4060 = vmatmul.mubr.bf16.gmra.mxu0 %v30
  %v4061 = vpop.f32.mrf.mxu0
  %v4062 = vadd.f32 %v4021, %v4061
  %v4063 = vpop.f32.mrf.mxu0
  %v4064 = vadd.f32 %v4023, %v4063
  %v4065 = vpop.f32.mrf.mxu0
  %v4066 = vpop.f32.mrf.mxu0
  %4067 = vdwg.mxu0
  %4068 = vmatprep.subr.bf16.mxu0 %v2951
  %4069 = vmatpush1.bf16.msra.mxu0 %v2950
  %4070 = vmatprep.subr.bf16.mxu0 %v2943
  %4071 = vmatpush1.bf16.msra.mxu0 %v2942
  %4072 = vmatprep.subr.bf16.mxu0 %v2935
  %4073 = vmatpush1.bf16.msra.mxu0 %v2934
  %4074 = vmatprep.subr.bf16.mxu0 %v2927
  %4075 = vmatpush1.bf16.msra.mxu0 %v2926
  %4076 = vmatprep.subr.bf16.mxu0 %v2919
  %4077 = vmatpush1.bf16.msra.mxu0 %v2918
  %4078 = vmatprep.subr.bf16.mxu0 %v2911
  %4079 = vmatpush1.bf16.msra.mxu0 %v2910
  %4080 = vmatprep.subr.bf16.mxu0 %v2903
  %4081 = vmatpush1.bf16.msra.mxu0 %v2902
  %4082 = vmatprep.subr.bf16.mxu0 %v2895
  %4083 = vmatpush1.bf16.msra.mxu0 %v2894
  %4084 = vmatprep.subr.bf16.mxu0 %v3015
  %4085 = vmatpush2.bf16.msra.mxu0 %v3014
  %4086 = vmatprep.subr.bf16.mxu0 %v3007
  %4087 = vmatpush2.bf16.msra.mxu0 %v3006
  %4088 = vmatprep.subr.bf16.mxu0 %v2999
  %4089 = vmatpush2.bf16.msra.mxu0 %v2998
  %4090 = vmatprep.subr.bf16.mxu0 %v2991
  %4091 = vmatpush2.bf16.msra.mxu0 %v2990
  %4092 = vmatprep.subr.bf16.mxu0 %v2983
  %4093 = vmatpush2.bf16.msra.mxu0 %v2982
  %4094 = vmatprep.subr.bf16.mxu0 %v2975
  %4095 = vmatpush2.bf16.msra.mxu0 %v2974
  %4096 = vmatprep.subr.bf16.mxu0 %v2967
  %4097 = vmatpush2.bf16.msra.mxu0 %v2966
  %4098 = vmatprep.subr.bf16.mxu0 %v2959
  %4099 = vmatpush2.bf16.msra.mxu0 %v2958
  %4100 = vmatprep.mubr.bf16.mxu0 %v33
  %4101 = vmatmul.mubr.bf16.gmra.mxu0 %v32
  %v4102 = vpop.f32.mrf.mxu0
  %v4103 = vadd.f32 %v4062, %v4102
  %v4104 = vpop.f32.mrf.mxu0
  %v4105 = vadd.f32 %v4064, %v4104
  %v4106 = vpop.f32.mrf.mxu0
  %v4107 = vpop.f32.mrf.mxu0
  %4108 = vdwg.mxu0
  %4109 = vmatprep.subr.bf16.mxu0 %v3079
  %4110 = vmatpush1.bf16.msra.mxu0 %v3078
  %4111 = vmatprep.subr.bf16.mxu0 %v3071
  %4112 = vmatpush1.bf16.msra.mxu0 %v3070
  %4113 = vmatprep.subr.bf16.mxu0 %v3063
  %4114 = vmatpush1.bf16.msra.mxu0 %v3062
  %4115 = vmatprep.subr.bf16.mxu0 %v3055
  %4116 = vmatpush1.bf16.msra.mxu0 %v3054
  %4117 = vmatprep.subr.bf16.mxu0 %v3047
  %4118 = vmatpush1.bf16.msra.mxu0 %v3046
  %4119 = vmatprep.subr.bf16.mxu0 %v3039
  %4120 = vmatpush1.bf16.msra.mxu0 %v3038
  %4121 = vmatprep.subr.bf16.mxu0 %v3031
  %4122 = vmatpush1.bf16.msra.mxu0 %v3030
  %4123 = vmatprep.subr.bf16.mxu0 %v3023
  %4124 = vmatpush1.bf16.msra.mxu0 %v3022
  %4125 = vmatprep.subr.bf16.mxu0 %v3143
  %4126 = vmatpush2.bf16.msra.mxu0 %v3142
  %4127 = vmatprep.subr.bf16.mxu0 %v3135
  %4128 = vmatpush2.bf16.msra.mxu0 %v3134
  %4129 = vmatprep.subr.bf16.mxu0 %v3127
  %4130 = vmatpush2.bf16.msra.mxu0 %v3126
  %4131 = vmatprep.subr.bf16.mxu0 %v3119
  %4132 = vmatpush2.bf16.msra.mxu0 %v3118
  %4133 = vmatprep.subr.bf16.mxu0 %v3111
  %4134 = vmatpush2.bf16.msra.mxu0 %v3110
  %4135 = vmatprep.subr.bf16.mxu0 %v3103
  %4136 = vmatpush2.bf16.msra.mxu0 %v3102
  %4137 = vmatprep.subr.bf16.mxu0 %v3095
  %4138 = vmatpush2.bf16.msra.mxu0 %v3094
  %4139 = vmatprep.subr.bf16.mxu0 %v3087
  %4140 = vmatpush2.bf16.msra.mxu0 %v3086
  %4141 = vmatprep.mubr.bf16.mxu0 %v35
  %4142 = vmatmul.mubr.bf16.gmra.mxu0 %v34
  %v4143 = vpop.f32.mrf.mxu0
  %v4144 = vadd.f32 %v4103, %v4143
  %v4145 = vpop.f32.mrf.mxu0
  %v4146 = vadd.f32 %v4105, %v4145
  %v4147 = vpop.f32.mrf.mxu0
  %v4148 = vpop.f32.mrf.mxu0
  %4149 = vdwg.mxu0
  %4150 = vmatprep.subr.bf16.mxu0 %v2697
  %4151 = vmatpush1.bf16.msra.mxu0 %v2696
  %4152 = vmatprep.subr.bf16.mxu0 %v2689
  %4153 = vmatpush1.bf16.msra.mxu0 %v2688
  %4154 = vmatprep.subr.bf16.mxu0 %v2681
  %4155 = vmatpush1.bf16.msra.mxu0 %v2680
  %4156 = vmatprep.subr.bf16.mxu0 %v2673
  %4157 = vmatpush1.bf16.msra.mxu0 %v2672
  %4158 = vmatprep.subr.bf16.mxu0 %v2665
  %4159 = vmatpush1.bf16.msra.mxu0 %v2664
  %4160 = vmatprep.subr.bf16.mxu0 %v2657
  %4161 = vmatpush1.bf16.msra.mxu0 %v2656
  %4162 = vmatprep.subr.bf16.mxu0 %v2649
  %4163 = vmatpush1.bf16.msra.mxu0 %v2648
  %4164 = vmatprep.subr.bf16.mxu0 %v2641
  %4165 = vmatpush1.bf16.msra.mxu0 %v2640
  %4166 = vmatprep.subr.bf16.mxu0 %v2761
  %4167 = vmatpush2.bf16.msra.mxu0 %v2760
  %4168 = vmatprep.subr.bf16.mxu0 %v2753
  %4169 = vmatpush2.bf16.msra.mxu0 %v2752
  %4170 = vmatprep.subr.bf16.mxu0 %v2745
  %4171 = vmatpush2.bf16.msra.mxu0 %v2744
  %4172 = vmatprep.subr.bf16.mxu0 %v2737
  %4173 = vmatpush2.bf16.msra.mxu0 %v2736
  %4174 = vmatprep.subr.bf16.mxu0 %v2729
  %4175 = vmatpush2.bf16.msra.mxu0 %v2728
  %4176 = vmatprep.subr.bf16.mxu0 %v2721
  %4177 = vmatpush2.bf16.msra.mxu0 %v2720
  %4178 = vmatprep.subr.bf16.mxu0 %v2713
  %4179 = vmatpush2.bf16.msra.mxu0 %v2712
  %4180 = vmatprep.subr.bf16.mxu0 %v2705
  %4181 = vmatpush2.bf16.msra.mxu0 %v2704
  %4182 = vmatprep.mubr.bf16.mxu0 %v29
  %4183 = vmatmul.mubr.bf16.gmra.mxu0 %v28
  %v4184 = vpop.f32.mrf.mxu0
  %v4185 = vadd.f32 %v1092, %v4184
  %v4186 = vpop.f32.mrf.mxu0
  %v4187 = vadd.f32 %v1094, %v4186
  %v4188 = vpop.f32.mrf.mxu0
  %v4189 = vpop.f32.mrf.mxu0
  %4190 = vdwg.mxu0
  %4191 = vmatprep.subr.bf16.mxu0 %v2825
  %4192 = vmatpush1.bf16.msra.mxu0 %v2824
  %4193 = vmatprep.subr.bf16.mxu0 %v2817
  %4194 = vmatpush1.bf16.msra.mxu0 %v2816
  %4195 = vmatprep.subr.bf16.mxu0 %v2809
  %4196 = vmatpush1.bf16.msra.mxu0 %v2808
  %4197 = vmatprep.subr.bf16.mxu0 %v2801
  %4198 = vmatpush1.bf16.msra.mxu0 %v2800
  %4199 = vmatprep.subr.bf16.mxu0 %v2793
  %4200 = vmatpush1.bf16.msra.mxu0 %v2792
  %4201 = vmatprep.subr.bf16.mxu0 %v2785
  %4202 = vmatpush1.bf16.msra.mxu0 %v2784
  %4203 = vmatprep.subr.bf16.mxu0 %v2777
  %4204 = vmatpush1.bf16.msra.mxu0 %v2776
  %4205 = vmatprep.subr.bf16.mxu0 %v2769
  %4206 = vmatpush1.bf16.msra.mxu0 %v2768
  %4207 = vmatprep.subr.bf16.mxu0 %v2889
  %4208 = vmatpush2.bf16.msra.mxu0 %v2888
  %4209 = vmatprep.subr.bf16.mxu0 %v2881
  %4210 = vmatpush2.bf16.msra.mxu0 %v2880
  %4211 = vmatprep.subr.bf16.mxu0 %v2873
  %4212 = vmatpush2.bf16.msra.mxu0 %v2872
  %4213 = vmatprep.subr.bf16.mxu0 %v2865
  %4214 = vmatpush2.bf16.msra.mxu0 %v2864
  %4215 = vmatprep.subr.bf16.mxu0 %v2857
  %4216 = vmatpush2.bf16.msra.mxu0 %v2856
  %4217 = vmatprep.subr.bf16.mxu0 %v2849
  %4218 = vmatpush2.bf16.msra.mxu0 %v2848
  %4219 = vmatprep.subr.bf16.mxu0 %v2841
  %4220 = vmatpush2.bf16.msra.mxu0 %v2840
  %4221 = vmatprep.subr.bf16.mxu0 %v2833
  %4222 = vmatpush2.bf16.msra.mxu0 %v2832
  %4223 = vmatprep.mubr.bf16.mxu0 %v31
  %4224 = vmatmul.mubr.bf16.gmra.mxu0 %v30
  %v4225 = vpop.f32.mrf.mxu0
  %v4226 = vadd.f32 %v4185, %v4225
  %v4227 = vpop.f32.mrf.mxu0
  %v4228 = vadd.f32 %v4187, %v4227
  %v4229 = vpop.f32.mrf.mxu0
  %v4230 = vpop.f32.mrf.mxu0
  %4231 = vdwg.mxu0
  %4232 = vmatprep.subr.bf16.mxu0 %v2953
  %4233 = vmatpush1.bf16.msra.mxu0 %v2952
  %4234 = vmatprep.subr.bf16.mxu0 %v2945
  %4235 = vmatpush1.bf16.msra.mxu0 %v2944
  %4236 = vmatprep.subr.bf16.mxu0 %v2937
  %4237 = vmatpush1.bf16.msra.mxu0 %v2936
  %4238 = vmatprep.subr.bf16.mxu0 %v2929
  %4239 = vmatpush1.bf16.msra.mxu0 %v2928
  %4240 = vmatprep.subr.bf16.mxu0 %v2921
  %4241 = vmatpush1.bf16.msra.mxu0 %v2920
  %4242 = vmatprep.subr.bf16.mxu0 %v2913
  %4243 = vmatpush1.bf16.msra.mxu0 %v2912
  %4244 = vmatprep.subr.bf16.mxu0 %v2905
  %4245 = vmatpush1.bf16.msra.mxu0 %v2904
  %4246 = vmatprep.subr.bf16.mxu0 %v2897
  %4247 = vmatpush1.bf16.msra.mxu0 %v2896
  %4248 = vmatprep.subr.bf16.mxu0 %v3017
  %4249 = vmatpush2.bf16.msra.mxu0 %v3016
  %4250 = vmatprep.subr.bf16.mxu0 %v3009
  %4251 = vmatpush2.bf16.msra.mxu0 %v3008
  %4252 = vmatprep.subr.bf16.mxu0 %v3001
  %4253 = vmatpush2.bf16.msra.mxu0 %v3000
  %4254 = vmatprep.subr.bf16.mxu0 %v2993
  %4255 = vmatpush2.bf16.msra.mxu0 %v2992
  %4256 = vmatprep.subr.bf16.mxu0 %v2985
  %4257 = vmatpush2.bf16.msra.mxu0 %v2984
  %4258 = vmatprep.subr.bf16.mxu0 %v2977
  %4259 = vmatpush2.bf16.msra.mxu0 %v2976
  %4260 = vmatprep.subr.bf16.mxu0 %v2969
  %4261 = vmatpush2.bf16.msra.mxu0 %v2968
  %4262 = vmatprep.subr.bf16.mxu0 %v2961
  %4263 = vmatpush2.bf16.msra.mxu0 %v2960
  %4264 = vmatprep.mubr.bf16.mxu0 %v33
  %4265 = vmatmul.mubr.bf16.gmra.mxu0 %v32
  %v4266 = vpop.f32.mrf.mxu0
  %v4267 = vadd.f32 %v4226, %v4266
  %v4268 = vpop.f32.mrf.mxu0
  %v4269 = vadd.f32 %v4228, %v4268
  %v4270 = vpop.f32.mrf.mxu0
  %v4271 = vpop.f32.mrf.mxu0
  %4272 = vdwg.mxu0
  %4273 = vmatprep.subr.bf16.mxu0 %v3081
  %4274 = vmatpush1.bf16.msra.mxu0 %v3080
  %4275 = vmatprep.subr.bf16.mxu0 %v3073
  %4276 = vmatpush1.bf16.msra.mxu0 %v3072
  %4277 = vmatprep.subr.bf16.mxu0 %v3065
  %4278 = vmatpush1.bf16.msra.mxu0 %v3064
  %4279 = vmatprep.subr.bf16.mxu0 %v3057
  %4280 = vmatpush1.bf16.msra.mxu0 %v3056
  %4281 = vmatprep.subr.bf16.mxu0 %v3049
  %4282 = vmatpush1.bf16.msra.mxu0 %v3048
  %4283 = vmatprep.subr.bf16.mxu0 %v3041
  %4284 = vmatpush1.bf16.msra.mxu0 %v3040
  %4285 = vmatprep.subr.bf16.mxu0 %v3033
  %4286 = vmatpush1.bf16.msra.mxu0 %v3032
  %4287 = vmatprep.subr.bf16.mxu0 %v3025
  %4288 = vmatpush1.bf16.msra.mxu0 %v3024
  %4289 = vmatprep.subr.bf16.mxu0 %v3145
  %4290 = vmatpush2.bf16.msra.mxu0 %v3144
  %4291 = vmatprep.subr.bf16.mxu0 %v3137
  %4292 = vmatpush2.bf16.msra.mxu0 %v3136
  %4293 = vmatprep.subr.bf16.mxu0 %v3129
  %4294 = vmatpush2.bf16.msra.mxu0 %v3128
  %4295 = vmatprep.subr.bf16.mxu0 %v3121
  %4296 = vmatpush2.bf16.msra.mxu0 %v3120
  %4297 = vmatprep.subr.bf16.mxu0 %v3113
  %4298 = vmatpush2.bf16.msra.mxu0 %v3112
  %4299 = vmatprep.subr.bf16.mxu0 %v3105
  %4300 = vmatpush2.bf16.msra.mxu0 %v3104
  %4301 = vmatprep.subr.bf16.mxu0 %v3097
  %4302 = vmatpush2.bf16.msra.mxu0 %v3096
  %4303 = vmatprep.subr.bf16.mxu0 %v3089
  %4304 = vmatpush2.bf16.msra.mxu0 %v3088
  %4305 = vmatprep.mubr.bf16.mxu0 %v35
  %4306 = vmatmul.mubr.bf16.gmra.mxu0 %v34
  %v4307 = vpop.f32.mrf.mxu0
  %v4308 = vadd.f32 %v4267, %v4307
  %v4309 = vpop.f32.mrf.mxu0
  %v4310 = vadd.f32 %v4269, %v4309
  %v4311 = vpop.f32.mrf.mxu0
  %v4312 = vpop.f32.mrf.mxu0
  %4313 = vdwg.mxu0
  %v4314 = vadd.f32 %v20, %v3816
  %v4315 = vadd.f32 %v21, %v3818
  %v4316 = vadd.f32 %v22, %v3980
  %v4317 = vadd.f32 %v23, %v3982
  %v4318 = vadd.f32 %v24, %v4144
  %v4319 = vadd.f32 %v25, %v4146
  %v4320 = vadd.f32 %v26, %v4308
  %v4321 = vadd.f32 %v27, %v4310
  %4322 = vst [vmem:[%s3] sm:$0xff] %v4314
  %4323 = vst [vmem:[%s3 + $0x8] sm:$0xff] %v4315
  %4324 = vst [vmem:[%s3 + $0x10] sm:$0xff] %v4316
  %4325 = vst [vmem:[%s3 + $0x18] sm:$0xff] %v4317
  %4326 = vst [vmem:[%s3 + $0x20] sm:$0xff] %v4318
  %4327 = vst [vmem:[%s3 + $0x28] sm:$0xff] %v4319
  %4328 = vst [vmem:[%s3 + $0x30] sm:$0xff] %v4320
  %4329 = vst [vmem:[%s3 + $0x38] sm:$0xff] %v4321
  %4330 = vst [vmem:[#allocation2] sm:$0xff] %v4321
  // Predicated region
  $region18: #{linear_rnn_pallas.1} parent=0 // pred_check
    _
  $region19: #{linear_rnn_pallas.1} parent=0 // pred_check_branch
    %4332 = sbr.rel (0) target = $region21
  $region20: #{linear_rnn_pallas.1} parent=0 // pred_region
    _
  $region21: #{linear_rnn_pallas.1} parent=0 // pred_fallthru
    _
  // Predicated region
  $region22: #{linear_rnn_pallas.1} parent=0 // pred_check
    _
  $region23: #{linear_rnn_pallas.1} parent=0 // pred_check_branch
    %4334 = sbr.rel (0) target = $region25
  $region24: #{linear_rnn_pallas.1} parent=0 // pred_region
    _
  $region25: #{linear_rnn_pallas.1} parent=0 // pred_fallthru
    _

</llo_original>
